<compile_context>
chip_gen: v7x
topology: tpu7x:2x2x1
jax: 0.10.0
libtpu: 0.0.40
codegen_flags: <defaults>
</compile_context>

<pallas_src>
from functools import partial

import jax
import jax.numpy as jnp
from jax.experimental import pallas as pl
from jax.experimental.pallas import tpu as pltpu


# ----------------------------------------------------------------------------
# Static helpers
# ----------------------------------------------------------------------------

def _round_up(x, m):
    return ((x + m - 1) // m) * m


def _pick_tile(dim, target, align):
    """Largest multiple of `align` <= target that divides `dim`
    (dim is assumed to already be a multiple of `align`)."""
    if dim <= target:
        return dim
    t = (target // align) * align
    while t >= align:
        if dim % t == 0:
            return t
        t -= align
    return align


def _pick_batch_block(B, L, target_rows=256):
    """Batch elements per grid step: make the matmul M dimension (Bb*L) large
    (>=256 rows fills a 256-wide MXU) while keeping >= 2 grid steps so both
    v7x TensorCores get work on the 'parallel' batch axis."""
    divs = [d for d in range(1, B + 1) if B % d == 0]
    cand = [d for d in divs if B // d >= 2] or divs
    for d in cand:
        if d * L >= target_rows:
            return d
    return cand[-1]


def _sz(a):
    return a.size * a.dtype.itemsize


def _vmem_limit(est_bytes):
    # Explicit scoped-VMEM budget; capped at 64 MiB (= v7x physical per core),
    # floor 16 MiB.  v5e/v6e (128 MiB physical) have slack either way.
    return int(min(max(est_bytes + (4 << 20), 16 << 20), 64 << 20))


def _const_spec(a):
    """Full-array block whose index never changes across the grid: DMA'd once
    and kept resident in VMEM."""
    zeros = (0,) * a.ndim
    return pl.BlockSpec(a.shape, lambda i, _z=zeros: _z)


# ----------------------------------------------------------------------------
# In-kernel math (fp32 element-wise math; bf16 MXU inputs, fp32 accumulate)
# ----------------------------------------------------------------------------

def _ln(x, g, b, eps=1e-5):
    mu = jnp.mean(x, axis=-1, keepdims=True)
    var = jnp.mean(jnp.square(x - mu), axis=-1, keepdims=True)
    return (x - mu) * jax.lax.rsqrt(var + eps) * g + b


def _quickgelu(x):
    return x * jax.nn.sigmoid(1.702 * x)       # sigmoid -> EUP slot


def _mm(x, w, b=None):
    # w is pre-transposed (K, N) bf16; cast x to the weight dtype for the MXU.
    y = jnp.dot(x.astype(w.dtype), w, preferred_element_type=jnp.float32)
    return y if b is None else y + b


def _sdpa_heads(q, k, v, num_heads):
    """q:(Lq,D), k/v:(Lk,D) fp32.  1/sqrt(Dh) is already folded into the Q
    projection weights, so no per-head scale multiply here."""
    D = q.shape[-1]
    Dh = D // num_heads
    outs = []
    for h in range(num_heads):                  # static unroll, 2-D MXU dots
        qh = q[:, h * Dh:(h + 1) * Dh]
        kh = k[:, h * Dh:(h + 1) * Dh]
        vh = v[:, h * Dh:(h + 1) * Dh]
        s = jax.lax.dot_general(qh, kh, (((1,), (1,)), ((), ())),
                                preferred_element_type=jnp.float32)   # (Lq, Lk)
        s = s - jnp.max(s, axis=-1, keepdims=True)
        p = jnp.exp(s)
        p = p * pl.reciprocal(jnp.sum(p, axis=-1, keepdims=True), approx=True)
        outs.append(jnp.dot(p, vh, preferred_element_type=jnp.float32))
    return outs[0] if num_heads == 1 else jnp.concatenate(outs, axis=-1)


def _mha_rows(q3, k3, v3, num_heads):
    """Per-batch-element SDPA over (Bb, L, D) tensors; returns row-flattened
    (Bb*Lq, D) output (batch-major), matching x.reshape(Bb*L, D) row order."""
    Bb = q3.shape[0]
    outs = [_sdpa_heads(q3[b], k3[b], v3[b], num_heads) for b in range(Bb)]
    return outs[0] if Bb == 1 else jnp.concatenate(outs, axis=0)


# ----------------------------------------------------------------------------
# Fused kernels
# ----------------------------------------------------------------------------

def _stacked_resblock_kernel(x_ref, ln1g, ln1b, wqkv, bqkv, wout, bout,
                             ln2g, ln2b, wfc, bfc, wproj, bproj,
                             o_ref, acc_ref, *, num_heads):
    """All CLIP ResidualAttentionBlocks in one pallas_call.

    grid = (batch blocks [parallel], layers [arbitrary]).  The fp32 activation
    stays resident in `acc_ref` across the layer axis; only layer l's weights
    are DMA'd each step (double-buffered -> layer l+1 prefetches during l)."""
    layer = pl.program_id(1)

    @pl.when(layer == 0)
    def _():
        acc_ref[...] = x_ref[...].astype(jnp.float32)

    Bb, L, D = acc_ref.shape
    x2 = acc_ref[...].reshape(Bb * L, D)            # big-M rows for the MXU

    # --- attention: x + out_proj(MHA(LN1(x))); q-scale folded into wqkv -----
    y = _ln(x2, ln1g[0], ln1b[0])
    qkv = _mm(y, wqkv[0], bqkv[0]).reshape(Bb, L, 3 * D)   # one (D,3D) matmul
    attn = _mha_rows(qkv[..., :D], qkv[..., D:2 * D], qkv[..., 2 * D:],
                     num_heads)                            # (Bb*L, D)
    x2 = x2 + _mm(attn, wout[0], bout[0])

    # --- MLP: x + c_proj(QuickGELU(c_fc(LN2(x)))) ----------------------------
    y = _ln(x2, ln2g[0], ln2b[0])
    h = _quickgelu(_mm(y, wfc[0], bfc[0]))
    x2 = x2 + _mm(h, wproj[0], bproj[0])

    acc_ref[...] = x2.reshape(Bb, L, D)

    @pl.when(layer == pl.num_programs(1) - 1)
    def _():
        o_ref[...] = x2.reshape(Bb, L, D).astype(o_ref.dtype)


def _cross_attn_kernel(q_ref, kv_ref, lnt_g, lnt_b, lni_g, lni_b,
                       wq, bq, wkv, bkv, wout, bout, o_ref, *, num_heads):
    """cross_attn(ln_pre_t(q), ln_pre_i(k), ln_pre_i(v)) + out-proj, fused.
    k == v == image_feats so the image-side LayerNorm / KV matmul run once."""
    Bb, Lq, D = q_ref.shape
    Lk = kv_ref.shape[1]
    q2 = q_ref[...].astype(jnp.float32).reshape(Bb * Lq, D)
    kv2 = kv_ref[...].astype(jnp.float32).reshape(Bb * Lk, D)
    qn = _ln(q2, lnt_g[...], lnt_b[...])
    kn = _ln(kv2, lni_g[...], lni_b[...])
    qp = _mm(qn, wq[...], bq[...]).reshape(Bb, Lq, D)        # scale folded in
    kvp = _mm(kn, wkv[...], bkv[...]).reshape(Bb, Lk, 2 * D)  # one (D,2D) matmul
    attn = _mha_rows(qp, kvp[..., :D], kvp[..., D:], num_heads)
    out = _mm(attn, wout[...], bout[...])
    o_ref[...] = out.reshape(Bb, Lq, D).astype(o_ref.dtype)


def _mlm_stem_kernel(x_ref, lnp_g, lnp_b, wd, bd, ln_g, ln_b, o_ref):
    """ln_post -> mlm dense -> QuickGELU -> mlm LayerNorm, fused."""
    Bb, L, D = x_ref.shape
    x = x_ref[...].astype(jnp.float32).reshape(Bb * L, D)
    x = _ln(x, lnp_g[...], lnp_b[...])
    h = _quickgelu(_mm(x, wd[...], bd[...]))
    h = _ln(h, ln_g[...], ln_b[...])
    o_ref[...] = h.reshape(Bb, L, D).astype(o_ref.dtype)


def _linear_kernel(x_ref, w_ref, b_ref, o_ref):
    o_ref[...] = _mm(x_ref[...], w_ref[...], b_ref[...]).astype(o_ref.dtype)


# ----------------------------------------------------------------------------
# pallas_call wrappers
# ----------------------------------------------------------------------------

def pallas_linear(x, w_kn, b, *, n_out=None, tile_n_target=512,
                  one_pass_m_budget=12 << 20):
    """y = x @ W + b.  W is pre-transposed (K, N) bf16, b is (1, N) fp32.

    N is padded to a multiple of 128 (lane-dense, unmasked stores); when the
    whole (M, K) activation fits a modest VMEM budget the M grid collapses to
    one step so the (potentially ~50 MiB) vocab weight streams from HBM once."""
    lead = x.shape[:-1]
    K = x.shape[-1]
    Nw = w_kn.shape[1]
    N = Nw if n_out is None else n_out

    if Nw % 128:                                   # fallback if not padded at init
        pad = _round_up(Nw, 128) - Nw
        w_kn = jnp.pad(w_kn, ((0, 0), (0, pad)))
        b = jnp.pad(b, ((0, 0), (0, pad)))
        Nw += pad
    tn = _pick_tile(Nw, tile_n_target, 128)

    x2 = x.reshape(-1, K)
    M = x2.shape[0]
    m8 = _round_up(M, 8)
    tm = m8 if m8 * K * x2.dtype.itemsize <= one_pass_m_budget else 512
    Mp = _round_up(M, tm)
    if Mp != M:
        x2 = jnp.pad(x2, ((0, Mp - M), (0, 0)))

    est = 2 * (tm * K * x2.dtype.itemsize + K * tn * w_kn.dtype.itemsize
               + tn * 4 + tm * tn * 4)
    out = pl.pallas_call(
        _linear_kernel,
        grid=(Mp // tm, Nw // tn),
        in_specs=[
            pl.BlockSpec((tm, K), lambda i, j: (i, 0)),
            pl.BlockSpec((K, tn), lambda i, j: (0, j)),
            pl.BlockSpec((1, tn), lambda i, j: (0, j)),
        ],
        out_specs=pl.BlockSpec((tm, tn), lambda i, j: (i, j)),
        out_shape=jax.ShapeDtypeStruct((Mp, Nw), jnp.float32),
        compiler_params=pltpu.CompilerParams(
            dimension_semantics=("parallel", "parallel"),
            vmem_limit_bytes=_vmem_limit(est)),
    )(x2, w_kn, b)
    return out[:M, :N].reshape(*lead, N)


def run_cross_attn(q, kv, params, num_heads, Bb):
    B, Lq, D = q.shape
    Lk = kv.shape[1]
    ca = params["cross_attn"]
    args = (q, kv,
            params["ln_pre_t"][0], params["ln_pre_t"][1],
            params["ln_pre_i"][0], params["ln_pre_i"][1],
            ca["wq"], ca["bq"], ca["wkv"], ca["bkv"], ca["wout"], ca["bout"])
    # NOTE: on v7x the grid-constant weights could be single-buffered via
    # pipeline_mode=pl.Buffered(1) to halve resident VMEM; default kept here.
    in_specs = [pl.BlockSpec((Bb, Lq, D), lambda i: (i, 0, 0)),
                pl.BlockSpec((Bb, Lk, D), lambda i: (i, 0, 0))]
    in_specs += [_const_spec(a) for a in args[2:]]
    est = (2 * sum(_sz(a) for a in args[2:])
           + 2 * Bb * (Lq + Lk) * D * 4 + 2 * Bb * Lq * D * 2
           + 12 * Bb * max(Lq, Lk) * D * 4)
    return pl.pallas_call(
        partial(_cross_attn_kernel, num_heads=num_heads),
        grid=(B // Bb,),
        in_specs=in_specs,
        out_specs=pl.BlockSpec((Bb, Lq, D), lambda i: (i, 0, 0)),
        out_shape=jax.ShapeDtypeStruct((B, Lq, D), jnp.bfloat16),
        compiler_params=pltpu.CompilerParams(
            dimension_semantics=("parallel",),
            vmem_limit_bytes=_vmem_limit(est)),
    )(*args)


def run_resblocks(x, blocks, num_heads, Bb):
    """All cmt_depth blocks in one pallas_call; weights stacked on a layer axis."""
    B, L, D = x.shape
    names = ("ln1_g", "ln1_b", "wqkv", "bqkv", "wout", "bout",
             "ln2_g", "ln2_b", "wfc", "bfc", "wproj", "bproj")
    n_layers = blocks["wqkv"].shape[0]
    args = (x,) + tuple(blocks[n] for n in names)
    in_specs = [pl.BlockSpec((Bb, L, D), lambda i, l: (i, 0, 0))]
    in_specs += [pl.BlockSpec((1,) + blocks[n].shape[1:], lambda i, l: (l, 0, 0))
                 for n in names]
    w_bytes = sum(_sz(blocks[n]) for n in names) // n_layers
    act = Bb * L * D
    est = 2 * w_bytes + 4 * act * 2 + act * 4 + 16 * act * 4
    return pl.pallas_call(
        partial(_stacked_resblock_kernel, num_heads=num_heads),
        grid=(B // Bb, n_layers),
        in_specs=in_specs,
        out_specs=pl.BlockSpec((Bb, L, D), lambda i, l: (i, 0, 0)),
        out_shape=jax.ShapeDtypeStruct((B, L, D), jnp.bfloat16),
        scratch_shapes=[pltpu.VMEM((Bb, L, D), jnp.float32)],
        compiler_params=pltpu.CompilerParams(
            dimension_semantics=("parallel", "arbitrary"),
            vmem_limit_bytes=_vmem_limit(est)),
    )(*args)


def run_mlm_stem(x, params, Bb):
    B, L, D = x.shape
    mh = params["mlm_head"]
    args = (x, params["ln_post"][0], params["ln_post"][1],
            mh["wd"], mh["bd"], mh["ln_g"], mh["ln_b"])
    in_specs = [pl.BlockSpec((Bb, L, D), lambda i: (i, 0, 0))]
    in_specs += [_const_spec(a) for a in args[1:]]
    act = Bb * L * D
    est = 2 * sum(_sz(a) for a in args[1:]) + 4 * act * 2 + 8 * act * 4
    return pl.pallas_call(
        _mlm_stem_kernel,
        grid=(B // Bb,),
        in_specs=in_specs,
        out_specs=pl.BlockSpec((Bb, L, D), lambda i: (i, 0, 0)),
        out_shape=jax.ShapeDtypeStruct((B, L, D), jnp.bfloat16),
        compiler_params=pltpu.CompilerParams(
            dimension_semantics=("parallel",),
            vmem_limit_bytes=_vmem_limit(est)),
    )(*args)


# ----------------------------------------------------------------------------
# Model pieces
# ----------------------------------------------------------------------------

def cross_former_and_mlm_head(params, q, image_feats, num_heads, vocab_size):
    """cross_former (cross-attn -> transformer blocks -> ln_post) + mlm_head.
    torch permutes (B,L,D)->(L,B,D) around the transformer; these fused blocks
    are batch-first so the two permutes cancel semantically."""
    B, Lq, _ = q.shape
    Bb = _pick_batch_block(B, Lq)
    x = run_cross_attn(q, image_feats, params, num_heads, Bb)       # bf16
    x = run_resblocks(x, params["blocks"], num_heads, Bb)           # bf16
    h = run_mlm_stem(x, params, Bb)          # ln_post + dense + QuickGELU + LN
    mh = params["mlm_head"]
    return pallas_linear(h, mh["wfc"], mh["bfc"], n_out=vocab_size)


def mma_forward(params, image_feats, text_feats, caption_ids, mlm_feats,
                *, num_heads, vocab_size, num_classes, logit_scale):
    """Reproduces MMA.forward for current_task = ['id', 'mlm'].

    image_feats / text_feats / mlm_feats stand in for base_model outputs
    (the CLIP backbone is an external module)."""
    ret = {}
    ret["temperature"] = 1.0 / logit_scale

    # (reference code overwrites i_feats with the full sequence)
    i_feats = image_feats.astype(jnp.float32)
    B = text_feats.shape[0]
    t_idx = jnp.argmax(caption_ids, axis=-1)
    t_feats = text_feats[jnp.arange(B), t_idx].astype(jnp.float32)

    # TODO(synk): VisualEmbeddingLayer / TexualEmbeddingLayer are external modules.
    # TODO(synk): objectives.compute_id / ndf / sdm / InfoNCE losses are external.

    # ---- 'id' branch: classifier logits (reference casts to .half(); here
    #      bf16 MXU inputs, fp32 accumulate) ----------------------------------
    cls = params["classifier"]
    ret["image_logits"] = pallas_linear(i_feats, cls["w"], cls["b"], n_out=num_classes)
    ret["text_logits"] = pallas_linear(t_feats, cls["w"], cls["b"], n_out=num_classes)

    # ---- 'mlm' branch: cross_former + mlm_head ------------------------------
    # TODO(synk): no padding/attention mask is applied (reference passes none).
    scores = cross_former_and_mlm_head(params, mlm_feats, image_feats,
                                       num_heads, vocab_size)
    ret["mlm_scores"] = scores.reshape(-1, vocab_size)

    # TODO(synk): 'mae' branch needs the CLIP-MAE base_model (mask, ids_restore).
    return ret


# ----------------------------------------------------------------------------
# Deterministic parameter init (shapes follow MMA.__init__).
# Weights pre-transposed to (K, N) bf16; biases (1, N) fp32; LN params (1, D)
# fp32; per-layer block weights stacked on a leading layer axis; the attention
# scale 1/sqrt(Dh) is folded into the Q projections; classifier / vocab
# weights padded to a 128 lane multiple.
# ----------------------------------------------------------------------------

def init_params(key, embed_dim, num_heads, cmt_depth, vocab_size, num_classes):
    D = embed_dim
    Dh = D // num_heads
    assert Dh * num_heads == D
    scale = D ** -0.5
    proj_std = scale * (2 * cmt_depth) ** -0.5
    attn_std = scale
    fc_std = (2 * D) ** -0.5
    q_scale = Dh ** -0.5

    kit = iter(jax.random.split(key, 4 * cmt_depth + 8))

    def dense_w(out_f, in_f, std):
        w = jax.random.normal(next(kit), (out_f, in_f), jnp.float32) * std
        return jnp.transpose(w)                        # (in_f, out_f) fp32

    def bias(n):
        return jnp.zeros((1, n), jnp.float32)

    def ln():
        return jnp.ones((1, D), jnp.float32), jnp.zeros((1, D), jnp.float32)

    def fold_q(w_kn, n_q):                             # fold scale into Q cols
        return jnp.concatenate([w_kn[:, :n_q] * q_scale, w_kn[:, n_q:]], axis=1)

    # cross attention (packed in_proj split into Q and KV halves)
    w_in = jax.random.normal(next(kit), (3 * D, D), jnp.float32) * attn_std
    cross_attn = {
        "wq": (jnp.transpose(w_in[:D]) * q_scale).astype(jnp.bfloat16),
        "bq": bias(D),
        "wkv": jnp.transpose(w_in[D:]).astype(jnp.bfloat16),
        "bkv": bias(2 * D),
        "wout": dense_w(D, D, proj_std).astype(jnp.bfloat16),
        "bout": bias(D),
    }

    def one_block():
        g1, b1 = ln()
        g2, b2 = ln()
        return {
            "ln1_g": g1, "ln1_b": b1, "ln2_g": g2, "ln2_b": b2,
            "wqkv": fold_q(dense_w(3 * D, D, attn_std), D).astype(jnp.bfloat16),
            "bqkv": bias(3 * D),
            "wout": dense_w(D, D, proj_std).astype(jnp.bfloat16), "bout": bias(D),
            "wfc": dense_w(4 * D, D, fc_std).astype(jnp.bfloat16), "bfc": bias(4 * D),
            "wproj": dense_w(D, 4 * D, proj_std).astype(jnp.bfloat16), "bproj": bias(D),
        }

    layer_dicts = [one_block() for _ in range(cmt_depth)]
    blocks = {k: jnp.stack([ld[k] for ld in layer_dicts]) for k in layer_dicts[0]}

    vpad = _round_up(vocab_size, 128)
    wvoc = jnp.pad(dense_w(vocab_size, D, proj_std), ((0, 0), (0, vpad - vocab_size)))
    mlm_ln_g, mlm_ln_b = ln()
    mlm_head = {
        "wd": dense_w(D, D, fc_std).astype(jnp.bfloat16), "bd": bias(D),
        "ln_g": mlm_ln_g, "ln_b": mlm_ln_b,
        "wfc": wvoc.astype(jnp.bfloat16), "bfc": bias(vpad),
    }

    cpad = _round_up(num_classes, 128)
    wcls = jnp.pad(dense_w(num_classes, D, 0.001), ((0, 0), (0, cpad - num_classes)))
    classifier = {"w": wcls.astype(jnp.bfloat16), "b": bias(cpad)}

    return {
        "ln_pre_t": ln(), "ln_pre_i": ln(), "ln_post": ln(),
        "cross_attn": cross_attn, "blocks": blocks,
        "mlm_head": mlm_head, "classifier": classifier,
    }


# ----------------------------------------------------------------------------
# Demo
# ----------------------------------------------------------------------------

if __name__ == "__main__":
    # small config implied by MMA.__init__ : heads = embed_dim // 64,
    # cmt_depth transformer layers, classifier over num_classes, mlm over vocab.
    B = 2
    EMBED_DIM = 128
    NUM_HEADS = EMBED_DIM // 64          # 2
    CMT_DEPTH = 2
    VOCAB_SIZE = 512
    NUM_CLASSES = 32
    L_IMG = 17                            # num_patches (4x4) + cls token
    L_TXT = 8
    TEMPERATURE = 0.02
    LOGIT_SCALE = 1.0 / TEMPERATURE

    key = jax.random.PRNGKey(0)
    k_p, k_i, k_t, k_m, k_c = jax.random.split(key, 5)

    params = init_params(k_p, EMBED_DIM, NUM_HEADS, CMT_DEPTH, VOCAB_SIZE, NUM_CLASSES)

    image_feats = jax.random.normal(k_i, (B, L_IMG, EMBED_DIM), jnp.float32)
    text_feats = jax.random.normal(k_t, (B, L_TXT, EMBED_DIM), jnp.float32)
    mlm_feats = jax.random.normal(k_m, (B, L_TXT, EMBED_DIM), jnp.float32)
    caption_ids = jax.random.randint(k_c, (B, L_TXT), 0, VOCAB_SIZE, jnp.int32)

    fwd = jax.jit(partial(mma_forward, num_heads=NUM_HEADS,
                          vocab_size=VOCAB_SIZE, num_classes=NUM_CLASSES,
                          logit_scale=LOGIT_SCALE))
    ret = fwd(params, image_feats, text_feats, caption_ids, mlm_feats)
    jax.block_until_ready(ret)

    assert ret["image_logits"].shape == (B, L_IMG, NUM_CLASSES)
    assert ret["text_logits"].shape == (B, NUM_CLASSES)
    assert ret["mlm_scores"].shape == (B * L_TXT, VOCAB_SIZE)
    assert bool(jnp.all(jnp.isfinite(ret["mlm_scores"])))
    assert bool(jnp.all(jnp.isfinite(ret["image_logits"])))
    print("KERNEL_OK")
</pallas_src>

<mosaic_0001>
module attributes {stable_mosaic.version = 11 : i64} {
  func.func @_linear_kernel(%arg0: i32, %arg1: i32, %arg2: memref<8x128xf32, #tpu.memory_space<vmem>>, %arg3: memref<128x128xbf16, #tpu.memory_space<vmem>>, %arg4: memref<1x128xf32, #tpu.memory_space<vmem>>, %arg5: memref<8x128xf32, #tpu.memory_space<vmem>>) attributes {dimension_semantics = [#tpu.dimension_semantics<parallel>, #tpu.dimension_semantics<parallel>], iteration_bounds = array<i64: 1, 1>, scalar_prefetch = 0 : i64, scratch_operands = 0 : i64, tpu.core_type = #tpu.core_type<tc>, window_params = [{transform_indices = @transform_0, window_bounds = array<i64: 8, 128>}, {transform_indices = @transform_1, window_bounds = array<i64: 128, 128>}, {transform_indices = @transform_2, window_bounds = array<i64: 1, 128>}, {transform_indices = @transform_3, window_bounds = array<i64: 8, 128>}]} {
    %c0 = arith.constant 0 : index
    %c0_0 = arith.constant 0 : index
    %0 = vector.load %arg2[%c0, %c0_0] : memref<8x128xf32, #tpu.memory_space<vmem>>, vector<8x128xf32>
    %c0_1 = arith.constant 0 : index
    %c0_2 = arith.constant 0 : index
    %1 = vector.load %arg3[%c0_1, %c0_2] : memref<128x128xbf16, #tpu.memory_space<vmem>>, vector<128x128xbf16>
    %c0_3 = arith.constant 0 : index
    %c0_4 = arith.constant 0 : index
    %2 = vector.load %arg4[%c0_3, %c0_4] : memref<1x128xf32, #tpu.memory_space<vmem>>, vector<1x128xf32>
    %3 = arith.truncf %0 : vector<8x128xf32> to vector<8x128xbf16>
    %cst = arith.constant dense<0.000000e+00> : vector<8x128xf32>
    %4 = tpu.matmul %3, %1, %cst {dimension_numbers = #tpu.dot_dimension_numbers<[1], [0], [0], [1], [0, 0, 1, 1], [], []>} : vector<8x128xbf16>, vector<128x128xbf16>, vector<8x128xf32> -> vector<8x128xf32>
    %5 = vector.broadcast %2 : vector<1x128xf32> to vector<8x128xf32>
    %6 = arith.addf %4, %5 : vector<8x128xf32>
    %c0_5 = arith.constant 0 : index
    %c0_6 = arith.constant 0 : index
    %7 = vector.load %arg5[%c0_5, %c0_6] : memref<8x128xf32, #tpu.memory_space<vmem>>, vector<8x128xf32>
    tpu.vector_store %arg5[%c0_5, %c0_6], %6 {strides = array<i32>} : memref<8x128xf32, #tpu.memory_space<vmem>>, vector<8x128xf32>,
    return
  }
  func.func @transform_0(%arg0: i32, %arg1: i32) -> (i32, i32) {
    %c0_i32 = arith.constant 0 : i32
    %c0_i32_0 = arith.constant 0 : i32
    return %arg0, %c0_i32 : i32, i32
  }
  func.func @transform_1(%arg0: i32, %arg1: i32) -> (i32, i32) {
    %c0_i32 = arith.constant 0 : i32
    %c0_i32_0 = arith.constant 0 : i32
    return %c0_i32, %arg1 : i32, i32
  }
  func.func @transform_2(%arg0: i32, %arg1: i32) -> (i32, i32) {
    %c0_i32 = arith.constant 0 : i32
    %c0_i32_0 = arith.constant 0 : i32
    return %c0_i32, %arg1 : i32, i32
  }
  func.func @transform_3(%arg0: i32, %arg1: i32) -> (i32, i32) {
    %c0_i32 = arith.constant 0 : i32
    return %arg0, %arg1 : i32, i32
  }
}

module attributes {stable_mosaic.version = 11 : i64} {
  func.func @_cross_attn_kernel(%arg0: i32, %arg1: memref<1x8x128xf32, #tpu.memory_space<vmem>>, %arg2: memref<1x17x128xf32, #tpu.memory_space<vmem>>, %arg3: memref<1x128xf32, #tpu.memory_space<vmem>>, %arg4: memref<1x128xf32, #tpu.memory_space<vmem>>, %arg5: memref<1x128xf32, #tpu.memory_space<vmem>>, %arg6: memref<1x128xf32, #tpu.memory_space<vmem>>, %arg7: memref<128x128xbf16, #tpu.memory_space<vmem>>, %arg8: memref<1x128xf32, #tpu.memory_space<vmem>>, %arg9: memref<128x256xbf16, #tpu.memory_space<vmem>>, %arg10: memref<1x256xf32, #tpu.memory_space<vmem>>, %arg11: memref<128x128xbf16, #tpu.memory_space<vmem>>, %arg12: memref<1x128xf32, #tpu.memory_space<vmem>>, %arg13: memref<1x8x128xbf16, #tpu.memory_space<vmem>>) attributes {dimension_semantics = [#tpu.dimension_semantics<parallel>], iteration_bounds = array<i64: 2>, scalar_prefetch = 0 : i64, scratch_operands = 0 : i64, tpu.core_type = #tpu.core_type<tc>, window_params = [{transform_indices = @transform_0, window_bounds = array<i64: 1, 8, 128>}, {transform_indices = @transform_1, window_bounds = array<i64: 1, 17, 128>}, {pipeline_mode = #tpu.pipeline_mode<synchronous>, transform_indices = @transform_2, window_bounds = array<i64: 1, 128>}, {pipeline_mode = #tpu.pipeline_mode<synchronous>, transform_indices = @transform_3, window_bounds = array<i64: 1, 128>}, {pipeline_mode = #tpu.pipeline_mode<synchronous>, transform_indices = @transform_4, window_bounds = array<i64: 1, 128>}, {pipeline_mode = #tpu.pipeline_mode<synchronous>, transform_indices = @transform_5, window_bounds = array<i64: 1, 128>}, {pipeline_mode = #tpu.pipeline_mode<synchronous>, transform_indices = @transform_6, window_bounds = array<i64: 128, 128>}, {pipeline_mode = #tpu.pipeline_mode<synchronous>, transform_indices = @transform_7, window_bounds = array<i64: 1, 128>}, {pipeline_mode = #tpu.pipeline_mode<synchronous>, transform_indices = @transform_8, window_bounds = array<i64: 128, 256>}, {pipeline_mode = #tpu.pipeline_mode<synchronous>, transform_indices = @transform_9, window_bounds = array<i64: 1, 256>}, {pipeline_mode = #tpu.pipeline_mode<synchronous>, transform_indices = @transform_10, window_bounds = array<i64: 128, 128>}, {pipeline_mode = #tpu.pipeline_mode<synchronous>, transform_indices = @transform_11, window_bounds = array<i64: 1, 128>}, {transform_indices = @transform_12, window_bounds = array<i64: 1, 8, 128>}]} {
    %c0 = arith.constant 0 : index
    %c0_0 = arith.constant 0 : index
    %c0_1 = arith.constant 0 : index
    %0 = vector.load %arg1[%c0, %c0_0, %c0_1] : memref<1x8x128xf32, #tpu.memory_space<vmem>>, vector<1x8x128xf32>
    %1 = vector.shape_cast %0 : vector<1x8x128xf32> to vector<8x128xf32>
    %c0_2 = arith.constant 0 : index
    %c0_3 = arith.constant 0 : index
    %c0_4 = arith.constant 0 : index
    %2 = vector.load %arg2[%c0_2, %c0_3, %c0_4] : memref<1x17x128xf32, #tpu.memory_space<vmem>>, vector<1x17x128xf32>
    %3 = vector.shape_cast %2 : vector<1x17x128xf32> to vector<17x128xf32>
    %c0_5 = arith.constant 0 : index
    %c0_6 = arith.constant 0 : index
    %4 = vector.load %arg3[%c0_5, %c0_6] : memref<1x128xf32, #tpu.memory_space<vmem>>, vector<1x128xf32>
    %c0_7 = arith.constant 0 : index
    %c0_8 = arith.constant 0 : index
    %5 = vector.load %arg4[%c0_7, %c0_8] : memref<1x128xf32, #tpu.memory_space<vmem>>, vector<1x128xf32>
    %cst = arith.constant dense<0.000000e+00> : vector<8xf32>
    %6 = vector.multi_reduction <add>, %1, %cst [1] : vector<8x128xf32> to vector<8xf32>
    %7 = vector.shape_cast %6 : vector<8xf32> to vector<8x1xf32>
    %cst_9 = arith.constant 1.280000e+02 : f32
    %8 = vector.broadcast %cst_9 : f32 to vector<8x1xf32>
    %9 = arith.divf %7, %8 : vector<8x1xf32>
    %10 = vector.broadcast %9 : vector<8x1xf32> to vector<8x128xf32>
    %11 = arith.subf %1, %10 : vector<8x128xf32>
    %12 = arith.mulf %11, %11 : vector<8x128xf32>
    %cst_10 = arith.constant dense<0.000000e+00> : vector<8xf32>
    %13 = vector.multi_reduction <add>, %12, %cst_10 [1] : vector<8x128xf32> to vector<8xf32>
    %14 = vector.shape_cast %13 : vector<8xf32> to vector<8x1xf32>
    %cst_11 = arith.constant 1.280000e+02 : f32
    %15 = vector.broadcast %cst_11 : f32 to vector<8x1xf32>
    %16 = arith.divf %14, %15 : vector<8x1xf32>
    %17 = vector.broadcast %9 : vector<8x1xf32> to vector<8x128xf32>
    %18 = arith.subf %1, %17 : vector<8x128xf32>
    %cst_12 = arith.constant 9.99999974E-6 : f32
    %19 = vector.broadcast %cst_12 : f32 to vector<8x1xf32>
    %20 = arith.addf %16, %19 : vector<8x1xf32>
    %21 = math.rsqrt %20 : vector<8x1xf32>
    %22 = vector.broadcast %21 : vector<8x1xf32> to vector<8x128xf32>
    %23 = arith.mulf %18, %22 : vector<8x128xf32>
    %24 = vector.broadcast %4 : vector<1x128xf32> to vector<8x128xf32>
    %25 = arith.mulf %23, %24 : vector<8x128xf32>
    %26 = vector.broadcast %5 : vector<1x128xf32> to vector<8x128xf32>
    %27 = arith.addf %25, %26 : vector<8x128xf32>
    %c0_13 = arith.constant 0 : index
    %c0_14 = arith.constant 0 : index
    %28 = vector.load %arg5[%c0_13, %c0_14] : memref<1x128xf32, #tpu.memory_space<vmem>>, vector<1x128xf32>
    %c0_15 = arith.constant 0 : index
    %c0_16 = arith.constant 0 : index
    %29 = vector.load %arg6[%c0_15, %c0_16] : memref<1x128xf32, #tpu.memory_space<vmem>>, vector<1x128xf32>
    %cst_17 = arith.constant dense<0.000000e+00> : vector<17xf32>
    %30 = vector.multi_reduction <add>, %3, %cst_17 [1] : vector<17x128xf32> to vector<17xf32>
    %31 = vector.shape_cast %30 : vector<17xf32> to vector<17x1xf32>
    %cst_18 = arith.constant 1.280000e+02 : f32
    %32 = vector.broadcast %cst_18 : f32 to vector<17x1xf32>
    %33 = arith.divf %31, %32 : vector<17x1xf32>
    %34 = vector.broadcast %33 : vector<17x1xf32> to vector<17x128xf32>
    %35 = arith.subf %3, %34 : vector<17x128xf32>
    %36 = arith.mulf %35, %35 : vector<17x128xf32>
    %cst_19 = arith.constant dense<0.000000e+00> : vector<17xf32>
    %37 = vector.multi_reduction <add>, %36, %cst_19 [1] : vector<17x128xf32> to vector<17xf32>
    %38 = vector.shape_cast %37 : vector<17xf32> to vector<17x1xf32>
    %cst_20 = arith.constant 1.280000e+02 : f32
    %39 = vector.broadcast %cst_20 : f32 to vector<17x1xf32>
    %40 = arith.divf %38, %39 : vector<17x1xf32>
    %41 = vector.broadcast %33 : vector<17x1xf32> to vector<17x128xf32>
    %42 = arith.subf %3, %41 : vector<17x128xf32>
    %cst_21 = arith.constant 9.99999974E-6 : f32
    %43 = vector.broadcast %cst_21 : f32 to vector<17x1xf32>
    %44 = arith.addf %40, %43 : vector<17x1xf32>
    %45 = math.rsqrt %44 : vector<17x1xf32>
    %46 = vector.broadcast %45 : vector<17x1xf32> to vector<17x128xf32>
    %47 = arith.mulf %42, %46 : vector<17x128xf32>
    %48 = vector.broadcast %28 : vector<1x128xf32> to vector<17x128xf32>
    %49 = arith.mulf %47, %48 : vector<17x128xf32>
    %50 = vector.broadcast %29 : vector<1x128xf32> to vector<17x128xf32>
    %51 = arith.addf %49, %50 : vector<17x128xf32>
    %c0_22 = arith.constant 0 : index
    %c0_23 = arith.constant 0 : index
    %52 = vector.load %arg7[%c0_22, %c0_23] : memref<128x128xbf16, #tpu.memory_space<vmem>>, vector<128x128xbf16>
    %c0_24 = arith.constant 0 : index
    %c0_25 = arith.constant 0 : index
    %53 = vector.load %arg8[%c0_24, %c0_25] : memref<1x128xf32, #tpu.memory_space<vmem>>, vector<1x128xf32>
    %54 = arith.truncf %27 : vector<8x128xf32> to vector<8x128xbf16>
    %cst_26 = arith.constant dense<0.000000e+00> : vector<8x128xf32>
    %55 = tpu.matmul %54, %52, %cst_26 {dimension_numbers = #tpu.dot_dimension_numbers<[1], [0], [0], [1], [0, 0, 1, 1], [], []>} : vector<8x128xbf16>, vector<128x128xbf16>, vector<8x128xf32> -> vector<8x128xf32>
    %56 = vector.broadcast %53 : vector<1x128xf32> to vector<8x128xf32>
    %57 = arith.addf %55, %56 : vector<8x128xf32>
    %58 = vector.shape_cast %57 : vector<8x128xf32> to vector<1x8x128xf32>
    %c0_27 = arith.constant 0 : index
    %c0_28 = arith.constant 0 : index
    %59 = vector.load %arg9[%c0_27, %c0_28] : memref<128x256xbf16, #tpu.memory_space<vmem>>, vector<128x256xbf16>
    %c0_29 = arith.constant 0 : index
    %c0_30 = arith.constant 0 : index
    %60 = vector.load %arg10[%c0_29, %c0_30] : memref<1x256xf32, #tpu.memory_space<vmem>>, vector<1x256xf32>
    %61 = arith.truncf %51 : vector<17x128xf32> to vector<17x128xbf16>
    %cst_31 = arith.constant dense<0.000000e+00> : vector<17x256xf32>
    %62 = tpu.matmul %61, %59, %cst_31 {dimension_numbers = #tpu.dot_dimension_numbers<[1], [0], [0], [1], [0, 0, 1, 1], [], []>} : vector<17x128xbf16>, vector<128x256xbf16>, vector<17x256xf32> -> vector<17x256xf32>
    %63 = vector.broadcast %60 : vector<1x256xf32> to vector<17x256xf32>
    %64 = arith.addf %62, %63 : vector<17x256xf32>
    %65 = vector.shape_cast %64 : vector<17x256xf32> to vector<1x17x256xf32>
    %66 = vector.extract_strided_slice %65 {offsets = [0, 0, 0], sizes = [1, 17, 128], strides = [1, 1, 1]} : vector<1x17x256xf32> to vector<1x17x128xf32>
    %67 = vector.extract_strided_slice %65 {offsets = [0, 0, 128], sizes = [1, 17, 128], strides = [1, 1, 1]} : vector<1x17x256xf32> to vector<1x17x128xf32>
    %68 = vector.shape_cast %58 : vector<1x8x128xf32> to vector<8x128xf32>
    %69 = vector.shape_cast %66 : vector<1x17x128xf32> to vector<17x128xf32>
    %70 = vector.shape_cast %67 : vector<1x17x128xf32> to vector<17x128xf32>
    %71 = vector.extract_strided_slice %68 {offsets = [0, 0], sizes = [8, 64], strides = [1, 1]} : vector<8x128xf32> to vector<8x64xf32>
    %72 = vector.extract_strided_slice %69 {offsets = [0, 0], sizes = [17, 64], strides = [1, 1]} : vector<17x128xf32> to vector<17x64xf32>
    %73 = vector.extract_strided_slice %70 {offsets = [0, 0], sizes = [17, 64], strides = [1, 1]} : vector<17x128xf32> to vector<17x64xf32>
    %cst_32 = arith.constant dense<0.000000e+00> : vector<8x17xf32>
    %74 = tpu.matmul %71, %72, %cst_32 {dimension_numbers = #tpu.dot_dimension_numbers<[1], [1], [0], [0], [0, 0, 1, 0], [], []>} : vector<8x64xf32>, vector<17x64xf32>, vector<8x17xf32> -> vector<8x17xf32>
    %cst_33 = arith.constant dense<0xFF800000> : vector<8xf32>
    %75 = vector.multi_reduction <maximumf>, %74, %cst_33 [1] : vector<8x17xf32> to vector<8xf32>
    %76 = vector.shape_cast %75 : vector<8xf32> to vector<8x1xf32>
    %77 = vector.broadcast %76 : vector<8x1xf32> to vector<8x17xf32>
    %78 = arith.subf %74, %77 : vector<8x17xf32>
    %79 = math.exp %78 : vector<8x17xf32>
    %cst_34 = arith.constant dense<0.000000e+00> : vector<8xf32>
    %80 = vector.multi_reduction <add>, %79, %cst_34 [1] : vector<8x17xf32> to vector<8xf32>
    %81 = vector.shape_cast %80 : vector<8xf32> to vector<8x1xf32>
    %82 = tpu.reciprocal %81 {approx = true} : vector<8x1xf32> -> vector<8x1xf32>
    %83 = vector.broadcast %82 : vector<8x1xf32> to vector<8x17xf32>
    %84 = arith.mulf %79, %83 : vector<8x17xf32>
    %cst_35 = arith.constant dense<0.000000e+00> : vector<8x64xf32>
    %85 = tpu.matmul %84, %73, %cst_35 {dimension_numbers = #tpu.dot_dimension_numbers<[1], [0], [0], [1], [0, 0, 1, 1], [], []>} : vector<8x17xf32>, vector<17x64xf32>, vector<8x64xf32> -> vector<8x64xf32>
    %86 = vector.extract_strided_slice %68 {offsets = [0, 64], sizes = [8, 64], strides = [1, 1]} : vector<8x128xf32> to vector<8x64xf32>
    %87 = vector.extract_strided_slice %69 {offsets = [0, 64], sizes = [17, 64], strides = [1, 1]} : vector<17x128xf32> to vector<17x64xf32>
    %88 = vector.extract_strided_slice %70 {offsets = [0, 64], sizes = [17, 64], strides = [1, 1]} : vector<17x128xf32> to vector<17x64xf32>
    %cst_36 = arith.constant dense<0.000000e+00> : vector<8x17xf32>
    %89 = tpu.matmul %86, %87, %cst_36 {dimension_numbers = #tpu.dot_dimension_numbers<[1], [1], [0], [0], [0, 0, 1, 0], [], []>} : vector<8x64xf32>, vector<17x64xf32>, vector<8x17xf32> -> vector<8x17xf32>
    %cst_37 = arith.constant dense<0xFF800000> : vector<8xf32>
    %90 = vector.multi_reduction <maximumf>, %89, %cst_37 [1] : vector<8x17xf32> to vector<8xf32>
    %91 = vector.shape_cast %90 : vector<8xf32> to vector<8x1xf32>
    %92 = vector.broadcast %91 : vector<8x1xf32> to vector<8x17xf32>
    %93 = arith.subf %89, %92 : vector<8x17xf32>
    %94 = math.exp %93 : vector<8x17xf32>
    %cst_38 = arith.constant dense<0.000000e+00> : vector<8xf32>
    %95 = vector.multi_reduction <add>, %94, %cst_38 [1] : vector<8x17xf32> to vector<8xf32>
    %96 = vector.shape_cast %95 : vector<8xf32> to vector<8x1xf32>
    %97 = tpu.reciprocal %96 {approx = true} : vector<8x1xf32> -> vector<8x1xf32>
    %98 = vector.broadcast %97 : vector<8x1xf32> to vector<8x17xf32>
    %99 = arith.mulf %94, %98 : vector<8x17xf32>
    %cst_39 = arith.constant dense<0.000000e+00> : vector<8x64xf32>
    %100 = tpu.matmul %99, %88, %cst_39 {dimension_numbers = #tpu.dot_dimension_numbers<[1], [0], [0], [1], [0, 0, 1, 1], [], []>} : vector<8x17xf32>, vector<17x64xf32>, vector<8x64xf32> -> vector<8x64xf32>
    %101 = tpu.concatenate %85, %100 in 1 : vector<8x64xf32>, vector<8x64xf32> -> vector<8x128xf32>
    %c0_40 = arith.constant 0 : index
    %c0_41 = arith.constant 0 : index
    %102 = vector.load %arg11[%c0_40, %c0_41] : memref<128x128xbf16, #tpu.memory_space<vmem>>, vector<128x128xbf16>
    %c0_42 = arith.constant 0 : index
    %c0_43 = arith.constant 0 : index
    %103 = vector.load %arg12[%c0_42, %c0_43] : memref<1x128xf32, #tpu.memory_space<vmem>>, vector<1x128xf32>
    %104 = arith.truncf %101 : vector<8x128xf32> to vector<8x128xbf16>
    %cst_44 = arith.constant dense<0.000000e+00> : vector<8x128xf32>
    %105 = tpu.matmul %104, %102, %cst_44 {dimension_numbers = #tpu.dot_dimension_numbers<[1], [0], [0], [1], [0, 0, 1, 1], [], []>} : vector<8x128xbf16>, vector<128x128xbf16>, vector<8x128xf32> -> vector<8x128xf32>
    %106 = vector.broadcast %103 : vector<1x128xf32> to vector<8x128xf32>
    %107 = arith.addf %105, %106 : vector<8x128xf32>
    %108 = vector.shape_cast %107 : vector<8x128xf32> to vector<1x8x128xf32>
    %109 = arith.truncf %108 : vector<1x8x128xf32> to vector<1x8x128xbf16>
    %c0_45 = arith.constant 0 : index
    %c0_46 = arith.constant 0 : index
    %c0_47 = arith.constant 0 : index
    %110 = vector.load %arg13[%c0_45, %c0_46, %c0_47] : memref<1x8x128xbf16, #tpu.memory_space<vmem>>, vector<1x8x128xbf16>
    tpu.vector_store %arg13[%c0_45, %c0_46, %c0_47], %109 {strides = array<i32>} : memref<1x8x128xbf16, #tpu.memory_space<vmem>>, vector<1x8x128xbf16>,
    return
  }
  func.func @transform_0(%arg0: i32) -> (i32, i32, i32) {
    %c0_i32 = arith.constant 0 : i32
    %c0_i32_0 = arith.constant 0 : i32
    %c0_i32_1 = arith.constant 0 : i32
    return %arg0, %c0_i32, %c0_i32_0 : i32, i32, i32
  }
  func.func @transform_1(%arg0: i32) -> (i32, i32, i32) {
    %c0_i32 = arith.constant 0 : i32
    %c0_i32_0 = arith.constant 0 : i32
    %c0_i32_1 = arith.constant 0 : i32
    return %arg0, %c0_i32, %c0_i32_0 : i32, i32, i32
  }
  func.func @transform_2(%arg0: i32) -> (i32, i32) {
    %c0_i32 = arith.constant 0 : i32
    %c0_i32_0 = arith.constant 0 : i32
    %c0_i32_1 = arith.constant 0 : i32
    return %c0_i32, %c0_i32_0 : i32, i32
  }
  func.func @transform_3(%arg0: i32) -> (i32, i32) {
    %c0_i32 = arith.constant 0 : i32
    %c0_i32_0 = arith.constant 0 : i32
    %c0_i32_1 = arith.constant 0 : i32
    return %c0_i32, %c0_i32_0 : i32, i32
  }
  func.func @transform_4(%arg0: i32) -> (i32, i32) {
    %c0_i32 = arith.constant 0 : i32
    %c0_i32_0 = arith.constant 0 : i32
    %c0_i32_1 = arith.constant 0 : i32
    return %c0_i32, %c0_i32_0 : i32, i32
  }
  func.func @transform_5(%arg0: i32) -> (i32, i32) {
    %c0_i32 = arith.constant 0 : i32
    %c0_i32_0 = arith.constant 0 : i32
    %c0_i32_1 = arith.constant 0 : i32
    return %c0_i32, %c0_i32_0 : i32, i32
  }
  func.func @transform_6(%arg0: i32) -> (i32, i32) {
    %c0_i32 = arith.constant 0 : i32
    %c0_i32_0 = arith.constant 0 : i32
    %c0_i32_1 = arith.constant 0 : i32
    return %c0_i32, %c0_i32_0 : i32, i32
  }
  func.func @transform_7(%arg0: i32) -> (i32, i32) {
    %c0_i32 = arith.constant 0 : i32
    %c0_i32_0 = arith.constant 0 : i32
    %c0_i32_1 = arith.constant 0 : i32
    return %c0_i32, %c0_i32_0 : i32, i32
  }
  func.func @transform_8(%arg0: i32) -> (i32, i32) {
    %c0_i32 = arith.constant 0 : i32
    %c0_i32_0 = arith.constant 0 : i32
    %c0_i32_1 = arith.constant 0 : i32
    return %c0_i32, %c0_i32_0 : i32, i32
  }
  func.func @transform_9(%arg0: i32) -> (i32, i32) {
    %c0_i32 = arith.constant 0 : i32
    %c0_i32_0 = arith.constant 0 : i32
    %c0_i32_1 = arith.constant 0 : i32
    return %c0_i32, %c0_i32_0 : i32, i32
  }
  func.func @transform_10(%arg0: i32) -> (i32, i32) {
    %c0_i32 = arith.constant 0 : i32
    %c0_i32_0 = arith.constant 0 : i32
    %c0_i32_1 = arith.constant 0 : i32
    return %c0_i32, %c0_i32_0 : i32, i32
  }
  func.func @transform_11(%arg0: i32) -> (i32, i32) {
    %c0_i32 = arith.constant 0 : i32
    %c0_i32_0 = arith.constant 0 : i32
    %c0_i32_1 = arith.constant 0 : i32
    return %c0_i32, %c0_i32_0 : i32, i32
  }
  func.func @transform_12(%arg0: i32) -> (i32, i32, i32) {
    %c0_i32 = arith.constant 0 : i32
    %c0_i32_0 = arith.constant 0 : i32
    %c0_i32_1 = arith.constant 0 : i32
    return %arg0, %c0_i32, %c0_i32_0 : i32, i32, i32
  }
}

module attributes {stable_mosaic.version = 11 : i64} {
  func.func @_linear_kernel(%arg0: i32, %arg1: i32, %arg2: memref<40x128xf32, #tpu.memory_space<vmem>>, %arg3: memref<128x128xbf16, #tpu.memory_space<vmem>>, %arg4: memref<1x128xf32, #tpu.memory_space<vmem>>, %arg5: memref<40x128xf32, #tpu.memory_space<vmem>>) attributes {dimension_semantics = [#tpu.dimension_semantics<parallel>, #tpu.dimension_semantics<parallel>], iteration_bounds = array<i64: 1, 1>, scalar_prefetch = 0 : i64, scratch_operands = 0 : i64, tpu.core_type = #tpu.core_type<tc>, window_params = [{transform_indices = @transform_0, window_bounds = array<i64: 40, 128>}, {transform_indices = @transform_1, window_bounds = array<i64: 128, 128>}, {transform_indices = @transform_2, window_bounds = array<i64: 1, 128>}, {transform_indices = @transform_3, window_bounds = array<i64: 40, 128>}]} {
    %c0 = arith.constant 0 : index
    %c0_0 = arith.constant 0 : index
    %0 = vector.load %arg2[%c0, %c0_0] : memref<40x128xf32, #tpu.memory_space<vmem>>, vector<40x128xf32>
    %c0_1 = arith.constant 0 : index
    %c0_2 = arith.constant 0 : index
    %1 = vector.load %arg3[%c0_1, %c0_2] : memref<128x128xbf16, #tpu.memory_space<vmem>>, vector<128x128xbf16>
    %c0_3 = arith.constant 0 : index
    %c0_4 = arith.constant 0 : index
    %2 = vector.load %arg4[%c0_3, %c0_4] : memref<1x128xf32, #tpu.memory_space<vmem>>, vector<1x128xf32>
    %3 = arith.truncf %0 : vector<40x128xf32> to vector<40x128xbf16>
    %cst = arith.constant dense<0.000000e+00> : vector<40x128xf32>
    %4 = tpu.matmul %3, %1, %cst {dimension_numbers = #tpu.dot_dimension_numbers<[1], [0], [0], [1], [0, 0, 1, 1], [], []>} : vector<40x128xbf16>, vector<128x128xbf16>, vector<40x128xf32> -> vector<40x128xf32>
    %5 = vector.broadcast %2 : vector<1x128xf32> to vector<40x128xf32>
    %6 = arith.addf %4, %5 : vector<40x128xf32>
    %c0_5 = arith.constant 0 : index
    %c0_6 = arith.constant 0 : index
    %7 = vector.load %arg5[%c0_5, %c0_6] : memref<40x128xf32, #tpu.memory_space<vmem>>, vector<40x128xf32>
    tpu.vector_store %arg5[%c0_5, %c0_6], %6 {strides = array<i32>} : memref<40x128xf32, #tpu.memory_space<vmem>>, vector<40x128xf32>,
    return
  }
  func.func @transform_0(%arg0: i32, %arg1: i32) -> (i32, i32) {
    %c0_i32 = arith.constant 0 : i32
    %c0_i32_0 = arith.constant 0 : i32
    return %arg0, %c0_i32 : i32, i32
  }
  func.func @transform_1(%arg0: i32, %arg1: i32) -> (i32, i32) {
    %c0_i32 = arith.constant 0 : i32
    %c0_i32_0 = arith.constant 0 : i32
    return %c0_i32, %arg1 : i32, i32
  }
  func.func @transform_2(%arg0: i32, %arg1: i32) -> (i32, i32) {
    %c0_i32 = arith.constant 0 : i32
    %c0_i32_0 = arith.constant 0 : i32
    return %c0_i32, %arg1 : i32, i32
  }
  func.func @transform_3(%arg0: i32, %arg1: i32) -> (i32, i32) {
    %c0_i32 = arith.constant 0 : i32
    return %arg0, %arg1 : i32, i32
  }
}

module attributes {stable_mosaic.version = 11 : i64} {
  func.func @_stacked_resblock_kernel(%arg0: i32, %arg1: i32, %arg2: memref<1x8x128xbf16, #tpu.memory_space<vmem>>, %arg3: memref<1x1x128xf32, #tpu.memory_space<vmem>>, %arg4: memref<1x1x128xf32, #tpu.memory_space<vmem>>, %arg5: memref<1x128x384xbf16, #tpu.memory_space<vmem>>, %arg6: memref<1x1x384xf32, #tpu.memory_space<vmem>>, %arg7: memref<1x128x128xbf16, #tpu.memory_space<vmem>>, %arg8: memref<1x1x128xf32, #tpu.memory_space<vmem>>, %arg9: memref<1x1x128xf32, #tpu.memory_space<vmem>>, %arg10: memref<1x1x128xf32, #tpu.memory_space<vmem>>, %arg11: memref<1x128x512xbf16, #tpu.memory_space<vmem>>, %arg12: memref<1x1x512xf32, #tpu.memory_space<vmem>>, %arg13: memref<1x512x128xbf16, #tpu.memory_space<vmem>>, %arg14: memref<1x1x128xf32, #tpu.memory_space<vmem>>, %arg15: memref<1x8x128xbf16, #tpu.memory_space<vmem>>, %arg16: memref<1x8x128xf32, #tpu.memory_space<vmem>>) attributes {dimension_semantics = [#tpu.dimension_semantics<parallel>, #tpu.dimension_semantics<arbitrary>], iteration_bounds = array<i64: 2, 2>, scalar_prefetch = 0 : i64, scratch_operands = 1 : i64, tpu.core_type = #tpu.core_type<tc>, window_params = [{transform_indices = @transform_0, window_bounds = array<i64: 1, 8, 128>}, {transform_indices = @transform_1, window_bounds = array<i64: 1, 1, 128>}, {transform_indices = @transform_2, window_bounds = array<i64: 1, 1, 128>}, {transform_indices = @transform_3, window_bounds = array<i64: 1, 128, 384>}, {transform_indices = @transform_4, window_bounds = array<i64: 1, 1, 384>}, {transform_indices = @transform_5, window_bounds = array<i64: 1, 128, 128>}, {transform_indices = @transform_6, window_bounds = array<i64: 1, 1, 128>}, {transform_indices = @transform_7, window_bounds = array<i64: 1, 1, 128>}, {transform_indices = @transform_8, window_bounds = array<i64: 1, 1, 128>}, {transform_indices = @transform_9, window_bounds = array<i64: 1, 128, 512>}, {transform_indices = @transform_10, window_bounds = array<i64: 1, 1, 512>}, {transform_indices = @transform_11, window_bounds = array<i64: 1, 512, 128>}, {transform_indices = @transform_12, window_bounds = array<i64: 1, 1, 128>}, {transform_indices = @transform_13, window_bounds = array<i64: 1, 8, 128>}]} {
    %c0_i32 = arith.constant 0 : i32
    %0 = arith.cmpi eq, %arg1, %c0_i32 : i32
    %1 = arith.extui %0 : i1 to i32
    %c0_i32_0 = arith.constant 0 : i32
    %2 = arith.cmpi ne, %1, %c0_i32_0 : i32
    scf.if %2 {
      %c0_66 = arith.constant 0 : index
      %c0_67 = arith.constant 0 : index
      %c0_68 = arith.constant 0 : index
      %142 = vector.load %arg2[%c0_66, %c0_67, %c0_68] : memref<1x8x128xbf16, #tpu.memory_space<vmem>>, vector<1x8x128xbf16>
      %143 = arith.extf %142 : vector<1x8x128xbf16> to vector<1x8x128xf32>
      %c0_69 = arith.constant 0 : index
      %c0_70 = arith.constant 0 : index
      %c0_71 = arith.constant 0 : index
      %144 = vector.load %arg16[%c0_69, %c0_70, %c0_71] : memref<1x8x128xf32, #tpu.memory_space<vmem>>, vector<1x8x128xf32>
      tpu.vector_store %arg16[%c0_69, %c0_70, %c0_71], %143 {strides = array<i32>} : memref<1x8x128xf32, #tpu.memory_space<vmem>>, vector<1x8x128xf32>,
    } else {
    }
    %c0 = arith.constant 0 : index
    %c0_1 = arith.constant 0 : index
    %c0_2 = arith.constant 0 : index
    %3 = vector.load %arg16[%c0, %c0_1, %c0_2] : memref<1x8x128xf32, #tpu.memory_space<vmem>>, vector<1x8x128xf32>
    %4 = vector.shape_cast %3 : vector<1x8x128xf32> to vector<8x128xf32>
    %c0_3 = arith.constant 0 : index
    %c0_4 = arith.constant 0 : index
    %c0_5 = arith.constant 0 : index
    %5 = vector.load %arg3[%c0_3, %c0_4, %c0_5] : memref<1x1x128xf32, #tpu.memory_space<vmem>>, vector<1x1x128xf32>
    %6 = vector.shape_cast %5 : vector<1x1x128xf32> to vector<1x128xf32>
    %c0_6 = arith.constant 0 : index
    %c0_7 = arith.constant 0 : index
    %c0_8 = arith.constant 0 : index
    %7 = vector.load %arg4[%c0_6, %c0_7, %c0_8] : memref<1x1x128xf32, #tpu.memory_space<vmem>>, vector<1x1x128xf32>
    %8 = vector.shape_cast %7 : vector<1x1x128xf32> to vector<1x128xf32>
    %cst = arith.constant dense<0.000000e+00> : vector<8xf32>
    %9 = vector.multi_reduction <add>, %4, %cst [1] : vector<8x128xf32> to vector<8xf32>
    %10 = vector.shape_cast %9 : vector<8xf32> to vector<8x1xf32>
    %cst_9 = arith.constant 1.280000e+02 : f32
    %11 = vector.broadcast %cst_9 : f32 to vector<8x1xf32>
    %12 = arith.divf %10, %11 : vector<8x1xf32>
    %13 = vector.broadcast %12 : vector<8x1xf32> to vector<8x128xf32>
    %14 = arith.subf %4, %13 : vector<8x128xf32>
    %15 = arith.mulf %14, %14 : vector<8x128xf32>
    %cst_10 = arith.constant dense<0.000000e+00> : vector<8xf32>
    %16 = vector.multi_reduction <add>, %15, %cst_10 [1] : vector<8x128xf32> to vector<8xf32>
    %17 = vector.shape_cast %16 : vector<8xf32> to vector<8x1xf32>
    %cst_11 = arith.constant 1.280000e+02 : f32
    %18 = vector.broadcast %cst_11 : f32 to vector<8x1xf32>
    %19 = arith.divf %17, %18 : vector<8x1xf32>
    %20 = vector.broadcast %12 : vector<8x1xf32> to vector<8x128xf32>
    %21 = arith.subf %4, %20 : vector<8x128xf32>
    %cst_12 = arith.constant 9.99999974E-6 : f32
    %22 = vector.broadcast %cst_12 : f32 to vector<8x1xf32>
    %23 = arith.addf %19, %22 : vector<8x1xf32>
    %24 = math.rsqrt %23 : vector<8x1xf32>
    %25 = vector.broadcast %24 : vector<8x1xf32> to vector<8x128xf32>
    %26 = arith.mulf %21, %25 : vector<8x128xf32>
    %27 = vector.broadcast %6 : vector<1x128xf32> to vector<8x128xf32>
    %28 = arith.mulf %26, %27 : vector<8x128xf32>
    %29 = vector.broadcast %8 : vector<1x128xf32> to vector<8x128xf32>
    %30 = arith.addf %28, %29 : vector<8x128xf32>
    %c0_13 = arith.constant 0 : index
    %c0_14 = arith.constant 0 : index
    %c0_15 = arith.constant 0 : index
    %31 = vector.load %arg5[%c0_13, %c0_14, %c0_15] : memref<1x128x384xbf16, #tpu.memory_space<vmem>>, vector<1x128x384xbf16>
    %32 = vector.shape_cast %31 : vector<1x128x384xbf16> to vector<128x384xbf16>
    %c0_16 = arith.constant 0 : index
    %c0_17 = arith.constant 0 : index
    %c0_18 = arith.constant 0 : index
    %33 = vector.load %arg6[%c0_16, %c0_17, %c0_18] : memref<1x1x384xf32, #tpu.memory_space<vmem>>, vector<1x1x384xf32>
    %34 = vector.shape_cast %33 : vector<1x1x384xf32> to vector<1x384xf32>
    %35 = arith.truncf %30 : vector<8x128xf32> to vector<8x128xbf16>
    %cst_19 = arith.constant dense<0.000000e+00> : vector<8x384xf32>
    %36 = tpu.matmul %35, %32, %cst_19 {dimension_numbers = #tpu.dot_dimension_numbers<[1], [0], [0], [1], [0, 0, 1, 1], [], []>} : vector<8x128xbf16>, vector<128x384xbf16>, vector<8x384xf32> -> vector<8x384xf32>
    %37 = vector.broadcast %34 : vector<1x384xf32> to vector<8x384xf32>
    %38 = arith.addf %36, %37 : vector<8x384xf32>
    %39 = vector.shape_cast %38 : vector<8x384xf32> to vector<1x8x384xf32>
    %40 = vector.extract_strided_slice %39 {offsets = [0, 0, 0], sizes = [1, 8, 128], strides = [1, 1, 1]} : vector<1x8x384xf32> to vector<1x8x128xf32>
    %41 = vector.extract_strided_slice %39 {offsets = [0, 0, 128], sizes = [1, 8, 128], strides = [1, 1, 1]} : vector<1x8x384xf32> to vector<1x8x128xf32>
    %42 = vector.extract_strided_slice %39 {offsets = [0, 0, 256], sizes = [1, 8, 128], strides = [1, 1, 1]} : vector<1x8x384xf32> to vector<1x8x128xf32>
    %43 = vector.shape_cast %40 : vector<1x8x128xf32> to vector<8x128xf32>
    %44 = vector.shape_cast %41 : vector<1x8x128xf32> to vector<8x128xf32>
    %45 = vector.shape_cast %42 : vector<1x8x128xf32> to vector<8x128xf32>
    %46 = vector.extract_strided_slice %43 {offsets = [0, 0], sizes = [8, 64], strides = [1, 1]} : vector<8x128xf32> to vector<8x64xf32>
    %47 = vector.extract_strided_slice %44 {offsets = [0, 0], sizes = [8, 64], strides = [1, 1]} : vector<8x128xf32> to vector<8x64xf32>
    %48 = vector.extract_strided_slice %45 {offsets = [0, 0], sizes = [8, 64], strides = [1, 1]} : vector<8x128xf32> to vector<8x64xf32>
    %cst_20 = arith.constant dense<0.000000e+00> : vector<8x8xf32>
    %49 = tpu.matmul %46, %47, %cst_20 {dimension_numbers = #tpu.dot_dimension_numbers<[1], [1], [0], [0], [0, 0, 1, 0], [], []>} : vector<8x64xf32>, vector<8x64xf32>, vector<8x8xf32> -> vector<8x8xf32>
    %cst_21 = arith.constant dense<0xFF800000> : vector<8xf32>
    %50 = vector.multi_reduction <maximumf>, %49, %cst_21 [1] : vector<8x8xf32> to vector<8xf32>
    %51 = vector.shape_cast %50 : vector<8xf32> to vector<8x1xf32>
    %52 = vector.broadcast %51 : vector<8x1xf32> to vector<8x8xf32>
    %53 = arith.subf %49, %52 : vector<8x8xf32>
    %54 = math.exp %53 : vector<8x8xf32>
    %cst_22 = arith.constant dense<0.000000e+00> : vector<8xf32>
    %55 = vector.multi_reduction <add>, %54, %cst_22 [1] : vector<8x8xf32> to vector<8xf32>
    %56 = vector.shape_cast %55 : vector<8xf32> to vector<8x1xf32>
    %57 = tpu.reciprocal %56 {approx = true} : vector<8x1xf32> -> vector<8x1xf32>
    %58 = vector.broadcast %57 : vector<8x1xf32> to vector<8x8xf32>
    %59 = arith.mulf %54, %58 : vector<8x8xf32>
    %cst_23 = arith.constant dense<0.000000e+00> : vector<8x64xf32>
    %60 = tpu.matmul %59, %48, %cst_23 {dimension_numbers = #tpu.dot_dimension_numbers<[1], [0], [0], [1], [0, 0, 1, 1], [], []>} : vector<8x8xf32>, vector<8x64xf32>, vector<8x64xf32> -> vector<8x64xf32>
    %61 = vector.extract_strided_slice %43 {offsets = [0, 64], sizes = [8, 64], strides = [1, 1]} : vector<8x128xf32> to vector<8x64xf32>
    %62 = vector.extract_strided_slice %44 {offsets = [0, 64], sizes = [8, 64], strides = [1, 1]} : vector<8x128xf32> to vector<8x64xf32>
    %63 = vector.extract_strided_slice %45 {offsets = [0, 64], sizes = [8, 64], strides = [1, 1]} : vector<8x128xf32> to vector<8x64xf32>
    %cst_24 = arith.constant dense<0.000000e+00> : vector<8x8xf32>
    %64 = tpu.matmul %61, %62, %cst_24 {dimension_numbers = #tpu.dot_dimension_numbers<[1], [1], [0], [0], [0, 0, 1, 0], [], []>} : vector<8x64xf32>, vector<8x64xf32>, vector<8x8xf32> -> vector<8x8xf32>
    %cst_25 = arith.constant dense<0xFF800000> : vector<8xf32>
    %65 = vector.multi_reduction <maximumf>, %64, %cst_25 [1] : vector<8x8xf32> to vector<8xf32>
    %66 = vector.shape_cast %65 : vector<8xf32> to vector<8x1xf32>
    %67 = vector.broadcast %66 : vector<8x1xf32> to vector<8x8xf32>
    %68 = arith.subf %64, %67 : vector<8x8xf32>
    %69 = math.exp %68 : vector<8x8xf32>
    %cst_26 = arith.constant dense<0.000000e+00> : vector<8xf32>
    %70 = vector.multi_reduction <add>, %69, %cst_26 [1] : vector<8x8xf32> to vector<8xf32>
    %71 = vector.shape_cast %70 : vector<8xf32> to vector<8x1xf32>
    %72 = tpu.reciprocal %71 {approx = true} : vector<8x1xf32> -> vector<8x1xf32>
    %73 = vector.broadcast %72 : vector<8x1xf32> to vector<8x8xf32>
    %74 = arith.mulf %69, %73 : vector<8x8xf32>
    %cst_27 = arith.constant dense<0.000000e+00> : vector<8x64xf32>
    %75 = tpu.matmul %74, %63, %cst_27 {dimension_numbers = #tpu.dot_dimension_numbers<[1], [0], [0], [1], [0, 0, 1, 1], [], []>} : vector<8x8xf32>, vector<8x64xf32>, vector<8x64xf32> -> vector<8x64xf32>
    %76 = tpu.concatenate %60, %75 in 1 : vector<8x64xf32>, vector<8x64xf32> -> vector<8x128xf32>
    %c0_28 = arith.constant 0 : index
    %c0_29 = arith.constant 0 : index
    %c0_30 = arith.constant 0 : index
    %77 = vector.load %arg7[%c0_28, %c0_29, %c0_30] : memref<1x128x128xbf16, #tpu.memory_space<vmem>>, vector<1x128x128xbf16>
    %78 = vector.shape_cast %77 : vector<1x128x128xbf16> to vector<128x128xbf16>
    %c0_31 = arith.constant 0 : index
    %c0_32 = arith.constant 0 : index
    %c0_33 = arith.constant 0 : index
    %79 = vector.load %arg8[%c0_31, %c0_32, %c0_33] : memref<1x1x128xf32, #tpu.memory_space<vmem>>, vector<1x1x128xf32>
    %80 = vector.shape_cast %79 : vector<1x1x128xf32> to vector<1x128xf32>
    %81 = arith.truncf %76 : vector<8x128xf32> to vector<8x128xbf16>
    %cst_34 = arith.constant dense<0.000000e+00> : vector<8x128xf32>
    %82 = tpu.matmul %81, %78, %cst_34 {dimension_numbers = #tpu.dot_dimension_numbers<[1], [0], [0], [1], [0, 0, 1, 1], [], []>} : vector<8x128xbf16>, vector<128x128xbf16>, vector<8x128xf32> -> vector<8x128xf32>
    %83 = vector.broadcast %80 : vector<1x128xf32> to vector<8x128xf32>
    %84 = arith.addf %82, %83 : vector<8x128xf32>
    %85 = arith.addf %4, %84 : vector<8x128xf32>
    %c0_35 = arith.constant 0 : index
    %c0_36 = arith.constant 0 : index
    %c0_37 = arith.constant 0 : index
    %86 = vector.load %arg9[%c0_35, %c0_36, %c0_37] : memref<1x1x128xf32, #tpu.memory_space<vmem>>, vector<1x1x128xf32>
    %87 = vector.shape_cast %86 : vector<1x1x128xf32> to vector<1x128xf32>
    %c0_38 = arith.constant 0 : index
    %c0_39 = arith.constant 0 : index
    %c0_40 = arith.constant 0 : index
    %88 = vector.load %arg10[%c0_38, %c0_39, %c0_40] : memref<1x1x128xf32, #tpu.memory_space<vmem>>, vector<1x1x128xf32>
    %89 = vector.shape_cast %88 : vector<1x1x128xf32> to vector<1x128xf32>
    %cst_41 = arith.constant dense<0.000000e+00> : vector<8xf32>
    %90 = vector.multi_reduction <add>, %85, %cst_41 [1] : vector<8x128xf32> to vector<8xf32>
    %91 = vector.shape_cast %90 : vector<8xf32> to vector<8x1xf32>
    %cst_42 = arith.constant 1.280000e+02 : f32
    %92 = vector.broadcast %cst_42 : f32 to vector<8x1xf32>
    %93 = arith.divf %91, %92 : vector<8x1xf32>
    %94 = vector.broadcast %93 : vector<8x1xf32> to vector<8x128xf32>
    %95 = arith.subf %85, %94 : vector<8x128xf32>
    %96 = arith.mulf %95, %95 : vector<8x128xf32>
    %cst_43 = arith.constant dense<0.000000e+00> : vector<8xf32>
    %97 = vector.multi_reduction <add>, %96, %cst_43 [1] : vector<8x128xf32> to vector<8xf32>
    %98 = vector.shape_cast %97 : vector<8xf32> to vector<8x1xf32>
    %cst_44 = arith.constant 1.280000e+02 : f32
    %99 = vector.broadcast %cst_44 : f32 to vector<8x1xf32>
    %100 = arith.divf %98, %99 : vector<8x1xf32>
    %101 = vector.broadcast %93 : vector<8x1xf32> to vector<8x128xf32>
    %102 = arith.subf %85, %101 : vector<8x128xf32>
    %cst_45 = arith.constant 9.99999974E-6 : f32
    %103 = vector.broadcast %cst_45 : f32 to vector<8x1xf32>
    %104 = arith.addf %100, %103 : vector<8x1xf32>
    %105 = math.rsqrt %104 : vector<8x1xf32>
    %106 = vector.broadcast %105 : vector<8x1xf32> to vector<8x128xf32>
    %107 = arith.mulf %102, %106 : vector<8x128xf32>
    %108 = vector.broadcast %87 : vector<1x128xf32> to vector<8x128xf32>
    %109 = arith.mulf %107, %108 : vector<8x128xf32>
    %110 = vector.broadcast %89 : vector<1x128xf32> to vector<8x128xf32>
    %111 = arith.addf %109, %110 : vector<8x128xf32>
    %c0_46 = arith.constant 0 : index
    %c0_47 = arith.constant 0 : index
    %c0_48 = arith.constant 0 : index
    %112 = vector.load %arg11[%c0_46, %c0_47, %c0_48] : memref<1x128x512xbf16, #tpu.memory_space<vmem>>, vector<1x128x512xbf16>
    %113 = vector.shape_cast %112 : vector<1x128x512xbf16> to vector<128x512xbf16>
    %c0_49 = arith.constant 0 : index
    %c0_50 = arith.constant 0 : index
    %c0_51 = arith.constant 0 : index
    %114 = vector.load %arg12[%c0_49, %c0_50, %c0_51] : memref<1x1x512xf32, #tpu.memory_space<vmem>>, vector<1x1x512xf32>
    %115 = vector.shape_cast %114 : vector<1x1x512xf32> to vector<1x512xf32>
    %116 = arith.truncf %111 : vector<8x128xf32> to vector<8x128xbf16>
    %cst_52 = arith.constant dense<0.000000e+00> : vector<8x512xf32>
    %117 = tpu.matmul %116, %113, %cst_52 {dimension_numbers = #tpu.dot_dimension_numbers<[1], [0], [0], [1], [0, 0, 1, 1], [], []>} : vector<8x128xbf16>, vector<128x512xbf16>, vector<8x512xf32> -> vector<8x512xf32>
    %118 = vector.broadcast %115 : vector<1x512xf32> to vector<8x512xf32>
    %119 = arith.addf %117, %118 : vector<8x512xf32>
    %cst_53 = arith.constant 1.702000e+00 : f32
    %120 = vector.broadcast %cst_53 : f32 to vector<8x512xf32>
    %121 = arith.mulf %120, %119 : vector<8x512xf32>
    %122 = arith.negf %121 : vector<8x512xf32>
    %123 = math.exp %122 : vector<8x512xf32>
    %cst_54 = arith.constant 1.000000e+00 : f32
    %124 = vector.broadcast %cst_54 : f32 to vector<8x512xf32>
    %125 = arith.addf %124, %123 : vector<8x512xf32>
    %126 = arith.divf %124, %125 : vector<8x512xf32>
    %127 = arith.mulf %119, %126 : vector<8x512xf32>
    %c0_55 = arith.constant 0 : index
    %c0_56 = arith.constant 0 : index
    %c0_57 = arith.constant 0 : index
    %128 = vector.load %arg13[%c0_55, %c0_56, %c0_57] : memref<1x512x128xbf16, #tpu.memory_space<vmem>>, vector<1x512x128xbf16>
    %129 = vector.shape_cast %128 : vector<1x512x128xbf16> to vector<512x128xbf16>
    %c0_58 = arith.constant 0 : index
    %c0_59 = arith.constant 0 : index
    %c0_60 = arith.constant 0 : index
    %130 = vector.load %arg14[%c0_58, %c0_59, %c0_60] : memref<1x1x128xf32, #tpu.memory_space<vmem>>, vector<1x1x128xf32>
    %131 = vector.shape_cast %130 : vector<1x1x128xf32> to vector<1x128xf32>
    %132 = arith.truncf %127 : vector<8x512xf32> to vector<8x512xbf16>
    %cst_61 = arith.constant dense<0.000000e+00> : vector<8x128xf32>
    %133 = tpu.matmul %132, %129, %cst_61 {dimension_numbers = #tpu.dot_dimension_numbers<[1], [0], [0], [1], [0, 0, 1, 1], [], []>} : vector<8x512xbf16>, vector<512x128xbf16>, vector<8x128xf32> -> vector<8x128xf32>
    %134 = vector.broadcast %131 : vector<1x128xf32> to vector<8x128xf32>
    %135 = arith.addf %133, %134 : vector<8x128xf32>
    %136 = arith.addf %85, %135 : vector<8x128xf32>
    %137 = vector.shape_cast %136 : vector<8x128xf32> to vector<1x8x128xf32>
    %c0_62 = arith.constant 0 : index
    %c0_63 = arith.constant 0 : index
    %c0_64 = arith.constant 0 : index
    %138 = vector.load %arg16[%c0_62, %c0_63, %c0_64] : memref<1x8x128xf32, #tpu.memory_space<vmem>>, vector<1x8x128xf32>
    tpu.vector_store %arg16[%c0_62, %c0_63, %c0_64], %137 {strides = array<i32>} : memref<1x8x128xf32, #tpu.memory_space<vmem>>, vector<1x8x128xf32>,
    %c1_i32 = arith.constant 1 : i32
    %139 = arith.cmpi eq, %arg1, %c1_i32 : i32
    %140 = arith.extui %139 : i1 to i32
    %c0_i32_65 = arith.constant 0 : i32
    %141 = arith.cmpi ne, %140, %c0_i32_65 : i32
    scf.if %141 {
      %142 = vector.shape_cast %136 : vector<8x128xf32> to vector<1x8x128xf32>
      %143 = arith.truncf %142 : vector<1x8x128xf32> to vector<1x8x128xbf16>
      %c0_66 = arith.constant 0 : index
      %c0_67 = arith.constant 0 : index
      %c0_68 = arith.constant 0 : index
      %144 = vector.load %arg15[%c0_66, %c0_67, %c0_68] : memref<1x8x128xbf16, #tpu.memory_space<vmem>>, vector<1x8x128xbf16>
      tpu.vector_store %arg15[%c0_66, %c0_67, %c0_68], %143 {strides = array<i32>} : memref<1x8x128xbf16, #tpu.memory_space<vmem>>, vector<1x8x128xbf16>,
    } else {
    }
    return
  }
  func.func @transform_0(%arg0: i32, %arg1: i32) -> (i32, i32, i32) {
    %c0_i32 = arith.constant 0 : i32
    %c0_i32_0 = arith.constant 0 : i32
    %c0_i32_1 = arith.constant 0 : i32
    return %arg0, %c0_i32, %c0_i32_0 : i32, i32, i32
  }
  func.func @transform_1(%arg0: i32, %arg1: i32) -> (i32, i32, i32) {
    %c0_i32 = arith.constant 0 : i32
    %c0_i32_0 = arith.constant 0 : i32
    %c0_i32_1 = arith.constant 0 : i32
    return %arg1, %c0_i32, %c0_i32_0 : i32, i32, i32
  }
  func.func @transform_2(%arg0: i32, %arg1: i32) -> (i32, i32, i32) {
    %c0_i32 = arith.constant 0 : i32
    %c0_i32_0 = arith.constant 0 : i32
    %c0_i32_1 = arith.constant 0 : i32
    return %arg1, %c0_i32, %c0_i32_0 : i32, i32, i32
  }
  func.func @transform_3(%arg0: i32, %arg1: i32) -> (i32, i32, i32) {
    %c0_i32 = arith.constant 0 : i32
    %c0_i32_0 = arith.constant 0 : i32
    %c0_i32_1 = arith.constant 0 : i32
    return %arg1, %c0_i32, %c0_i32_0 : i32, i32, i32
  }
  func.func @transform_4(%arg0: i32, %arg1: i32) -> (i32, i32, i32) {
    %c0_i32 = arith.constant 0 : i32
    %c0_i32_0 = arith.constant 0 : i32
    %c0_i32_1 = arith.constant 0 : i32
    return %arg1, %c0_i32, %c0_i32_0 : i32, i32, i32
  }
  func.func @transform_5(%arg0: i32, %arg1: i32) -> (i32, i32, i32) {
    %c0_i32 = arith.constant 0 : i32
    %c0_i32_0 = arith.constant 0 : i32
    %c0_i32_1 = arith.constant 0 : i32
    return %arg1, %c0_i32, %c0_i32_0 : i32, i32, i32
  }
  func.func @transform_6(%arg0: i32, %arg1: i32) -> (i32, i32, i32) {
    %c0_i32 = arith.constant 0 : i32
    %c0_i32_0 = arith.constant 0 : i32
    %c0_i32_1 = arith.constant 0 : i32
    return %arg1, %c0_i32, %c0_i32_0 : i32, i32, i32
  }
  func.func @transform_7(%arg0: i32, %arg1: i32) -> (i32, i32, i32) {
    %c0_i32 = arith.constant 0 : i32
    %c0_i32_0 = arith.constant 0 : i32
    %c0_i32_1 = arith.constant 0 : i32
    return %arg1, %c0_i32, %c0_i32_0 : i32, i32, i32
  }
  func.func @transform_8(%arg0: i32, %arg1: i32) -> (i32, i32, i32) {
    %c0_i32 = arith.constant 0 : i32
    %c0_i32_0 = arith.constant 0 : i32
    %c0_i32_1 = arith.constant 0 : i32
    return %arg1, %c0_i32, %c0_i32_0 : i32, i32, i32
  }
  func.func @transform_9(%arg0: i32, %arg1: i32) -> (i32, i32, i32) {
    %c0_i32 = arith.constant 0 : i32
    %c0_i32_0 = arith.constant 0 : i32
    %c0_i32_1 = arith.constant 0 : i32
    return %arg1, %c0_i32, %c0_i32_0 : i32, i32, i32
  }
  func.func @transform_10(%arg0: i32, %arg1: i32) -> (i32, i32, i32) {
    %c0_i32 = arith.constant 0 : i32
    %c0_i32_0 = arith.constant 0 : i32
    %c0_i32_1 = arith.constant 0 : i32
    return %arg1, %c0_i32, %c0_i32_0 : i32, i32, i32
  }
  func.func @transform_11(%arg0: i32, %arg1: i32) -> (i32, i32, i32) {
    %c0_i32 = arith.constant 0 : i32
    %c0_i32_0 = arith.constant 0 : i32
    %c0_i32_1 = arith.constant 0 : i32
    return %arg1, %c0_i32, %c0_i32_0 : i32, i32, i32
  }
  func.func @transform_12(%arg0: i32, %arg1: i32) -> (i32, i32, i32) {
    %c0_i32 = arith.constant 0 : i32
    %c0_i32_0 = arith.constant 0 : i32
    %c0_i32_1 = arith.constant 0 : i32
    return %arg1, %c0_i32, %c0_i32_0 : i32, i32, i32
  }
  func.func @transform_13(%arg0: i32, %arg1: i32) -> (i32, i32, i32) {
    %c0_i32 = arith.constant 0 : i32
    %c0_i32_0 = arith.constant 0 : i32
    %c0_i32_1 = arith.constant 0 : i32
    return %arg0, %c0_i32, %c0_i32_0 : i32, i32, i32
  }
}

module attributes {stable_mosaic.version = 11 : i64} {
  func.func @_mlm_stem_kernel(%arg0: i32, %arg1: memref<1x8x128xbf16, #tpu.memory_space<vmem>>, %arg2: memref<1x128xf32, #tpu.memory_space<vmem>>, %arg3: memref<1x128xf32, #tpu.memory_space<vmem>>, %arg4: memref<128x128xbf16, #tpu.memory_space<vmem>>, %arg5: memref<1x128xf32, #tpu.memory_space<vmem>>, %arg6: memref<1x128xf32, #tpu.memory_space<vmem>>, %arg7: memref<1x128xf32, #tpu.memory_space<vmem>>, %arg8: memref<1x8x128xbf16, #tpu.memory_space<vmem>>) attributes {dimension_semantics = [#tpu.dimension_semantics<parallel>], iteration_bounds = array<i64: 2>, scalar_prefetch = 0 : i64, scratch_operands = 0 : i64, tpu.core_type = #tpu.core_type<tc>, window_params = [{transform_indices = @transform_0, window_bounds = array<i64: 1, 8, 128>}, {pipeline_mode = #tpu.pipeline_mode<synchronous>, transform_indices = @transform_1, window_bounds = array<i64: 1, 128>}, {pipeline_mode = #tpu.pipeline_mode<synchronous>, transform_indices = @transform_2, window_bounds = array<i64: 1, 128>}, {pipeline_mode = #tpu.pipeline_mode<synchronous>, transform_indices = @transform_3, window_bounds = array<i64: 128, 128>}, {pipeline_mode = #tpu.pipeline_mode<synchronous>, transform_indices = @transform_4, window_bounds = array<i64: 1, 128>}, {pipeline_mode = #tpu.pipeline_mode<synchronous>, transform_indices = @transform_5, window_bounds = array<i64: 1, 128>}, {pipeline_mode = #tpu.pipeline_mode<synchronous>, transform_indices = @transform_6, window_bounds = array<i64: 1, 128>}, {transform_indices = @transform_7, window_bounds = array<i64: 1, 8, 128>}]} {
    %c0 = arith.constant 0 : index
    %c0_0 = arith.constant 0 : index
    %c0_1 = arith.constant 0 : index
    %0 = vector.load %arg1[%c0, %c0_0, %c0_1] : memref<1x8x128xbf16, #tpu.memory_space<vmem>>, vector<1x8x128xbf16>
    %1 = arith.extf %0 : vector<1x8x128xbf16> to vector<1x8x128xf32>
    %2 = vector.shape_cast %1 : vector<1x8x128xf32> to vector<8x128xf32>
    %c0_2 = arith.constant 0 : index
    %c0_3 = arith.constant 0 : index
    %3 = vector.load %arg2[%c0_2, %c0_3] : memref<1x128xf32, #tpu.memory_space<vmem>>, vector<1x128xf32>
    %c0_4 = arith.constant 0 : index
    %c0_5 = arith.constant 0 : index
    %4 = vector.load %arg3[%c0_4, %c0_5] : memref<1x128xf32, #tpu.memory_space<vmem>>, vector<1x128xf32>
    %cst = arith.constant dense<0.000000e+00> : vector<8xf32>
    %5 = vector.multi_reduction <add>, %2, %cst [1] : vector<8x128xf32> to vector<8xf32>
    %6 = vector.shape_cast %5 : vector<8xf32> to vector<8x1xf32>
    %cst_6 = arith.constant 1.280000e+02 : f32
    %7 = vector.broadcast %cst_6 : f32 to vector<8x1xf32>
    %8 = arith.divf %6, %7 : vector<8x1xf32>
    %9 = vector.broadcast %8 : vector<8x1xf32> to vector<8x128xf32>
    %10 = arith.subf %2, %9 : vector<8x128xf32>
    %11 = arith.mulf %10, %10 : vector<8x128xf32>
    %cst_7 = arith.constant dense<0.000000e+00> : vector<8xf32>
    %12 = vector.multi_reduction <add>, %11, %cst_7 [1] : vector<8x128xf32> to vector<8xf32>
    %13 = vector.shape_cast %12 : vector<8xf32> to vector<8x1xf32>
    %cst_8 = arith.constant 1.280000e+02 : f32
    %14 = vector.broadcast %cst_8 : f32 to vector<8x1xf32>
    %15 = arith.divf %13, %14 : vector<8x1xf32>
    %16 = vector.broadcast %8 : vector<8x1xf32> to vector<8x128xf32>
    %17 = arith.subf %2, %16 : vector<8x128xf32>
    %cst_9 = arith.constant 9.99999974E-6 : f32
    %18 = vector.broadcast %cst_9 : f32 to vector<8x1xf32>
    %19 = arith.addf %15, %18 : vector<8x1xf32>
    %20 = math.rsqrt %19 : vector<8x1xf32>
    %21 = vector.broadcast %20 : vector<8x1xf32> to vector<8x128xf32>
    %22 = arith.mulf %17, %21 : vector<8x128xf32>
    %23 = vector.broadcast %3 : vector<1x128xf32> to vector<8x128xf32>
    %24 = arith.mulf %22, %23 : vector<8x128xf32>
    %25 = vector.broadcast %4 : vector<1x128xf32> to vector<8x128xf32>
    %26 = arith.addf %24, %25 : vector<8x128xf32>
    %c0_10 = arith.constant 0 : index
    %c0_11 = arith.constant 0 : index
    %27 = vector.load %arg4[%c0_10, %c0_11] : memref<128x128xbf16, #tpu.memory_space<vmem>>, vector<128x128xbf16>
    %c0_12 = arith.constant 0 : index
    %c0_13 = arith.constant 0 : index
    %28 = vector.load %arg5[%c0_12, %c0_13] : memref<1x128xf32, #tpu.memory_space<vmem>>, vector<1x128xf32>
    %29 = arith.truncf %26 : vector<8x128xf32> to vector<8x128xbf16>
    %cst_14 = arith.constant dense<0.000000e+00> : vector<8x128xf32>
    %30 = tpu.matmul %29, %27, %cst_14 {dimension_numbers = #tpu.dot_dimension_numbers<[1], [0], [0], [1], [0, 0, 1, 1], [], []>} : vector<8x128xbf16>, vector<128x128xbf16>, vector<8x128xf32> -> vector<8x128xf32>
    %31 = vector.broadcast %28 : vector<1x128xf32> to vector<8x128xf32>
    %32 = arith.addf %30, %31 : vector<8x128xf32>
    %cst_15 = arith.constant 1.702000e+00 : f32
    %33 = vector.broadcast %cst_15 : f32 to vector<8x128xf32>
    %34 = arith.mulf %33, %32 : vector<8x128xf32>
    %35 = arith.negf %34 : vector<8x128xf32>
    %36 = math.exp %35 : vector<8x128xf32>
    %cst_16 = arith.constant 1.000000e+00 : f32
    %37 = vector.broadcast %cst_16 : f32 to vector<8x128xf32>
    %38 = arith.addf %37, %36 : vector<8x128xf32>
    %39 = arith.divf %37, %38 : vector<8x128xf32>
    %40 = arith.mulf %32, %39 : vector<8x128xf32>
    %c0_17 = arith.constant 0 : index
    %c0_18 = arith.constant 0 : index
    %41 = vector.load %arg6[%c0_17, %c0_18] : memref<1x128xf32, #tpu.memory_space<vmem>>, vector<1x128xf32>
    %c0_19 = arith.constant 0 : index
    %c0_20 = arith.constant 0 : index
    %42 = vector.load %arg7[%c0_19, %c0_20] : memref<1x128xf32, #tpu.memory_space<vmem>>, vector<1x128xf32>
    %cst_21 = arith.constant dense<0.000000e+00> : vector<8xf32>
    %43 = vector.multi_reduction <add>, %40, %cst_21 [1] : vector<8x128xf32> to vector<8xf32>
    %44 = vector.shape_cast %43 : vector<8xf32> to vector<8x1xf32>
    %cst_22 = arith.constant 1.280000e+02 : f32
    %45 = vector.broadcast %cst_22 : f32 to vector<8x1xf32>
    %46 = arith.divf %44, %45 : vector<8x1xf32>
    %47 = vector.broadcast %46 : vector<8x1xf32> to vector<8x128xf32>
    %48 = arith.subf %40, %47 : vector<8x128xf32>
    %49 = arith.mulf %48, %48 : vector<8x128xf32>
    %cst_23 = arith.constant dense<0.000000e+00> : vector<8xf32>
    %50 = vector.multi_reduction <add>, %49, %cst_23 [1] : vector<8x128xf32> to vector<8xf32>
    %51 = vector.shape_cast %50 : vector<8xf32> to vector<8x1xf32>
    %cst_24 = arith.constant 1.280000e+02 : f32
    %52 = vector.broadcast %cst_24 : f32 to vector<8x1xf32>
    %53 = arith.divf %51, %52 : vector<8x1xf32>
    %54 = vector.broadcast %46 : vector<8x1xf32> to vector<8x128xf32>
    %55 = arith.subf %40, %54 : vector<8x128xf32>
    %cst_25 = arith.constant 9.99999974E-6 : f32
    %56 = vector.broadcast %cst_25 : f32 to vector<8x1xf32>
    %57 = arith.addf %53, %56 : vector<8x1xf32>
    %58 = math.rsqrt %57 : vector<8x1xf32>
    %59 = vector.broadcast %58 : vector<8x1xf32> to vector<8x128xf32>
    %60 = arith.mulf %55, %59 : vector<8x128xf32>
    %61 = vector.broadcast %41 : vector<1x128xf32> to vector<8x128xf32>
    %62 = arith.mulf %60, %61 : vector<8x128xf32>
    %63 = vector.broadcast %42 : vector<1x128xf32> to vector<8x128xf32>
    %64 = arith.addf %62, %63 : vector<8x128xf32>
    %65 = vector.shape_cast %64 : vector<8x128xf32> to vector<1x8x128xf32>
    %66 = arith.truncf %65 : vector<1x8x128xf32> to vector<1x8x128xbf16>
    %c0_26 = arith.constant 0 : index
    %c0_27 = arith.constant 0 : index
    %c0_28 = arith.constant 0 : index
    %67 = vector.load %arg8[%c0_26, %c0_27, %c0_28] : memref<1x8x128xbf16, #tpu.memory_space<vmem>>, vector<1x8x128xbf16>
    tpu.vector_store %arg8[%c0_26, %c0_27, %c0_28], %66 {strides = array<i32>} : memref<1x8x128xbf16, #tpu.memory_space<vmem>>, vector<1x8x128xbf16>,
    return
  }
  func.func @transform_0(%arg0: i32) -> (i32, i32, i32) {
    %c0_i32 = arith.constant 0 : i32
    %c0_i32_0 = arith.constant 0 : i32
    %c0_i32_1 = arith.constant 0 : i32
    return %arg0, %c0_i32, %c0_i32_0 : i32, i32, i32
  }
  func.func @transform_1(%arg0: i32) -> (i32, i32) {
    %c0_i32 = arith.constant 0 : i32
    %c0_i32_0 = arith.constant 0 : i32
    %c0_i32_1 = arith.constant 0 : i32
    return %c0_i32, %c0_i32_0 : i32, i32
  }
  func.func @transform_2(%arg0: i32) -> (i32, i32) {
    %c0_i32 = arith.constant 0 : i32
    %c0_i32_0 = arith.constant 0 : i32
    %c0_i32_1 = arith.constant 0 : i32
    return %c0_i32, %c0_i32_0 : i32, i32
  }
  func.func @transform_3(%arg0: i32) -> (i32, i32) {
    %c0_i32 = arith.constant 0 : i32
    %c0_i32_0 = arith.constant 0 : i32
    %c0_i32_1 = arith.constant 0 : i32
    return %c0_i32, %c0_i32_0 : i32, i32
  }
  func.func @transform_4(%arg0: i32) -> (i32, i32) {
    %c0_i32 = arith.constant 0 : i32
    %c0_i32_0 = arith.constant 0 : i32
    %c0_i32_1 = arith.constant 0 : i32
    return %c0_i32, %c0_i32_0 : i32, i32
  }
  func.func @transform_5(%arg0: i32) -> (i32, i32) {
    %c0_i32 = arith.constant 0 : i32
    %c0_i32_0 = arith.constant 0 : i32
    %c0_i32_1 = arith.constant 0 : i32
    return %c0_i32, %c0_i32_0 : i32, i32
  }
  func.func @transform_6(%arg0: i32) -> (i32, i32) {
    %c0_i32 = arith.constant 0 : i32
    %c0_i32_0 = arith.constant 0 : i32
    %c0_i32_1 = arith.constant 0 : i32
    return %c0_i32, %c0_i32_0 : i32, i32
  }
  func.func @transform_7(%arg0: i32) -> (i32, i32, i32) {
    %c0_i32 = arith.constant 0 : i32
    %c0_i32_0 = arith.constant 0 : i32
    %c0_i32_1 = arith.constant 0 : i32
    return %arg0, %c0_i32, %c0_i32_0 : i32, i32, i32
  }
}

module attributes {stable_mosaic.version = 11 : i64} {
  func.func @_linear_kernel(%arg0: i32, %arg1: i32, %arg2: memref<16x128xbf16, #tpu.memory_space<vmem>>, %arg3: memref<128x512xbf16, #tpu.memory_space<vmem>>, %arg4: memref<1x512xf32, #tpu.memory_space<vmem>>, %arg5: memref<16x512xf32, #tpu.memory_space<vmem>>) attributes {dimension_semantics = [#tpu.dimension_semantics<parallel>, #tpu.dimension_semantics<parallel>], iteration_bounds = array<i64: 1, 1>, scalar_prefetch = 0 : i64, scratch_operands = 0 : i64, tpu.core_type = #tpu.core_type<tc>, window_params = [{transform_indices = @transform_0, window_bounds = array<i64: 16, 128>}, {transform_indices = @transform_1, window_bounds = array<i64: 128, 512>}, {transform_indices = @transform_2, window_bounds = array<i64: 1, 512>}, {transform_indices = @transform_3, window_bounds = array<i64: 16, 512>}]} {
    %c0 = arith.constant 0 : index
    %c0_0 = arith.constant 0 : index
    %0 = vector.load %arg2[%c0, %c0_0] : memref<16x128xbf16, #tpu.memory_space<vmem>>, vector<16x128xbf16>
    %c0_1 = arith.constant 0 : index
    %c0_2 = arith.constant 0 : index
    %1 = vector.load %arg3[%c0_1, %c0_2] : memref<128x512xbf16, #tpu.memory_space<vmem>>, vector<128x512xbf16>
    %c0_3 = arith.constant 0 : index
    %c0_4 = arith.constant 0 : index
    %2 = vector.load %arg4[%c0_3, %c0_4] : memref<1x512xf32, #tpu.memory_space<vmem>>, vector<1x512xf32>
    %cst = arith.constant dense<0.000000e+00> : vector<16x512xf32>
    %3 = tpu.matmul %0, %1, %cst {dimension_numbers = #tpu.dot_dimension_numbers<[1], [0], [0], [1], [0, 0, 1, 1], [], []>} : vector<16x128xbf16>, vector<128x512xbf16>, vector<16x512xf32> -> vector<16x512xf32>
    %4 = vector.broadcast %2 : vector<1x512xf32> to vector<16x512xf32>
    %5 = arith.addf %3, %4 : vector<16x512xf32>
    %c0_5 = arith.constant 0 : index
    %c0_6 = arith.constant 0 : index
    %6 = vector.load %arg5[%c0_5, %c0_6] : memref<16x512xf32, #tpu.memory_space<vmem>>, vector<16x512xf32>
    tpu.vector_store %arg5[%c0_5, %c0_6], %5 {strides = array<i32>} : memref<16x512xf32, #tpu.memory_space<vmem>>, vector<16x512xf32>,
    return
  }
  func.func @transform_0(%arg0: i32, %arg1: i32) -> (i32, i32) {
    %c0_i32 = arith.constant 0 : i32
    %c0_i32_0 = arith.constant 0 : i32
    return %arg0, %c0_i32 : i32, i32
  }
  func.func @transform_1(%arg0: i32, %arg1: i32) -> (i32, i32) {
    %c0_i32 = arith.constant 0 : i32
    %c0_i32_0 = arith.constant 0 : i32
    return %c0_i32, %arg1 : i32, i32
  }
  func.func @transform_2(%arg0: i32, %arg1: i32) -> (i32, i32) {
    %c0_i32 = arith.constant 0 : i32
    %c0_i32_0 = arith.constant 0 : i32
    return %c0_i32, %arg1 : i32, i32
  }
  func.func @transform_3(%arg0: i32, %arg1: i32) -> (i32, i32) {
    %c0_i32 = arith.constant 0 : i32
    return %arg0, %arg1 : i32, i32
  }
}

</mosaic_0001>

<llo_original>
// kernel: mma_forward.6
$region0: #{mma_forward.6}
  #allocation0 [shape = 'u32[]', space=smem, size = 0x4, offset = 0x4, fixed_abs, tag = 'smem constant byte address 0x4 - core index']
  #allocation1 [shape = 'u32[144,128]{1,0:T(1,128)}', space=vmem, size = 0x12000, scoped, tag = 'internal scratch']
  %s0 = inlined_call_operand.vmem [shape: f32[40,128], index: 0, kind: input, shape index: {}]
  %s1 = inlined_call_operand.vmem [shape: bf16[128,128], index: 1, kind: input, shape index: {}]
  %s2 = inlined_call_operand.vmem [shape: f32[1,128], index: 2, kind: input, shape index: {}]
  %s3 = inlined_call_operand.vmem [shape: f32[40,128], index: 3, kind: output, shape index: {}]
  %s4 = sld [smem:[#allocation0]]
  $region22: #{mma_forward.6} parent=0
    _
  %s6 = ssub.s32 1, %s4
  %s7 = scalar_select 0, %s6, %s4
  // Predicated region
  $region2: #{mma_forward.6} parent=0 // pred_check
    _
  $region3: #{mma_forward.6} parent=0 // pred_check_branch
    %9 = sbr.rel (0) target = $region5
  $region4: #{mma_forward.6} parent=0 // pred_region
    _
  $region5: #{mma_forward.6} parent=0 // pred_fallthru
    _
  // Predicated region
  $region6: #{mma_forward.6} parent=0 // pred_check
    _
  $region7: #{mma_forward.6} parent=0 // pred_check_branch
    %11 = sbr.rel (0) target = $region9
  $region8: #{mma_forward.6} parent=0 // pred_region
    _
  $region9: #{mma_forward.6} parent=0 // pred_fallthru
    _
  // Predicated region
  $region10: #{mma_forward.6} parent=0 // pred_check
    _
  $region11: #{mma_forward.6} parent=0 // pred_check_branch
    %13 = sbr.rel (0) target = $region13
  $region12: #{mma_forward.6} parent=0 // pred_region
    _
  $region13: #{mma_forward.6} parent=0 // pred_fallthru
    _
  %v15 = vld [vmem:[%s0] sm:$0xff]
  %v16 = vld [vmem:[%s0 + $0x8] sm:$0xff]
  %v17 = vld [vmem:[%s0 + $0x10] sm:$0xff]
  %v18 = vld [vmem:[%s0 + $0x18] sm:$0xff]
  %v19 = vld [vmem:[%s0 + $0x20] sm:$0xff]
  %v20 = vld [vmem:[%s1] sm:$0xf]
  %v21 = vld [vmem:[%s1 + $0x4] sm:$0xf]
  %v22 = vld [vmem:[%s1 + $0x8] sm:$0xf]
  %v23 = vld [vmem:[%s1 + $0xc] sm:$0xf]
  %v24 = vld [vmem:[%s1 + $0x10] sm:$0xf]
  %v25 = vld [vmem:[%s1 + $0x14] sm:$0xf]
  %v26 = vld [vmem:[%s1 + $0x18] sm:$0xf]
  %v27 = vld [vmem:[%s1 + $0x1c] sm:$0xf]
  %v28 = vld [vmem:[%s1 + $0x20] sm:$0xf]
  %v29 = vld [vmem:[%s1 + $0x24] sm:$0xf]
  %v30 = vld [vmem:[%s1 + $0x28] sm:$0xf]
  %v31 = vld [vmem:[%s1 + $0x2c] sm:$0xf]
  %v32 = vld [vmem:[%s1 + $0x30] sm:$0xf]
  %v33 = vld [vmem:[%s1 + $0x34] sm:$0xf]
  %v34 = vld [vmem:[%s1 + $0x38] sm:$0xf]
  %v35 = vld [vmem:[%s1 + $0x3c] sm:$0xf]
  %v36 = vld [vmem:[%s2] sm:$0x1]
  %v37 = vpack.c.bf16 %v16, %v15
  %v38 = vpack.c.bf16 %v18, %v17
  %v39 = vpack.c.bf16 %v19, %v19
  %v41 = vlaneseq
  %v42 = vshrl.u32 %v41, 7
  %v43 = vsub.s32 0, %v42
  %v44 = vrot.slane %v36, %v43
  %v62 = vunpack.c.l.b16 %v20
  %v63 = vunpack.c.l.b16 %v21
  %v64 = vunpack.c.l.b16 %v22
  %v65 = vunpack.c.l.b16 %v23
  %v66 = vunpack.c.l.b16 %v24
  %v67 = vunpack.c.l.b16 %v25
  %v68 = vunpack.c.l.b16 %v26
  %v69 = vunpack.c.l.b16 %v27
  %v70 = vunpack.c.l.b16 %v28
  %v71 = vunpack.c.l.b16 %v29
  %v72 = vunpack.c.l.b16 %v30
  %v73 = vunpack.c.l.b16 %v31
  %v74 = vunpack.c.l.b16 %v32
  %v75 = vunpack.c.l.b16 %v33
  %v76 = vunpack.c.l.b16 %v34
  %v77 = vunpack.c.l.b16 %v35
  %v78 = vpack.c.b16 %v63, %v62
  %v79 = vpack.c.b16 %v65, %v64
  %v80 = vpack.c.b16 %v67, %v66
  %v81 = vpack.c.b16 %v69, %v68
  %v82 = vpack.c.b16 %v71, %v70
  %v83 = vpack.c.b16 %v73, %v72
  %v84 = vpack.c.b16 %v75, %v74
  %v85 = vpack.c.b16 %v77, %v76
  %94 = vmatprep.subr.bf16.mxu0 0
  %95 = vmatpush1.bf16.msra.mxu0 %v78
  %96 = vmatprep.subr.bf16.mxu0 0
  %97 = vmatpush1.bf16.msra.mxu0 %v79
  %98 = vmatprep.subr.bf16.mxu0 0
  %99 = vmatpush1.bf16.msra.mxu0 %v80
  %100 = vmatprep.subr.bf16.mxu0 0
  %101 = vmatpush1.bf16.msra.mxu0 %v81
  %102 = vmatprep.subr.bf16.mxu0 0
  %103 = vmatpush1.bf16.msra.mxu0 %v82
  %104 = vmatprep.subr.bf16.mxu0 0
  %105 = vmatpush1.bf16.msra.mxu0 %v83
  %106 = vmatprep.subr.bf16.mxu0 0
  %107 = vmatpush1.bf16.msra.mxu0 %v84
  %108 = vmatprep.subr.bf16.mxu0 0
  %109 = vmatpush1.bf16.msra.mxu0 %v85
  %110 = vmatprep.subr.bf16.mxu0 0
  %111 = vmatpush1.bf16.msra.mxu0 0
  %112 = vmatprep.subr.bf16.mxu0 0
  %113 = vmatpush1.bf16.msra.mxu0 0
  %114 = vmatprep.subr.bf16.mxu0 0
  %115 = vmatpush1.bf16.msra.mxu0 0
  %116 = vmatprep.subr.bf16.mxu0 0
  %117 = vmatpush1.bf16.msra.mxu0 0
  %118 = vmatprep.subr.bf16.mxu0 0
  %119 = vmatpush1.bf16.msra.mxu0 0
  %120 = vmatprep.subr.bf16.mxu0 0
  %121 = vmatpush1.bf16.msra.mxu0 0
  %122 = vmatprep.subr.bf16.mxu0 0
  %123 = vmatpush1.bf16.msra.mxu0 0
  %124 = vmatprep.subr.bf16.mxu0 0
  %125 = vmatpush1.bf16.msra.mxu0 0
  %126 = vmatprep.mubr.bf16.mxu0 0
  %127 = vmatmul.mubr.bf16.gmra.mrb[0].mxu0 %v37
  %v128 = vpop.f32.mrb[0].mxu0
  %v129 = vadd.f32 %v44, %v128
  %v130 = vpop.f32.mrb[0].mxu0
  %v131 = vpop.f32.mrb[0].mxu0
  %v132 = vadd.f32 %v44, %v131
  %v133 = vpop.f32.mrb[0].mxu0
  %134 = vmatprep.mubr.bf16.mxu0 0
  %135 = vmatmul.mubr.bf16.gmra.mrb[0].mxu0 %v38
  %v136 = vpop.f32.mrb[0].mxu0
  %v137 = vadd.f32 %v44, %v136
  %v138 = vpop.f32.mrb[0].mxu0
  %v139 = vpop.f32.mrb[0].mxu0
  %v140 = vadd.f32 %v44, %v139
  %v141 = vpop.f32.mrb[0].mxu0
  %142 = vmatprep.mubr.bf16.mxu0 0
  %143 = vmatmul.mubr.bf16.gmra.mrb[0].mxu0 %v39
  %v144 = vpop.f32.mrb[0].mxu0
  %v145 = vadd.f32 %v44, %v144
  %v146 = vpop.f32.mrb[0].mxu0
  %v147 = vpop.f32.mrb[0].mxu0
  %v148 = vpop.f32.mrb[0].mxu0
  %149 = vdwg.mxu0
  %150 = vst [vmem:[%s3] sm:$0xff] %v129
  %151 = vst [vmem:[%s3 + $0x8] sm:$0xff] %v132
  %152 = vst [vmem:[%s3 + $0x10] sm:$0xff] %v137
  %153 = vst [vmem:[%s3 + $0x18] sm:$0xff] %v140
  %154 = vst [vmem:[%s3 + $0x20] sm:$0xff] %v145
  // Predicated region
  $region14: #{mma_forward.6} parent=0 // pred_check
    _
  $region15: #{mma_forward.6} parent=0 // pred_check_branch
    %156 = sbr.rel (0) target = $region17
  $region16: #{mma_forward.6} parent=0 // pred_region
    _
  $region17: #{mma_forward.6} parent=0 // pred_fallthru
    _
  // Predicated region
  $region18: #{mma_forward.6} parent=0 // pred_check
    _
  $region19: #{mma_forward.6} parent=0 // pred_check_branch
    %158 = sbr.rel (0) target = $region21
  $region20: #{mma_forward.6} parent=0 // pred_region
    _
  $region21: #{mma_forward.6} parent=0 // pred_fallthru
    _

// kernel: mma_forward.7
$region0: #{mma_forward.7}
  #allocation0 [shape = 'u32[]', space=smem, size = 0x4, offset = 0x4, fixed_abs, tag = 'smem constant byte address 0x4 - core index']
  #allocation1 [shape = 'u32[144,128]{1,0:T(1,128)}', space=vmem, size = 0x12000, scoped, tag = 'internal scratch']
  %s0 = inlined_call_operand.vmem [shape: f32[8,128], index: 0, kind: input, shape index: {}]
  %s1 = inlined_call_operand.vmem [shape: bf16[128,128], index: 1, kind: input, shape index: {}]
  %s2 = inlined_call_operand.vmem [shape: f32[1,128], index: 2, kind: input, shape index: {}]
  %s3 = inlined_call_operand.vmem [shape: f32[8,128], index: 3, kind: output, shape index: {}]
  %s4 = sld [smem:[#allocation0]]
  $region22: #{mma_forward.7} parent=0
    _
  %s6 = ssub.s32 1, %s4
  %s7 = scalar_select 0, %s6, %s4
  // Predicated region
  $region2: #{mma_forward.7} parent=0 // pred_check
    _
  $region3: #{mma_forward.7} parent=0 // pred_check_branch
    %9 = sbr.rel (0) target = $region5
  $region4: #{mma_forward.7} parent=0 // pred_region
    _
  $region5: #{mma_forward.7} parent=0 // pred_fallthru
    _
  // Predicated region
  $region6: #{mma_forward.7} parent=0 // pred_check
    _
  $region7: #{mma_forward.7} parent=0 // pred_check_branch
    %11 = sbr.rel (0) target = $region9
  $region8: #{mma_forward.7} parent=0 // pred_region
    _
  $region9: #{mma_forward.7} parent=0 // pred_fallthru
    _
  // Predicated region
  $region10: #{mma_forward.7} parent=0 // pred_check
    _
  $region11: #{mma_forward.7} parent=0 // pred_check_branch
    %13 = sbr.rel (0) target = $region13
  $region12: #{mma_forward.7} parent=0 // pred_region
    _
  $region13: #{mma_forward.7} parent=0 // pred_fallthru
    _
  %v15 = vld [vmem:[%s0] sm:$0xff]
  %v16 = vld [vmem:[%s1] sm:$0xf]
  %v17 = vld [vmem:[%s1 + $0x4] sm:$0xf]
  %v18 = vld [vmem:[%s1 + $0x8] sm:$0xf]
  %v19 = vld [vmem:[%s1 + $0xc] sm:$0xf]
  %v20 = vld [vmem:[%s1 + $0x10] sm:$0xf]
  %v21 = vld [vmem:[%s1 + $0x14] sm:$0xf]
  %v22 = vld [vmem:[%s1 + $0x18] sm:$0xf]
  %v23 = vld [vmem:[%s1 + $0x1c] sm:$0xf]
  %v24 = vld [vmem:[%s1 + $0x20] sm:$0xf]
  %v25 = vld [vmem:[%s1 + $0x24] sm:$0xf]
  %v26 = vld [vmem:[%s1 + $0x28] sm:$0xf]
  %v27 = vld [vmem:[%s1 + $0x2c] sm:$0xf]
  %v28 = vld [vmem:[%s1 + $0x30] sm:$0xf]
  %v29 = vld [vmem:[%s1 + $0x34] sm:$0xf]
  %v30 = vld [vmem:[%s1 + $0x38] sm:$0xf]
  %v31 = vld [vmem:[%s1 + $0x3c] sm:$0xf]
  %v32 = vld [vmem:[%s2] sm:$0x1]
  %v33 = vpack.c.bf16 %v15, %v15
  %v35 = vlaneseq
  %v36 = vshrl.u32 %v35, 7
  %v37 = vsub.s32 0, %v36
  %v38 = vrot.slane %v32, %v37
  %v56 = vunpack.c.l.b16 %v16
  %v57 = vunpack.c.l.b16 %v17
  %v58 = vunpack.c.l.b16 %v18
  %v59 = vunpack.c.l.b16 %v19
  %v60 = vunpack.c.l.b16 %v20
  %v61 = vunpack.c.l.b16 %v21
  %v62 = vunpack.c.l.b16 %v22
  %v63 = vunpack.c.l.b16 %v23
  %v64 = vunpack.c.l.b16 %v24
  %v65 = vunpack.c.l.b16 %v25
  %v66 = vunpack.c.l.b16 %v26
  %v67 = vunpack.c.l.b16 %v27
  %v68 = vunpack.c.l.b16 %v28
  %v69 = vunpack.c.l.b16 %v29
  %v70 = vunpack.c.l.b16 %v30
  %v71 = vunpack.c.l.b16 %v31
  %v72 = vpack.c.b16 %v57, %v56
  %v73 = vpack.c.b16 %v59, %v58
  %v74 = vpack.c.b16 %v61, %v60
  %v75 = vpack.c.b16 %v63, %v62
  %v76 = vpack.c.b16 %v65, %v64
  %v77 = vpack.c.b16 %v67, %v66
  %v78 = vpack.c.b16 %v69, %v68
  %v79 = vpack.c.b16 %v71, %v70
  %88 = vmatprep.subr.bf16.mxu0 0
  %89 = vmatpush1.bf16.msra.mxu0 %v72
  %90 = vmatprep.subr.bf16.mxu0 0
  %91 = vmatpush1.bf16.msra.mxu0 %v73
  %92 = vmatprep.subr.bf16.mxu0 0
  %93 = vmatpush1.bf16.msra.mxu0 %v74
  %94 = vmatprep.subr.bf16.mxu0 0
  %95 = vmatpush1.bf16.msra.mxu0 %v75
  %96 = vmatprep.subr.bf16.mxu0 0
  %97 = vmatpush1.bf16.msra.mxu0 %v76
  %98 = vmatprep.subr.bf16.mxu0 0
  %99 = vmatpush1.bf16.msra.mxu0 %v77
  %100 = vmatprep.subr.bf16.mxu0 0
  %101 = vmatpush1.bf16.msra.mxu0 %v78
  %102 = vmatprep.subr.bf16.mxu0 0
  %103 = vmatpush1.bf16.msra.mxu0 %v79
  %104 = vmatprep.subr.bf16.mxu0 0
  %105 = vmatpush1.bf16.msra.mxu0 0
  %106 = vmatprep.subr.bf16.mxu0 0
  %107 = vmatpush1.bf16.msra.mxu0 0
  %108 = vmatprep.subr.bf16.mxu0 0
  %109 = vmatpush1.bf16.msra.mxu0 0
  %110 = vmatprep.subr.bf16.mxu0 0
  %111 = vmatpush1.bf16.msra.mxu0 0
  %112 = vmatprep.subr.bf16.mxu0 0
  %113 = vmatpush1.bf16.msra.mxu0 0
  %114 = vmatprep.subr.bf16.mxu0 0
  %115 = vmatpush1.bf16.msra.mxu0 0
  %116 = vmatprep.subr.bf16.mxu0 0
  %117 = vmatpush1.bf16.msra.mxu0 0
  %118 = vmatprep.subr.bf16.mxu0 0
  %119 = vmatpush1.bf16.msra.mxu0 0
  %120 = vmatprep.mubr.bf16.mxu0 0
  %121 = vmatmul.mubr.bf16.gmra.mrb[0].mxu0 %v33
  %v122 = vpop.f32.mrb[0].mxu0
  %v123 = vadd.f32 %v38, %v122
  %v124 = vpop.f32.mrb[0].mxu0
  %v125 = vpop.f32.mrb[0].mxu0
  %v126 = vpop.f32.mrb[0].mxu0
  %127 = vdwg.mxu0
  %128 = vst [vmem:[%s3] sm:$0xff] %v123
  // Predicated region
  $region14: #{mma_forward.7} parent=0 // pred_check
    _
  $region15: #{mma_forward.7} parent=0 // pred_check_branch
    %130 = sbr.rel (0) target = $region17
  $region16: #{mma_forward.7} parent=0 // pred_region
    _
  $region17: #{mma_forward.7} parent=0 // pred_fallthru
    _
  // Predicated region
  $region18: #{mma_forward.7} parent=0 // pred_check
    _
  $region19: #{mma_forward.7} parent=0 // pred_check_branch
    %132 = sbr.rel (0) target = $region21
  $region20: #{mma_forward.7} parent=0 // pred_region
    _
  $region21: #{mma_forward.7} parent=0 // pred_fallthru
    _

// kernel: mma_forward.8
$region0: #{mma_forward.8}
  #allocation0 [shape = 'u32[]', space=smem, size = 0x4, offset = 0x4, fixed_abs, tag = 'smem constant byte address 0x4 - core index']
  #allocation1 [shape = 'u32[144,128]{1,0:T(1,128)}', space=vmem, size = 0x12000, scoped, tag = 'internal scratch']
  %s0 = inlined_call_operand.vmem [shape: f32[2,8,128], index: 0, kind: input, shape index: {}]
  %s1 = inlined_call_operand.vmem [shape: f32[2,17,128], index: 1, kind: input, shape index: {}]
  %s2 = inlined_call_operand.hbm [shape: f32[1,128], index: 2, kind: input, shape index: {}]
  %s3 = inlined_call_operand.hbm [shape: f32[1,128], index: 3, kind: input, shape index: {}]
  %s4 = inlined_call_operand.hbm [shape: f32[1,128], index: 4, kind: input, shape index: {}]
  %s5 = inlined_call_operand.hbm [shape: f32[1,128], index: 5, kind: input, shape index: {}]
  %s6 = inlined_call_operand.hbm [shape: bf16[128,128], index: 6, kind: input, shape index: {}]
  %s7 = inlined_call_operand.hbm [shape: f32[1,128], index: 7, kind: input, shape index: {}]
  %s8 = inlined_call_operand.hbm [shape: bf16[128,256], index: 8, kind: input, shape index: {}]
  %s9 = inlined_call_operand.hbm [shape: f32[1,256], index: 9, kind: input, shape index: {}]
  %s10 = inlined_call_operand.hbm [shape: bf16[128,128], index: 10, kind: input, shape index: {}]
  %s11 = inlined_call_operand.hbm [shape: f32[1,128], index: 11, kind: input, shape index: {}]
  %s12 = inlined_call_operand.vmem [shape: bf16[2,8,128], index: 12, kind: output, shape index: {}]
  %s13 = sld [smem:[#allocation0]]
  $region121: #{mma_forward.8} parent=0
    _
  %s15 = ssub.s32 1, %s13
  %s16 = scalar_select 0, %s15, %s13
  $region1: #{mma_forward.8} parent=0
    #allocation2 [shape = 'u8[512]{0}', space=vmem, size = 0x400, scoped, tag = 'input window, operand 2, single buffered']
    #allocation3 [shape = 's32[2]{0}', space=sflag, size = 0x8, scoped, tag = 'scoped memory for mma_forward.8']
    #allocation4 [shape = 'u8[512]{0}', space=vmem, size = 0x400, scoped, tag = 'input window, operand 3, single buffered']
    #allocation5 [shape = 's32[1]{0}', space=sflag, size = 0x4, scoped, tag = 'scoped memory for mma_forward.8']
    #allocation6 [shape = 'u8[512]{0}', space=vmem, size = 0x400, scoped, tag = 'input window, operand 4, single buffered']
    #allocation7 [shape = 'u8[512]{0}', space=vmem, size = 0x400, scoped, tag = 'input window, operand 5, single buffered']
    #allocation8 [shape = 's32[1]{0}', space=sflag, size = 0x4, scoped, tag = 'scoped memory for mma_forward.8']
    #allocation9 [shape = 'u8[32768]{0}', space=vmem, size = 0x8000, scoped, tag = 'input window, operand 6, single buffered']
    #allocation10 [shape = 'u8[512]{0}', space=vmem, size = 0x400, scoped, tag = 'input window, operand 7, single buffered']
    #allocation11 [shape = 's32[1]{0}', space=sflag, size = 0x4, scoped, tag = 'scoped memory for mma_forward.8']
    #allocation12 [shape = 'u8[65536]{0}', space=vmem, size = 0x10000, scoped, tag = 'input window, operand 8, single buffered']
    #allocation13 [shape = 'u8[1024]{0}', space=vmem, size = 0x400, scoped, tag = 'input window, operand 9, single buffered']
    #allocation14 [shape = 's32[1]{0}', space=sflag, size = 0x4, scoped, tag = 'scoped memory for mma_forward.8']
    #allocation15 [shape = 'u8[32768]{0}', space=vmem, size = 0x8000, scoped, tag = 'input window, operand 10, single buffered']
    #allocation16 [shape = 'u8[512]{0}', space=vmem, size = 0x400, scoped, tag = 'input window, operand 11, single buffered']
    #allocation17 [shape = 's32[1]{0}', space=sflag, size = 0x4, scoped, tag = 'scoped memory for mma_forward.8']
    %17 = vsyncpa [#allocation3], 0
    %18 = vsyncpa [#allocation5], 0
    %19 = vsyncpa [#allocation8], 0
    %20 = vsyncpa [#allocation11], 0
    %21 = vsyncpa [#allocation14], 0
    %22 = vsyncpa [#allocation17], 0
    loop: start=0, step=1, limit=4
    $region2: #{mma_forward.8} parent=1 // loop_pre_header
      _
    $region3: #{mma_forward.8} parent=1 // loop_header
      %s24 = sphi 0, %s28
      %p25 = scmp.ge.s32.totalorder %s24, 4
      %s34 = sphi 0, %s36
      %s37 = sphi 0, %s34
      %s38 = sphi 0, %s37
      %s54 = sphi 0, %s38
      %s60 = sphi 0, %s62
      %s63 = sphi 0, %s60
      %s64 = sphi 0, %s63
      %s80 = sphi 0, %s64
      %s84 = sphi 0, %s84
      %s86 = sphi 0, %s84
      %s87 = sphi 0, %s86
      %s101 = sphi 0, %s87
      %s105 = sphi 0, %s105
      %s107 = sphi 0, %s105
      %s108 = sphi 0, %s107
      %s122 = sphi 0, %s108
      %s126 = sphi 0, %s126
      %s128 = sphi 0, %s126
      %s129 = sphi 0, %s128
      %s143 = sphi 0, %s129
      %s147 = sphi 0, %s147
      %s149 = sphi 0, %s147
      %s150 = sphi 0, %s149
      %s164 = sphi 0, %s150
      %s168 = sphi 0, %s168
      %s170 = sphi 0, %s168
      %s171 = sphi 0, %s170
      %s185 = sphi 0, %s171
      %s189 = sphi 0, %s189
      %s191 = sphi 0, %s189
      %s192 = sphi 0, %s191
      %s206 = sphi 0, %s192
      %s210 = sphi 0, %s210
      %s212 = sphi 0, %s210
      %s213 = sphi 0, %s212
      %s227 = sphi 0, %s213
      %s231 = sphi 0, %s231
      %s233 = sphi 0, %s231
      %s234 = sphi 0, %s233
      %s248 = sphi 0, %s234
      %s252 = sphi 0, %s252
      %s254 = sphi 0, %s252
      %s255 = sphi 0, %s254
      %s269 = sphi 0, %s255
      %s273 = sphi 0, %s273
      %s275 = sphi 0, %s273
      %s276 = sphi 0, %s275
      %s290 = sphi 0, %s276
      %s296 = sphi 0, %s298
      %s299 = sphi 0, %s296
      %s300 = sphi 0, %s299
      %s316 = sphi 0, %s300
    $region4: #{mma_forward.8} parent=1 // loop_header_branch
      %27 = sbr.rel (%p25) target = $region8
    $region5: #{mma_forward.8} parent=1 // loop_body
      %s29 = ssub.s32 %s24, 1
      %s30 = ssub.s32 %s24, 2
      %s31 = sadd.s32 %s24, 1
      %s32 = ssub.s32 %s24, %s31
      %p33 = scmp.eq.s32.totalorder %s32, 0
      %s35 = sadd.s32 %s34, 1
      %s36 = scalar_select %p33, %s34, %s35
      %p39 = pneg %p33
      %p40 = scmp.eq.s32.totalorder %s24, 1
      %p41 = por %p39, %p40
      %p42 = scmp.ne.s32.totalorder %s34, %s37
      %p43 = scmp.eq.s32.totalorder %s24, 0
      %p44 = por %p42, %p43
      %p45 = scmp.ne.s32.totalorder %s34, %s37
      %p46 = scmp.eq.s32.totalorder %s29, 1
      %p47 = por %p45, %p46
      %p48 = scmp.ne.s32.totalorder %s37, %s38
      %p49 = scmp.eq.s32.totalorder %s29, 0
      %p50 = por %p48, %p49
      %p51 = scmp.ne.s32.totalorder %s37, %s38
      %p52 = scmp.eq.s32.totalorder %s30, 1
      %p53 = por %p51, %p52
      %p55 = scmp.ne.s32.totalorder %s38, %s54
      %p56 = scmp.eq.s32.totalorder %s30, 0
      %p57 = por %p55, %p56
      %s58 = ssub.s32 %s24, %s31
      %p59 = scmp.eq.s32.totalorder %s58, 0
      %s61 = sadd.s32 %s60, 1
      %s62 = scalar_select %p59, %s60, %s61
      %p65 = pneg %p59
      %p66 = scmp.eq.s32.totalorder %s24, 1
      %p67 = por %p65, %p66
      %p68 = scmp.ne.s32.totalorder %s60, %s63
      %p69 = scmp.eq.s32.totalorder %s24, 0
      %p70 = por %p68, %p69
      %p71 = scmp.ne.s32.totalorder %s60, %s63
      %p72 = scmp.eq.s32.totalorder %s29, 1
      %p73 = por %p71, %p72
      %p74 = scmp.ne.s32.totalorder %s63, %s64
      %p75 = scmp.eq.s32.totalorder %s29, 0
      %p76 = por %p74, %p75
      %p77 = scmp.ne.s32.totalorder %s63, %s64
      %p78 = scmp.eq.s32.totalorder %s30, 1
      %p79 = por %p77, %p78
      %p81 = scmp.ne.s32.totalorder %s64, %s80
      %p82 = scmp.eq.s32.totalorder %s30, 0
      %p83 = por %p81, %p82
      %s85 = sadd.s32 %s84, 1
      %p88 = scmp.eq.s32.totalorder %s24, 1
      %p89 = scmp.ne.s32.totalorder %s84, %s86
      %p90 = scmp.eq.s32.totalorder %s24, 0
      %p91 = por %p89, %p90
      %p92 = scmp.ne.s32.totalorder %s84, %s86
      %p93 = scmp.eq.s32.totalorder %s29, 1
      %p94 = por %p92, %p93
      %p95 = scmp.ne.s32.totalorder %s86, %s87
      %p96 = scmp.eq.s32.totalorder %s29, 0
      %p97 = por %p95, %p96
      %p98 = scmp.ne.s32.totalorder %s86, %s87
      %p99 = scmp.eq.s32.totalorder %s30, 1
      %p100 = por %p98, %p99
      %p102 = scmp.ne.s32.totalorder %s87, %s101
      %p103 = scmp.eq.s32.totalorder %s30, 0
      %p104 = por %p102, %p103
      %s106 = sadd.s32 %s105, 1
      %p109 = scmp.eq.s32.totalorder %s24, 1
      %p110 = scmp.ne.s32.totalorder %s105, %s107
      %p111 = scmp.eq.s32.totalorder %s24, 0
      %p112 = por %p110, %p111
      %p113 = scmp.ne.s32.totalorder %s105, %s107
      %p114 = scmp.eq.s32.totalorder %s29, 1
      %p115 = por %p113, %p114
      %p116 = scmp.ne.s32.totalorder %s107, %s108
      %p117 = scmp.eq.s32.totalorder %s29, 0
      %p118 = por %p116, %p117
      %p119 = scmp.ne.s32.totalorder %s107, %s108
      %p120 = scmp.eq.s32.totalorder %s30, 1
      %p121 = por %p119, %p120
      %p123 = scmp.ne.s32.totalorder %s108, %s122
      %p124 = scmp.eq.s32.totalorder %s30, 0
      %p125 = por %p123, %p124
      %s127 = sadd.s32 %s126, 1
      %p130 = scmp.eq.s32.totalorder %s24, 1
      %p131 = scmp.ne.s32.totalorder %s126, %s128
      %p132 = scmp.eq.s32.totalorder %s24, 0
      %p133 = por %p131, %p132
      %p134 = scmp.ne.s32.totalorder %s126, %s128
      %p135 = scmp.eq.s32.totalorder %s29, 1
      %p136 = por %p134, %p135
      %p137 = scmp.ne.s32.totalorder %s128, %s129
      %p138 = scmp.eq.s32.totalorder %s29, 0
      %p139 = por %p137, %p138
      %p140 = scmp.ne.s32.totalorder %s128, %s129
      %p141 = scmp.eq.s32.totalorder %s30, 1
      %p142 = por %p140, %p141
      %p144 = scmp.ne.s32.totalorder %s129, %s143
      %p145 = scmp.eq.s32.totalorder %s30, 0
      %p146 = por %p144, %p145
      %s148 = sadd.s32 %s147, 1
      %p151 = scmp.eq.s32.totalorder %s24, 1
      %p152 = scmp.ne.s32.totalorder %s147, %s149
      %p153 = scmp.eq.s32.totalorder %s24, 0
      %p154 = por %p152, %p153
      %p155 = scmp.ne.s32.totalorder %s147, %s149
      %p156 = scmp.eq.s32.totalorder %s29, 1
      %p157 = por %p155, %p156
      %p158 = scmp.ne.s32.totalorder %s149, %s150
      %p159 = scmp.eq.s32.totalorder %s29, 0
      %p160 = por %p158, %p159
      %p161 = scmp.ne.s32.totalorder %s149, %s150
      %p162 = scmp.eq.s32.totalorder %s30, 1
      %p163 = por %p161, %p162
      %p165 = scmp.ne.s32.totalorder %s150, %s164
      %p166 = scmp.eq.s32.totalorder %s30, 0
      %p167 = por %p165, %p166
      %s169 = sadd.s32 %s168, 1
      %p172 = scmp.eq.s32.totalorder %s24, 1
      %p173 = scmp.ne.s32.totalorder %s168, %s170
      %p174 = scmp.eq.s32.totalorder %s24, 0
      %p175 = por %p173, %p174
      %p176 = scmp.ne.s32.totalorder %s168, %s170
      %p177 = scmp.eq.s32.totalorder %s29, 1
      %p178 = por %p176, %p177
      %p179 = scmp.ne.s32.totalorder %s170, %s171
      %p180 = scmp.eq.s32.totalorder %s29, 0
      %p181 = por %p179, %p180
      %p182 = scmp.ne.s32.totalorder %s170, %s171
      %p183 = scmp.eq.s32.totalorder %s30, 1
      %p184 = por %p182, %p183
      %p186 = scmp.ne.s32.totalorder %s171, %s185
      %p187 = scmp.eq.s32.totalorder %s30, 0
      %p188 = por %p186, %p187
      %s190 = sadd.s32 %s189, 1
      %p193 = scmp.eq.s32.totalorder %s24, 1
      %p194 = scmp.ne.s32.totalorder %s189, %s191
      %p195 = scmp.eq.s32.totalorder %s24, 0
      %p196 = por %p194, %p195
      %p197 = scmp.ne.s32.totalorder %s189, %s191
      %p198 = scmp.eq.s32.totalorder %s29, 1
      %p199 = por %p197, %p198
      %p200 = scmp.ne.s32.totalorder %s191, %s192
      %p201 = scmp.eq.s32.totalorder %s29, 0
      %p202 = por %p200, %p201
      %p203 = scmp.ne.s32.totalorder %s191, %s192
      %p204 = scmp.eq.s32.totalorder %s30, 1
      %p205 = por %p203, %p204
      %p207 = scmp.ne.s32.totalorder %s192, %s206
      %p208 = scmp.eq.s32.totalorder %s30, 0
      %p209 = por %p207, %p208
      %s211 = sadd.s32 %s210, 1
      %p214 = scmp.eq.s32.totalorder %s24, 1
      %p215 = scmp.ne.s32.totalorder %s210, %s212
      %p216 = scmp.eq.s32.totalorder %s24, 0
      %p217 = por %p215, %p216
      %p218 = scmp.ne.s32.totalorder %s210, %s212
      %p219 = scmp.eq.s32.totalorder %s29, 1
      %p220 = por %p218, %p219
      %p221 = scmp.ne.s32.totalorder %s212, %s213
      %p222 = scmp.eq.s32.totalorder %s29, 0
      %p223 = por %p221, %p222
      %p224 = scmp.ne.s32.totalorder %s212, %s213
      %p225 = scmp.eq.s32.totalorder %s30, 1
      %p226 = por %p224, %p225
      %p228 = scmp.ne.s32.totalorder %s213, %s227
      %p229 = scmp.eq.s32.totalorder %s30, 0
      %p230 = por %p228, %p229
      %s232 = sadd.s32 %s231, 1
      %p235 = scmp.eq.s32.totalorder %s24, 1
      %p236 = scmp.ne.s32.totalorder %s231, %s233
      %p237 = scmp.eq.s32.totalorder %s24, 0
      %p238 = por %p236, %p237
      %p239 = scmp.ne.s32.totalorder %s231, %s233
      %p240 = scmp.eq.s32.totalorder %s29, 1
      %p241 = por %p239, %p240
      %p242 = scmp.ne.s32.totalorder %s233, %s234
      %p243 = scmp.eq.s32.totalorder %s29, 0
      %p244 = por %p242, %p243
      %p245 = scmp.ne.s32.totalorder %s233, %s234
      %p246 = scmp.eq.s32.totalorder %s30, 1
      %p247 = por %p245, %p246
      %p249 = scmp.ne.s32.totalorder %s234, %s248
      %p250 = scmp.eq.s32.totalorder %s30, 0
      %p251 = por %p249, %p250
      %s253 = sadd.s32 %s252, 1
      %p256 = scmp.eq.s32.totalorder %s24, 1
      %p257 = scmp.ne.s32.totalorder %s252, %s254
      %p258 = scmp.eq.s32.totalorder %s24, 0
      %p259 = por %p257, %p258
      %p260 = scmp.ne.s32.totalorder %s252, %s254
      %p261 = scmp.eq.s32.totalorder %s29, 1
      %p262 = por %p260, %p261
      %p263 = scmp.ne.s32.totalorder %s254, %s255
      %p264 = scmp.eq.s32.totalorder %s29, 0
      %p265 = por %p263, %p264
      %p266 = scmp.ne.s32.totalorder %s254, %s255
      %p267 = scmp.eq.s32.totalorder %s30, 1
      %p268 = por %p266, %p267
      %p270 = scmp.ne.s32.totalorder %s255, %s269
      %p271 = scmp.eq.s32.totalorder %s30, 0
      %p272 = por %p270, %p271
      %s274 = sadd.s32 %s273, 1
      %p277 = scmp.eq.s32.totalorder %s24, 1
      %p278 = scmp.ne.s32.totalorder %s273, %s275
      %p279 = scmp.eq.s32.totalorder %s24, 0
      %p280 = por %p278, %p279
      %p281 = scmp.ne.s32.totalorder %s273, %s275
      %p282 = scmp.eq.s32.totalorder %s29, 1
      %p283 = por %p281, %p282
      %p284 = scmp.ne.s32.totalorder %s275, %s276
      %p285 = scmp.eq.s32.totalorder %s29, 0
      %p286 = por %p284, %p285
      %p287 = scmp.ne.s32.totalorder %s275, %s276
      %p288 = scmp.eq.s32.totalorder %s30, 1
      %p289 = por %p287, %p288
      %p291 = scmp.ne.s32.totalorder %s276, %s290
      %p292 = scmp.eq.s32.totalorder %s30, 0
      %p293 = por %p291, %p292
      %s294 = ssub.s32 %s24, %s31
      %p295 = scmp.eq.s32.totalorder %s294, 0
      %s297 = sadd.s32 %s296, 1
      %s298 = scalar_select %p295, %s296, %s297
      %p301 = pneg %p295
      %p302 = scmp.eq.s32.totalorder %s24, 1
      %p303 = por %p301, %p302
      %p304 = scmp.ne.s32.totalorder %s296, %s299
      %p305 = scmp.eq.s32.totalorder %s24, 0
      %p306 = por %p304, %p305
      %p307 = scmp.ne.s32.totalorder %s296, %s299
      %p308 = scmp.eq.s32.totalorder %s29, 1
      %p309 = por %p307, %p308
      %p310 = scmp.ne.s32.totalorder %s299, %s300
      %p311 = scmp.eq.s32.totalorder %s29, 0
      %p312 = por %p310, %p311
      %p313 = scmp.ne.s32.totalorder %s299, %s300
      %p314 = scmp.eq.s32.totalorder %s30, 1
      %p315 = por %p313, %p314
      %p317 = scmp.ne.s32.totalorder %s300, %s316
      %p318 = scmp.eq.s32.totalorder %s30, 0
      %p319 = por %p317, %p318
      %p320 = scmp.le.s32.totalorder 1, %s24
      %p321 = scmp.lt.s32.totalorder %s24, 3
      %p322 = pnand %p320, %p321
      %p323 = pneg %p322
      // Predicated region
      $region9: #{mma_forward.8} parent=5 // pred_check
        _
      $region10: #{mma_forward.8} parent=5 // pred_check_branch
        %325 = sbr.rel (%p322) target = $region12
      $region11: #{mma_forward.8} parent=5 // pred_region
        %s326 = ssub.s32 %s24, 1
        // Predicated region
        $region13: #{mma_forward.8} parent=11 // pred_check
          %p327 = pneg %p97
        $region14: #{mma_forward.8} parent=11 // pred_check_branch
          %329 = sbr.rel (%p327) target = $region16
        $region15: #{mma_forward.8} parent=11 // pred_region
          %s331 = ssub.s32 16, 16
          %332 = vsyncadd [#allocation3], %s331
          %s334 = sshll.u32 [#allocation2], 4
          %s335 = int_to_ptr.vmem [resolvable:$true] %s334
          %337 = dma.hbm_to_vmem [thread:$0]  %s2, 16, %s335, [#allocation3]
        $region16: #{mma_forward.8} parent=11 // pred_fallthru
          _
        // Predicated region
        $region17: #{mma_forward.8} parent=11 // pred_check
          %p338 = pneg %p118
        $region18: #{mma_forward.8} parent=11 // pred_check_branch
          %340 = sbr.rel (%p338) target = $region20
        $region19: #{mma_forward.8} parent=11 // pred_region
          %s342 = ssub.s32 16, 16
          %343 = vsyncadd [#allocation5], %s342
          %s345 = sshll.u32 [#allocation4], 4
          %s346 = int_to_ptr.vmem [resolvable:$true] %s345
          %348 = dma.hbm_to_vmem [thread:$0]  %s3, 16, %s346, [#allocation5]
        $region20: #{mma_forward.8} parent=11 // pred_fallthru
          _
        // Predicated region
        $region21: #{mma_forward.8} parent=11 // pred_check
          %p349 = pneg %p139
        $region22: #{mma_forward.8} parent=11 // pred_check_branch
          %351 = sbr.rel (%p349) target = $region24
        $region23: #{mma_forward.8} parent=11 // pred_region
          %s353 = ssub.s32 16, 16
          %354 = vsyncadd [#allocation5], %s353
          %s356 = sshll.u32 [#allocation6], 4
          %s357 = int_to_ptr.vmem [resolvable:$true] %s356
          %359 = dma.hbm_to_vmem [thread:$0]  %s4, 16, %s357, [#allocation5]
        $region24: #{mma_forward.8} parent=11 // pred_fallthru
          _
        // Predicated region
        $region25: #{mma_forward.8} parent=11 // pred_check
          %p360 = pneg %p160
        $region26: #{mma_forward.8} parent=11 // pred_check_branch
          %362 = sbr.rel (%p360) target = $region28
        $region27: #{mma_forward.8} parent=11 // pred_region
          %s364 = ssub.s32 16, 16
          %365 = vsyncadd [#allocation8], %s364
          %s367 = sshll.u32 [#allocation7], 4
          %s368 = int_to_ptr.vmem [resolvable:$true] %s367
          %370 = dma.hbm_to_vmem [thread:$0]  %s5, 16, %s368, [#allocation8]
        $region28: #{mma_forward.8} parent=11 // pred_fallthru
          _
        // Predicated region
        $region29: #{mma_forward.8} parent=11 // pred_check
          %p371 = pneg %p181
        $region30: #{mma_forward.8} parent=11 // pred_check_branch
          %373 = sbr.rel (%p371) target = $region32
        $region31: #{mma_forward.8} parent=11 // pred_region
          %s375 = ssub.s32 1024, 1024
          %376 = vsyncadd [#allocation8], %s375
          %s377 = sshll.u32 [#allocation9], 4
          %s378 = int_to_ptr.vmem [resolvable:$true] %s377
          %383 = dma.hbm_to_vmem [thread:$0]  %s6, 1024, %s378, [#allocation8], 64, 64, 4
        $region32: #{mma_forward.8} parent=11 // pred_fallthru
          _
        // Predicated region
        $region33: #{mma_forward.8} parent=11 // pred_check
          %p384 = pneg %p202
        $region34: #{mma_forward.8} parent=11 // pred_check_branch
          %386 = sbr.rel (%p384) target = $region36
        $region35: #{mma_forward.8} parent=11 // pred_region
          %s388 = ssub.s32 16, 16
          %389 = vsyncadd [#allocation11], %s388
          %s391 = sshll.u32 [#allocation10], 4
          %s392 = int_to_ptr.vmem [resolvable:$true] %s391
          %394 = dma.hbm_to_vmem [thread:$0]  %s7, 16, %s392, [#allocation11]
        $region36: #{mma_forward.8} parent=11 // pred_fallthru
          _
        // Predicated region
        $region37: #{mma_forward.8} parent=11 // pred_check
          %p395 = pneg %p223
        $region38: #{mma_forward.8} parent=11 // pred_check_branch
          %397 = sbr.rel (%p395) target = $region40
        $region39: #{mma_forward.8} parent=11 // pred_region
          %s399 = ssub.s32 2048, 2048
          %400 = vsyncadd [#allocation11], %s399
          %s401 = sshll.u32 [#allocation12], 4
          %s402 = int_to_ptr.vmem [resolvable:$true] %s401
          %407 = dma.hbm_to_vmem [thread:$0]  %s8, 2048, %s402, [#allocation11], 128, 128, 8
        $region40: #{mma_forward.8} parent=11 // pred_fallthru
          _
        // Predicated region
        $region41: #{mma_forward.8} parent=11 // pred_check
          %p408 = pneg %p244
        $region42: #{mma_forward.8} parent=11 // pred_check_branch
          %410 = sbr.rel (%p408) target = $region44
        $region43: #{mma_forward.8} parent=11 // pred_region
          %s412 = ssub.s32 32, 32
          %413 = vsyncadd [#allocation14], %s412
          %s415 = sshll.u32 [#allocation13], 4
          %s416 = int_to_ptr.vmem [resolvable:$true] %s415
          %418 = dma.hbm_to_vmem [thread:$0]  %s9, 32, %s416, [#allocation14]
        $region44: #{mma_forward.8} parent=11 // pred_fallthru
          _
        // Predicated region
        $region45: #{mma_forward.8} parent=11 // pred_check
          %p419 = pneg %p265
        $region46: #{mma_forward.8} parent=11 // pred_check_branch
          %421 = sbr.rel (%p419) target = $region48
        $region47: #{mma_forward.8} parent=11 // pred_region
          %s423 = ssub.s32 1024, 1024
          %424 = vsyncadd [#allocation14], %s423
          %s425 = sshll.u32 [#allocation15], 4
          %s426 = int_to_ptr.vmem [resolvable:$true] %s425
          %431 = dma.hbm_to_vmem [thread:$0]  %s10, 1024, %s426, [#allocation14], 64, 64, 4
        $region48: #{mma_forward.8} parent=11 // pred_fallthru
          _
        // Predicated region
        $region49: #{mma_forward.8} parent=11 // pred_check
          %p432 = pneg %p286
        $region50: #{mma_forward.8} parent=11 // pred_check_branch
          %434 = sbr.rel (%p432) target = $region52
        $region51: #{mma_forward.8} parent=11 // pred_region
          %s436 = ssub.s32 16, 16
          %437 = vsyncadd [#allocation17], %s436
          %s439 = sshll.u32 [#allocation16], 4
          %s440 = int_to_ptr.vmem [resolvable:$true] %s439
          %442 = dma.hbm_to_vmem [thread:$0]  %s11, 16, %s440, [#allocation17]
        $region52: #{mma_forward.8} parent=11 // pred_fallthru
          _
      $region12: #{mma_forward.8} parent=5 // pred_fallthru
        _
      %p443 = scmp.lt.s32.totalorder %s24, 2
      // Predicated region
      $region53: #{mma_forward.8} parent=5 // pred_check
        %p444 = pneg %p443
      $region54: #{mma_forward.8} parent=5 // pred_check_branch
        %446 = sbr.rel (%p444) target = $region56
      $region55: #{mma_forward.8} parent=5 // pred_region
        // Predicated region
        $region57: #{mma_forward.8} parent=55 // pred_check
          %p447 = pneg %p44
        $region58: #{mma_forward.8} parent=55 // pred_check_branch
          %449 = sbr.rel (%p447) target = $region60
        $region59: #{mma_forward.8} parent=55 // pred_region
          %p450 = scmp.lt.s32.totalorder %s24, 1
          %s451 = scalar_select %p450, %s24, 1
          %s452 = smul.addr %s451, 8
          %s453 = scalar_lea.vmem %s0, %s452
        $region60: #{mma_forward.8} parent=55 // pred_fallthru
          _
        // Predicated region
        $region61: #{mma_forward.8} parent=55 // pred_check
          %p454 = pneg %p70
        $region62: #{mma_forward.8} parent=55 // pred_check_branch
          %456 = sbr.rel (%p454) target = $region64
        $region63: #{mma_forward.8} parent=55 // pred_region
          %p457 = scmp.lt.s32.totalorder %s24, 1
          %s458 = scalar_select %p457, %s24, 1
          %s459 = smul.addr %s458, 3
          %s460 = smul.addr %s459, 8
          %s461 = scalar_lea.vmem %s1, %s460
        $region64: #{mma_forward.8} parent=55 // pred_fallthru
          _
      $region56: #{mma_forward.8} parent=5 // pred_fallthru
        _
      %p462 = scmp.le.s32.totalorder 1, %s24
      %p463 = scmp.lt.s32.totalorder %s24, 3
      %p464 = pnand %p462, %p463
      %p465 = pneg %p464
      // Predicated region
      $region65: #{mma_forward.8} parent=5 // pred_check
        _
      $region66: #{mma_forward.8} parent=5 // pred_check_branch
        %467 = sbr.rel (%p464) target = $region68
      $region67: #{mma_forward.8} parent=5 // pred_region
        %s468 = ssub.s32 %s24, 1
        // Predicated region
        $region69: #{mma_forward.8} parent=67 // pred_check
          %p469 = pneg %p97
        $region70: #{mma_forward.8} parent=67 // pred_check_branch
          %471 = sbr.rel (%p469) target = $region72
        $region71: #{mma_forward.8} parent=67 // pred_region
          %472 = dma.done [#allocation3], 16
        $region72: #{mma_forward.8} parent=67 // pred_fallthru
          _
        // Predicated region
        $region73: #{mma_forward.8} parent=67 // pred_check
          %p473 = pneg %p118
        $region74: #{mma_forward.8} parent=67 // pred_check_branch
          %475 = sbr.rel (%p473) target = $region76
        $region75: #{mma_forward.8} parent=67 // pred_region
          %476 = dma.done [#allocation5], 16
        $region76: #{mma_forward.8} parent=67 // pred_fallthru
          _
        // Predicated region
        $region77: #{mma_forward.8} parent=67 // pred_check
          %p477 = pneg %p139
        $region78: #{mma_forward.8} parent=67 // pred_check_branch
          %479 = sbr.rel (%p477) target = $region80
        $region79: #{mma_forward.8} parent=67 // pred_region
          %480 = dma.done [#allocation5], 16
        $region80: #{mma_forward.8} parent=67 // pred_fallthru
          _
        // Predicated region
        $region81: #{mma_forward.8} parent=67 // pred_check
          %p481 = pneg %p160
        $region82: #{mma_forward.8} parent=67 // pred_check_branch
          %483 = sbr.rel (%p481) target = $region84
        $region83: #{mma_forward.8} parent=67 // pred_region
          %484 = dma.done [#allocation8], 16
        $region84: #{mma_forward.8} parent=67 // pred_fallthru
          _
        // Predicated region
        $region85: #{mma_forward.8} parent=67 // pred_check
          %p485 = pneg %p181
        $region86: #{mma_forward.8} parent=67 // pred_check_branch
          %487 = sbr.rel (%p485) target = $region88
        $region87: #{mma_forward.8} parent=67 // pred_region
          %488 = dma.done [#allocation8], 1024
        $region88: #{mma_forward.8} parent=67 // pred_fallthru
          _
        // Predicated region
        $region89: #{mma_forward.8} parent=67 // pred_check
          %p489 = pneg %p202
        $region90: #{mma_forward.8} parent=67 // pred_check_branch
          %491 = sbr.rel (%p489) target = $region92
        $region91: #{mma_forward.8} parent=67 // pred_region
          %492 = dma.done [#allocation11], 16
        $region92: #{mma_forward.8} parent=67 // pred_fallthru
          _
        // Predicated region
        $region93: #{mma_forward.8} parent=67 // pred_check
          %p493 = pneg %p223
        $region94: #{mma_forward.8} parent=67 // pred_check_branch
          %495 = sbr.rel (%p493) target = $region96
        $region95: #{mma_forward.8} parent=67 // pred_region
          %496 = dma.done [#allocation11], 2048
        $region96: #{mma_forward.8} parent=67 // pred_fallthru
          _
        // Predicated region
        $region97: #{mma_forward.8} parent=67 // pred_check
          %p497 = pneg %p244
        $region98: #{mma_forward.8} parent=67 // pred_check_branch
          %499 = sbr.rel (%p497) target = $region100
        $region99: #{mma_forward.8} parent=67 // pred_region
          %500 = dma.done [#allocation14], 32
        $region100: #{mma_forward.8} parent=67 // pred_fallthru
          _
        // Predicated region
        $region101: #{mma_forward.8} parent=67 // pred_check
          %p501 = pneg %p265
        $region102: #{mma_forward.8} parent=67 // pred_check_branch
          %503 = sbr.rel (%p501) target = $region104
        $region103: #{mma_forward.8} parent=67 // pred_region
          %504 = dma.done [#allocation14], 1024
        $region104: #{mma_forward.8} parent=67 // pred_fallthru
          _
        // Predicated region
        $region105: #{mma_forward.8} parent=67 // pred_check
          %p505 = pneg %p286
        $region106: #{mma_forward.8} parent=67 // pred_check_branch
          %507 = sbr.rel (%p505) target = $region108
        $region107: #{mma_forward.8} parent=67 // pred_region
          %508 = dma.done [#allocation17], 16
        $region108: #{mma_forward.8} parent=67 // pred_fallthru
          _
        %p509 = scmp.lt.s32.totalorder %s29, 1
        %s510 = scalar_select %p509, %s29, 1
        %s511 = smul.addr %s510, 8
        %s512 = scalar_lea.vmem %s0, %s511
        %p513 = pneg %p50
        %p514 = pneg %p47
        %p515 = scmp.lt.s32.totalorder %s29, 1
        %s516 = scalar_select %p515, %s29, 1
        %s517 = smul.addr %s516, 3
        %s518 = smul.addr %s517, 8
        %s519 = scalar_lea.vmem %s1, %s518
        %p520 = pneg %p76
        %p521 = pneg %p73
        %p522 = pneg %p97
        %p523 = pneg %p94
        %p524 = pneg %p118
        %p525 = pneg %p115
        %p526 = pneg %p139
        %p527 = pneg %p136
        %p528 = pneg %p160
        %p529 = pneg %p157
        %p530 = pneg %p181
        %p531 = pneg %p178
        %p532 = pneg %p202
        %p533 = pneg %p199
        %p534 = pneg %p223
        %p535 = pneg %p220
        %p536 = pneg %p244
        %p537 = pneg %p241
        %p538 = pneg %p265
        %p539 = pneg %p262
        %p540 = pneg %p286
        %p541 = pneg %p283
        %p542 = pneg %p312
        %p543 = pneg %p309
        %p544 = scmp.lt.s32.totalorder %s29, 1
        %s545 = scalar_select %p544, %s29, 1
        %s546 = smul.addr %s545, 4
        %s547 = scalar_lea.vmem %s12, %s546
        %p548 = scmp.lt.s32.totalorder %s29, 1
        %s549 = scalar_select %p548, %s29, 1
        %s550 = smul.addr %s549, 8
        %s551 = scalar_lea.vmem %s0, %s550
        %p552 = scmp.lt.s32.totalorder %s29, 1
        %s553 = scalar_select %p552, %s29, 1
        %s554 = smul.addr %s553, 3
        %s555 = smul.addr %s554, 8
        %s556 = scalar_lea.vmem %s1, %s555
        %p557 = scmp.lt.s32.totalorder %s29, 1
        %s558 = scalar_select %p557, %s29, 1
        %s559 = smul.addr %s558, 4
        %s560 = scalar_lea.vmem %s12, %s559
        %v562 = vld [vmem:[%s551] sm:$0xff]
        %v563 = vld [vmem:[%s556] sm:$0xff]
        %v564 = vld [vmem:[%s556 + $0x8] sm:$0xff]
        %v565 = vld [vmem:[%s556 + $0x10] sm:$0x1]
        %v566 = vld [vmem:[#allocation2] sm:$0x1]
        %v567 = vld [vmem:[#allocation4] sm:$0x1]
        %568 = vadd.xlane.f32.xlu0 %v562
        %v569 = vpop.xlane.xlu0 %568
        %v570 = vrcp.pop 128.0
        %v571 = vmul.f32 %v569, %v570
        %v572 = vsub.f32 %v562, %v571
        %v573 = vmul.f32 %v572, %v572
        %574 = vadd.xlane.f32.xlu0 %v573
        %v575 = vpop.xlane.xlu0 %574
        %v576 = vmul.f32 %v575, %v570
        %v577 = vadd.f32 %v576, 1e-05
        %v578 = vrsqrt.pop %v577
        %v579 = vmul.f32 %v572, %v578
        %v581 = vlaneseq
        %v582 = vshrl.u32 %v581, 7
        %v583 = vsub.s32 0, %v582
        %v584 = vrot.slane %v566, %v583
        %v586 = vmul.f32 %v579, %v584
        %v588 = vlaneseq
        %v589 = vshrl.u32 %v588, 7
        %v590 = vsub.s32 0, %v589
        %v591 = vrot.slane %v567, %v590
        %v593 = vadd.f32 %v586, %v591
        %v594 = vld [vmem:[#allocation6] sm:$0x1]
        %v595 = vld [vmem:[#allocation7] sm:$0x1]
        %596 = vadd.xlane.f32.xlu0 %v563
        %v597 = vpop.xlane.xlu0 %596
        %598 = vadd.xlane.f32.xlu0 %v564
        %v599 = vpop.xlane.xlu0 %598
        %vm600 = vcmask 1040384
        %v601 = vsel %vm600, %v565, 0.0
        %602 = vadd.xlane.f32.xlu0 %v601
        %v603 = vpop.xlane.xlu0 %602
        %v604 = vmul.f32 %v597, %v570
        %v605 = vmul.f32 %v599, %v570
        %v606 = vmul.f32 %v603, %v570
        %v607 = vsub.f32 %v563, %v604
        %v608 = vsub.f32 %v564, %v605
        %v609 = vsub.f32 %v565, %v606
        %v610 = vmul.f32 %v607, %v607
        %v611 = vmul.f32 %v608, %v608
        %v612 = vmul.f32 %v609, %v609
        %613 = vadd.xlane.f32.xlu0 %v610
        %v614 = vpop.xlane.xlu0 %613
        %615 = vadd.xlane.f32.xlu0 %v611
        %v616 = vpop.xlane.xlu0 %615
        %v617 = vsel %vm600, %v612, 0.0
        %618 = vadd.xlane.f32.xlu0 %v617
        %v619 = vpop.xlane.xlu0 %618
        %v620 = vmul.f32 %v614, %v570
        %v621 = vmul.f32 %v616, %v570
        %v622 = vmul.f32 %v619, %v570
        %v623 = vadd.f32 %v620, 1e-05
        %v624 = vadd.f32 %v621, 1e-05
        %v625 = vadd.f32 %v622, 1e-05
        %v626 = vrsqrt.pop %v623
        %v627 = vrsqrt.pop %v624
        %v628 = vrsqrt.pop %v625
        %v629 = vmul.f32 %v607, %v626
        %v630 = vmul.f32 %v608, %v627
        %v631 = vmul.f32 %v609, %v628
        %v633 = vlaneseq
        %v634 = vshrl.u32 %v633, 7
        %v635 = vsub.s32 0, %v634
        %v636 = vrot.slane %v594, %v635
        %v638 = vmul.f32 %v629, %v636
        %v639 = vmul.f32 %v630, %v636
        %v640 = vmul.f32 %v631, %v636
        %v642 = vlaneseq
        %v643 = vshrl.u32 %v642, 7
        %v644 = vsub.s32 0, %v643
        %v645 = vrot.slane %v595, %v644
        %v647 = vadd.f32 %v638, %v645
        %v648 = vadd.f32 %v639, %v645
        %v649 = vadd.f32 %v640, %v645
        %v650 = vld [vmem:[#allocation9] sm:$0xf]
        %v651 = vld [vmem:[#allocation9 + $0x4] sm:$0xf]
        %v652 = vld [vmem:[#allocation9 + $0x8] sm:$0xf]
        %v653 = vld [vmem:[#allocation9 + $0xc] sm:$0xf]
        %v654 = vld [vmem:[#allocation9 + $0x10] sm:$0xf]
        %v655 = vld [vmem:[#allocation9 + $0x14] sm:$0xf]
        %v656 = vld [vmem:[#allocation9 + $0x18] sm:$0xf]
        %v657 = vld [vmem:[#allocation9 + $0x1c] sm:$0xf]
        %v658 = vld [vmem:[#allocation9 + $0x20] sm:$0xf]
        %v659 = vld [vmem:[#allocation9 + $0x24] sm:$0xf]
        %v660 = vld [vmem:[#allocation9 + $0x28] sm:$0xf]
        %v661 = vld [vmem:[#allocation9 + $0x2c] sm:$0xf]
        %v662 = vld [vmem:[#allocation9 + $0x30] sm:$0xf]
        %v663 = vld [vmem:[#allocation9 + $0x34] sm:$0xf]
        %v664 = vld [vmem:[#allocation9 + $0x38] sm:$0xf]
        %v665 = vld [vmem:[#allocation9 + $0x3c] sm:$0xf]
        %v666 = vld [vmem:[#allocation10] sm:$0x1]
        %v667 = vpack.c.bf16 %v593, %v593
        %v669 = vlaneseq
        %v670 = vshrl.u32 %v669, 7
        %v671 = vsub.s32 0, %v670
        %v672 = vrot.slane %v666, %v671
        %v690 = vunpack.c.l.b16 %v650
        %v691 = vunpack.c.l.b16 %v651
        %v692 = vunpack.c.l.b16 %v652
        %v693 = vunpack.c.l.b16 %v653
        %v694 = vunpack.c.l.b16 %v654
        %v695 = vunpack.c.l.b16 %v655
        %v696 = vunpack.c.l.b16 %v656
        %v697 = vunpack.c.l.b16 %v657
        %v698 = vunpack.c.l.b16 %v658
        %v699 = vunpack.c.l.b16 %v659
        %v700 = vunpack.c.l.b16 %v660
        %v701 = vunpack.c.l.b16 %v661
        %v702 = vunpack.c.l.b16 %v662
        %v703 = vunpack.c.l.b16 %v663
        %v704 = vunpack.c.l.b16 %v664
        %v705 = vunpack.c.l.b16 %v665
        %v706 = vpack.c.b16 %v691, %v690
        %v707 = vpack.c.b16 %v693, %v692
        %v708 = vpack.c.b16 %v695, %v694
        %v709 = vpack.c.b16 %v697, %v696
        %v710 = vpack.c.b16 %v699, %v698
        %v711 = vpack.c.b16 %v701, %v700
        %v712 = vpack.c.b16 %v703, %v702
        %v713 = vpack.c.b16 %v705, %v704
        %722 = vmatprep.subr.bf16.mxu0 0
        %723 = vmatpush1.bf16.msra.mxu0 %v706
        %724 = vmatprep.subr.bf16.mxu0 0
        %725 = vmatpush1.bf16.msra.mxu0 %v707
        %726 = vmatprep.subr.bf16.mxu0 0
        %727 = vmatpush1.bf16.msra.mxu0 %v708
        %728 = vmatprep.subr.bf16.mxu0 0
        %729 = vmatpush1.bf16.msra.mxu0 %v709
        %730 = vmatprep.subr.bf16.mxu0 0
        %731 = vmatpush1.bf16.msra.mxu0 %v710
        %732 = vmatprep.subr.bf16.mxu0 0
        %733 = vmatpush1.bf16.msra.mxu0 %v711
        %734 = vmatprep.subr.bf16.mxu0 0
        %735 = vmatpush1.bf16.msra.mxu0 %v712
        %736 = vmatprep.subr.bf16.mxu0 0
        %737 = vmatpush1.bf16.msra.mxu0 %v713
        %738 = vmatprep.subr.bf16.mxu0 0
        %739 = vmatpush1.bf16.msra.mxu0 0
        %740 = vmatprep.subr.bf16.mxu0 0
        %741 = vmatpush1.bf16.msra.mxu0 0
        %742 = vmatprep.subr.bf16.mxu0 0
        %743 = vmatpush1.bf16.msra.mxu0 0
        %744 = vmatprep.subr.bf16.mxu0 0
        %745 = vmatpush1.bf16.msra.mxu0 0
        %746 = vmatprep.subr.bf16.mxu0 0
        %747 = vmatpush1.bf16.msra.mxu0 0
        %748 = vmatprep.subr.bf16.mxu0 0
        %749 = vmatpush1.bf16.msra.mxu0 0
        %750 = vmatprep.subr.bf16.mxu0 0
        %751 = vmatpush1.bf16.msra.mxu0 0
        %752 = vmatprep.subr.bf16.mxu0 0
        %753 = vmatpush1.bf16.msra.mxu0 0
        %754 = vmatprep.mubr.bf16.mxu0 0
        %755 = vmatmul.mubr.bf16.gmra.mrb[0].mxu0 %v667
        %v756 = vpop.f32.mrb[0].mxu0
        %v757 = vadd.f32 %v672, %v756
        %v758 = vpop.f32.mrb[0].mxu0
        %v759 = vpop.f32.mrb[0].mxu0
        %v760 = vpop.f32.mrb[0].mxu0
        %761 = vdwg.mxu0
        %v762 = vld [vmem:[#allocation12] sm:$0xff]
        %v763 = vld [vmem:[#allocation12 + $0x8] sm:$0xff]
        %v764 = vld [vmem:[#allocation12 + $0x10] sm:$0xff]
        %v765 = vld [vmem:[#allocation12 + $0x18] sm:$0xff]
        %v766 = vld [vmem:[#allocation12 + $0x20] sm:$0xff]
        %v767 = vld [vmem:[#allocation12 + $0x28] sm:$0xff]
        %v768 = vld [vmem:[#allocation12 + $0x30] sm:$0xff]
        %v769 = vld [vmem:[#allocation12 + $0x38] sm:$0xff]
        %v770 = vld [vmem:[#allocation12 + $0x40] sm:$0xff]
        %v771 = vld [vmem:[#allocation12 + $0x48] sm:$0xff]
        %v772 = vld [vmem:[#allocation12 + $0x50] sm:$0xff]
        %v773 = vld [vmem:[#allocation12 + $0x58] sm:$0xff]
        %v774 = vld [vmem:[#allocation12 + $0x60] sm:$0xff]
        %v775 = vld [vmem:[#allocation12 + $0x68] sm:$0xff]
        %v776 = vld [vmem:[#allocation12 + $0x70] sm:$0xff]
        %v777 = vld [vmem:[#allocation12 + $0x78] sm:$0xff]
        %v778 = vld [vmem:[#allocation13] sm:$0x3]
        %v779 = vpack.c.bf16 %v648, %v647
        %v780 = vpack.c.bf16 %v649, %v649
        %v782 = vlaneseq
        %v783 = vshrl.u32 %v782, 7
        %v784 = vsub.s32 0, %v783
        %v785 = vrot.slane %v778, %v784
        %v786 = vlaneseq
        %v787 = vshrl.u32 %v786, 7
        %v788 = vsub.s32 1, %v787
        %v789 = vrot.slane %v778, %v788
        %v808 = vunpack.c.l.b16 %v762
        %v809 = vunpack.c.h.b16 %v762
        %v810 = vunpack.c.l.b16 %v763
        %v811 = vunpack.c.h.b16 %v763
        %v812 = vunpack.c.l.b16 %v764
        %v813 = vunpack.c.h.b16 %v764
        %v814 = vunpack.c.l.b16 %v765
        %v815 = vunpack.c.h.b16 %v765
        %v816 = vunpack.c.l.b16 %v766
        %v817 = vunpack.c.h.b16 %v766
        %v818 = vunpack.c.l.b16 %v767
        %v819 = vunpack.c.h.b16 %v767
        %v820 = vunpack.c.l.b16 %v768
        %v821 = vunpack.c.h.b16 %v768
        %v822 = vunpack.c.l.b16 %v769
        %v823 = vunpack.c.h.b16 %v769
        %v824 = vunpack.c.l.b16 %v770
        %v825 = vunpack.c.h.b16 %v770
        %v826 = vunpack.c.l.b16 %v771
        %v827 = vunpack.c.h.b16 %v771
        %v828 = vunpack.c.l.b16 %v772
        %v829 = vunpack.c.h.b16 %v772
        %v830 = vunpack.c.l.b16 %v773
        %v831 = vunpack.c.h.b16 %v773
        %v832 = vunpack.c.l.b16 %v774
        %v833 = vunpack.c.h.b16 %v774
        %v834 = vunpack.c.l.b16 %v775
        %v835 = vunpack.c.h.b16 %v775
        %v836 = vunpack.c.l.b16 %v776
        %v837 = vunpack.c.h.b16 %v776
        %v838 = vunpack.c.l.b16 %v777
        %v839 = vunpack.c.h.b16 %v777
        %v840 = vpack.c.b16 %v810, %v808
        %v841 = vpack.c.b16 %v811, %v809
        %v842 = vpack.c.b16 %v814, %v812
        %v843 = vpack.c.b16 %v815, %v813
        %v844 = vpack.c.b16 %v818, %v816
        %v845 = vpack.c.b16 %v819, %v817
        %v846 = vpack.c.b16 %v822, %v820
        %v847 = vpack.c.b16 %v823, %v821
        %v848 = vpack.c.b16 %v826, %v824
        %v849 = vpack.c.b16 %v827, %v825
        %v850 = vpack.c.b16 %v830, %v828
        %v851 = vpack.c.b16 %v831, %v829
        %v852 = vpack.c.b16 %v834, %v832
        %v853 = vpack.c.b16 %v835, %v833
        %v854 = vpack.c.b16 %v838, %v836
        %v855 = vpack.c.b16 %v839, %v837
        %872 = vmatprep.subr.bf16.mxu0 %v841
        %873 = vmatpush1.bf16.msra.mxu0 %v840
        %874 = vmatprep.subr.bf16.mxu0 %v843
        %875 = vmatpush1.bf16.msra.mxu0 %v842
        %876 = vmatprep.subr.bf16.mxu0 %v845
        %877 = vmatpush1.bf16.msra.mxu0 %v844
        %878 = vmatprep.subr.bf16.mxu0 %v847
        %879 = vmatpush1.bf16.msra.mxu0 %v846
        %880 = vmatprep.subr.bf16.mxu0 %v849
        %881 = vmatpush1.bf16.msra.mxu0 %v848
        %882 = vmatprep.subr.bf16.mxu0 %v851
        %883 = vmatpush1.bf16.msra.mxu0 %v850
        %884 = vmatprep.subr.bf16.mxu0 %v853
        %885 = vmatpush1.bf16.msra.mxu0 %v852
        %886 = vmatprep.subr.bf16.mxu0 %v855
        %887 = vmatpush1.bf16.msra.mxu0 %v854
        %888 = vmatprep.subr.bf16.mxu0 0
        %889 = vmatpush1.bf16.msra.mxu0 0
        %890 = vmatprep.subr.bf16.mxu0 0
        %891 = vmatpush1.bf16.msra.mxu0 0
        %892 = vmatprep.subr.bf16.mxu0 0
        %893 = vmatpush1.bf16.msra.mxu0 0
        %894 = vmatprep.subr.bf16.mxu0 0
        %895 = vmatpush1.bf16.msra.mxu0 0
        %896 = vmatprep.subr.bf16.mxu0 0
        %897 = vmatpush1.bf16.msra.mxu0 0
        %898 = vmatprep.subr.bf16.mxu0 0
        %899 = vmatpush1.bf16.msra.mxu0 0
        %900 = vmatprep.subr.bf16.mxu0 0
        %901 = vmatpush1.bf16.msra.mxu0 0
        %902 = vmatprep.subr.bf16.mxu0 0
        %903 = vmatpush1.bf16.msra.mxu0 0
        %904 = vmatprep.mubr.bf16.mxu0 0
        %905 = vmatmul.mubr.bf16.gmra.mrb[0].mxu0 %v779
        %v906 = vpop.f32.mrb[0].mxu0
        %v907 = vadd.f32 %v785, %v906
        %v908 = vpop.f32.mrb[0].mxu0
        %v909 = vadd.f32 %v789, %v908
        %v910 = vpop.f32.mrb[0].mxu0
        %v911 = vadd.f32 %v785, %v910
        %v912 = vpop.f32.mrb[0].mxu0
        %v913 = vadd.f32 %v789, %v912
        %914 = vmatprep.mubr.bf16.mxu0 0
        %915 = vmatmul.mubr.bf16.gmra.mrb[0].mxu0 %v780
        %v916 = vpop.f32.mrb[0].mxu0
        %v917 = vadd.f32 %v785, %v916
        %v918 = vpop.f32.mrb[0].mxu0
        %v919 = vadd.f32 %v789, %v918
        %v920 = vpop.f32.mrb[0].mxu0
        %v921 = vpop.f32.mrb[0].mxu0
        %922 = vdwg.mxu0
        %vm923 = vcmask 523264
        %v925 = vsel %vm923, %v757, 0
        %v928 = vsel %vm923, %v907, 0
        %v931 = vsel %vm923, %v911, 0
        %v934 = vsel %vm923, %v917, 0
        %936 = vmatprep.subr.mxu0 0.0
        %937 = vmatpush1.xpose.msra.mxu0 %v928
        %938 = vmatprep.subr.mxu0 0.0
        %939 = vmatpush1.xpose.msra.mxu0 %v931
        %940 = vmatprep.subr.mxu0 0.0
        %941 = vmatpush1.xpose.msra.mxu0 %v934
        %942 = vmatprep.subr.mxu0 0.0
        %943 = vmatpush1.xpose.msra.mxu0 0.0
        %944 = vmatprep.subr.mxu0 0.0
        %945 = vmatpush1.xpose.msra.mxu0 0.0
        %946 = vmatprep.subr.mxu0 0.0
        %947 = vmatpush1.xpose.msra.mxu0 0.0
        %948 = vmatprep.subr.mxu0 0.0
        %949 = vmatpush1.xpose.msra.mxu0 0.0
        %950 = vmatprep.subr.mxu0 0.0
        %951 = vmatpush1.xpose.msra.mxu0 0.0
        %952 = vmatprep.subr.mxu0 0.0
        %953 = vmatpush1.xpose.msra.mxu0 0.0
        %954 = vmatprep.subr.mxu0 0.0
        %955 = vmatpush1.xpose.msra.mxu0 0.0
        %956 = vmatprep.subr.mxu0 0.0
        %957 = vmatpush1.xpose.msra.mxu0 0.0
        %958 = vmatprep.subr.mxu0 0.0
        %959 = vmatpush1.xpose.msra.mxu0 0.0
        %960 = vmatprep.subr.mxu0 0.0
        %961 = vmatpush1.xpose.msra.mxu0 0.0
        %962 = vmatprep.subr.mxu0 0.0
        %963 = vmatpush1.xpose.msra.mxu0 0.0
        %964 = vmatprep.subr.mxu0 0.0
        %965 = vmatpush1.xpose.msra.mxu0 0.0
        %966 = vmatprep.subr.mxu0 0.0
        %967 = vmatpush1.xpose.msra.mxu0 0.0
        %968 = vmatprep.subr.mxu0 0.0
        %969 = vmatpush1.xpose.msra.mxu0 0.0
        %970 = vmatprep.subr.mxu0 0.0
        %971 = vmatpush1.xpose.msra.mxu0 0.0
        %972 = vmatprep.subr.mxu0 0.0
        %973 = vmatpush1.xpose.msra.mxu0 0.0
        %974 = vmatprep.subr.mxu0 0.0
        %975 = vmatpush1.xpose.msra.mxu0 0.0
        %976 = vmatprep.subr.mxu0 0.0
        %977 = vmatpush1.xpose.msra.mxu0 0.0
        %978 = vmatprep.subr.mxu0 0.0
        %979 = vmatpush1.xpose.msra.mxu0 0.0
        %980 = vmatprep.subr.mxu0 0.0
        %981 = vmatpush1.xpose.msra.mxu0 0.0
        %982 = vmatprep.subr.mxu0 0.0
        %983 = vmatpush1.xpose.msra.mxu0 0.0
        %984 = vmatprep.subr.mxu0 0.0
        %985 = vmatpush1.xpose.msra.mxu0 0.0
        %986 = vmatprep.subr.mxu0 0.0
        %987 = vmatpush1.xpose.msra.mxu0 0.0
        %988 = vmatprep.subr.mxu0 0.0
        %989 = vmatpush1.xpose.msra.mxu0 0.0
        %990 = vmatprep.subr.mxu0 0.0
        %991 = vmatpush1.xpose.msra.mxu0 0.0
        %992 = vmatprep.subr.mxu0 0.0
        %993 = vmatpush1.xpose.msra.mxu0 0.0
        %994 = vmatprep.subr.mxu0 0.0
        %995 = vmatpush1.xpose.msra.mxu0 0.0
        %996 = vmatprep.subr.mxu0 0.0
        %997 = vmatpush1.xpose.msra.mxu0 0.0
        %998 = vmatprep.subr.mxu0 0.0
        %999 = vmatpush1.xpose.msra.mxu0 0.0
        %1000 = vmatprep.mubr.f32.mxu0 0.0
        %1001 = vmatmul.mubr.f32.gmra.mrb[0].mxu0 %v925
        %v1002 = vpop.f32.mrb[0].mxu0
        %v1003 = vadd.f32 0.0, %v1002
        %v1004 = vpop.f32.mrb[0].mxu0
        %1005 = vdwg.mxu0
        %vm1006 = vcmask 138240
        %v1007 = vsel %vm1006, %v1003, -inf
        %1008 = vmax.xlane.f32.xlu0 %v1007
        %v1009 = vpop.xlane.xlu0 %1008
        %v1010 = vsub.f32 %v1003, %v1009
        %v1011 = vmul.f32 %v1010, 1.442695
        %v1012 = vpow.pop %v1011
        %v1013 = vsel %vm1006, %v1012, 0.0
        %1014 = vadd.xlane.f32.xlu0 %v1013
        %v1015 = vpop.xlane.xlu0 %1014
        %v1016 = vrcp.pop %v1015
        %v1017 = vmul.f32 %v1012, %v1016
        %v1019 = vsel %vm1006, %v1017, 0
        %v1022 = vsel %vm600, %v919, 0
        %1024 = vmatprep.subr.mxu0 0.0
        %1025 = vmatpush1.msra.mxu0 %v909
        %1026 = vmatprep.subr.mxu0 0.0
        %1027 = vmatpush1.msra.mxu0 %v913
        %1028 = vmatprep.subr.mxu0 0.0
        %1029 = vmatpush1.msra.mxu0 %v1022
        %1030 = vmatprep.subr.mxu0 0.0
        %1031 = vmatpush1.msra.mxu0 0.0
        %1032 = vmatprep.subr.mxu0 0.0
        %1033 = vmatpush1.msra.mxu0 0.0
        %1034 = vmatprep.subr.mxu0 0.0
        %1035 = vmatpush1.msra.mxu0 0.0
        %1036 = vmatprep.subr.mxu0 0.0
        %1037 = vmatpush1.msra.mxu0 0.0
        %1038 = vmatprep.subr.mxu0 0.0
        %1039 = vmatpush1.msra.mxu0 0.0
        %1040 = vmatprep.subr.mxu0 0.0
        %1041 = vmatpush1.msra.mxu0 0.0
        %1042 = vmatprep.subr.mxu0 0.0
        %1043 = vmatpush1.msra.mxu0 0.0
        %1044 = vmatprep.subr.mxu0 0.0
        %1045 = vmatpush1.msra.mxu0 0.0
        %1046 = vmatprep.subr.mxu0 0.0
        %1047 = vmatpush1.msra.mxu0 0.0
        %1048 = vmatprep.subr.mxu0 0.0
        %1049 = vmatpush1.msra.mxu0 0.0
        %1050 = vmatprep.subr.mxu0 0.0
        %1051 = vmatpush1.msra.mxu0 0.0
        %1052 = vmatprep.subr.mxu0 0.0
        %1053 = vmatpush1.msra.mxu0 0.0
        %1054 = vmatprep.subr.mxu0 0.0
        %1055 = vmatpush1.msra.mxu0 0.0
        %1056 = vmatprep.subr.mxu0 0.0
        %1057 = vmatpush1.msra.mxu0 0.0
        %1058 = vmatprep.subr.mxu0 0.0
        %1059 = vmatpush1.msra.mxu0 0.0
        %1060 = vmatprep.subr.mxu0 0.0
        %1061 = vmatpush1.msra.mxu0 0.0
        %1062 = vmatprep.subr.mxu0 0.0
        %1063 = vmatpush1.msra.mxu0 0.0
        %1064 = vmatprep.subr.mxu0 0.0
        %1065 = vmatpush1.msra.mxu0 0.0
        %1066 = vmatprep.subr.mxu0 0.0
        %1067 = vmatpush1.msra.mxu0 0.0
        %1068 = vmatprep.subr.mxu0 0.0
        %1069 = vmatpush1.msra.mxu0 0.0
        %1070 = vmatprep.subr.mxu0 0.0
        %1071 = vmatpush1.msra.mxu0 0.0
        %1072 = vmatprep.subr.mxu0 0.0
        %1073 = vmatpush1.msra.mxu0 0.0
        %1074 = vmatprep.subr.mxu0 0.0
        %1075 = vmatpush1.msra.mxu0 0.0
        %1076 = vmatprep.subr.mxu0 0.0
        %1077 = vmatpush1.msra.mxu0 0.0
        %1078 = vmatprep.subr.mxu0 0.0
        %1079 = vmatpush1.msra.mxu0 0.0
        %1080 = vmatprep.subr.mxu0 0.0
        %1081 = vmatpush1.msra.mxu0 0.0
        %1082 = vmatprep.subr.mxu0 0.0
        %1083 = vmatpush1.msra.mxu0 0.0
        %1084 = vmatprep.subr.mxu0 0.0
        %1085 = vmatpush1.msra.mxu0 0.0
        %1086 = vmatprep.subr.mxu0 0.0
        %1087 = vmatpush1.msra.mxu0 0.0
        %1088 = vmatprep.mubr.f32.mxu0 0.0
        %1089 = vmatmul.mubr.f32.gmra.mrb[0].mxu0 %v1019
        %v1090 = vpop.f32.mrb[0].mxu0
        %v1091 = vadd.f32 0.0, %v1090
        %v1092 = vpop.f32.mrb[0].mxu0
        %1093 = vdwg.mxu0
        %1094 = vrot.lane.b32.xlu0 %v757, 64
        %v1095 = vpop.permute.xlu0 %1094
        %1096 = vrot.lane.b32.xlu0 %v907, 64
        %v1097 = vpop.permute.xlu0 %1096
        %1098 = vrot.lane.b32.xlu0 %v911, 64
        %v1099 = vpop.permute.xlu0 %1098
        %1100 = vrot.lane.b32.xlu0 %v917, 64
        %v1101 = vpop.permute.xlu0 %1100
        %v1102 = vsel %vm923, %v1095, 0
        %v1104 = vsel %vm923, %v1097, 0
        %v1106 = vsel %vm923, %v1099, 0
        %v1108 = vsel %vm923, %v1101, 0
        %1110 = vmatprep.subr.mxu0 0.0
        %1111 = vmatpush1.xpose.msra.mxu0 %v1104
        %1112 = vmatprep.subr.mxu0 0.0
        %1113 = vmatpush1.xpose.msra.mxu0 %v1106
        %1114 = vmatprep.subr.mxu0 0.0
        %1115 = vmatpush1.xpose.msra.mxu0 %v1108
        %1116 = vmatprep.subr.mxu0 0.0
        %1117 = vmatpush1.xpose.msra.mxu0 0.0
        %1118 = vmatprep.subr.mxu0 0.0
        %1119 = vmatpush1.xpose.msra.mxu0 0.0
        %1120 = vmatprep.subr.mxu0 0.0
        %1121 = vmatpush1.xpose.msra.mxu0 0.0
        %1122 = vmatprep.subr.mxu0 0.0
        %1123 = vmatpush1.xpose.msra.mxu0 0.0
        %1124 = vmatprep.subr.mxu0 0.0
        %1125 = vmatpush1.xpose.msra.mxu0 0.0
        %1126 = vmatprep.subr.mxu0 0.0
        %1127 = vmatpush1.xpose.msra.mxu0 0.0
        %1128 = vmatprep.subr.mxu0 0.0
        %1129 = vmatpush1.xpose.msra.mxu0 0.0
        %1130 = vmatprep.subr.mxu0 0.0
        %1131 = vmatpush1.xpose.msra.mxu0 0.0
        %1132 = vmatprep.subr.mxu0 0.0
        %1133 = vmatpush1.xpose.msra.mxu0 0.0
        %1134 = vmatprep.subr.mxu0 0.0
        %1135 = vmatpush1.xpose.msra.mxu0 0.0
        %1136 = vmatprep.subr.mxu0 0.0
        %1137 = vmatpush1.xpose.msra.mxu0 0.0
        %1138 = vmatprep.subr.mxu0 0.0
        %1139 = vmatpush1.xpose.msra.mxu0 0.0
        %1140 = vmatprep.subr.mxu0 0.0
        %1141 = vmatpush1.xpose.msra.mxu0 0.0
        %1142 = vmatprep.subr.mxu0 0.0
        %1143 = vmatpush1.xpose.msra.mxu0 0.0
        %1144 = vmatprep.subr.mxu0 0.0
        %1145 = vmatpush1.xpose.msra.mxu0 0.0
        %1146 = vmatprep.subr.mxu0 0.0
        %1147 = vmatpush1.xpose.msra.mxu0 0.0
        %1148 = vmatprep.subr.mxu0 0.0
        %1149 = vmatpush1.xpose.msra.mxu0 0.0
        %1150 = vmatprep.subr.mxu0 0.0
        %1151 = vmatpush1.xpose.msra.mxu0 0.0
        %1152 = vmatprep.subr.mxu0 0.0
        %1153 = vmatpush1.xpose.msra.mxu0 0.0
        %1154 = vmatprep.subr.mxu0 0.0
        %1155 = vmatpush1.xpose.msra.mxu0 0.0
        %1156 = vmatprep.subr.mxu0 0.0
        %1157 = vmatpush1.xpose.msra.mxu0 0.0
        %1158 = vmatprep.subr.mxu0 0.0
        %1159 = vmatpush1.xpose.msra.mxu0 0.0
        %1160 = vmatprep.subr.mxu0 0.0
        %1161 = vmatpush1.xpose.msra.mxu0 0.0
        %1162 = vmatprep.subr.mxu0 0.0
        %1163 = vmatpush1.xpose.msra.mxu0 0.0
        %1164 = vmatprep.subr.mxu0 0.0
        %1165 = vmatpush1.xpose.msra.mxu0 0.0
        %1166 = vmatprep.subr.mxu0 0.0
        %1167 = vmatpush1.xpose.msra.mxu0 0.0
        %1168 = vmatprep.subr.mxu0 0.0
        %1169 = vmatpush1.xpose.msra.mxu0 0.0
        %1170 = vmatprep.subr.mxu0 0.0
        %1171 = vmatpush1.xpose.msra.mxu0 0.0
        %1172 = vmatprep.subr.mxu0 0.0
        %1173 = vmatpush1.xpose.msra.mxu0 0.0
        %1174 = vmatprep.mubr.f32.mxu0 0.0
        %1175 = vmatmul.mubr.f32.gmra.mrb[0].mxu0 %v1102
        %v1176 = vpop.f32.mrb[0].mxu0
        %v1177 = vadd.f32 0.0, %v1176
        %v1178 = vpop.f32.mrb[0].mxu0
        %1179 = vdwg.mxu0
        %v1180 = vsel %vm1006, %v1177, -inf
        %1181 = vmax.xlane.f32.xlu0 %v1180
        %v1182 = vpop.xlane.xlu0 %1181
        %v1183 = vsub.f32 %v1177, %v1182
        %v1184 = vmul.f32 %v1183, 1.442695
        %v1185 = vpow.pop %v1184
        %v1186 = vsel %vm1006, %v1185, 0.0
        %1187 = vadd.xlane.f32.xlu0 %v1186
        %v1188 = vpop.xlane.xlu0 %1187
        %v1189 = vrcp.pop %v1188
        %v1190 = vmul.f32 %v1185, %v1189
        %1193 = vrot.lane.b32.xlu0 %v909, 64
        %v1194 = vpop.permute.xlu0 %1193
        %1195 = vrot.lane.b32.xlu0 %v913, 64
        %v1196 = vpop.permute.xlu0 %1195
        %1197 = vrot.lane.b32.xlu0 %v919, 64
        %v1198 = vpop.permute.xlu0 %1197
        %v1202 = vsel %vm1006, %v1190, 0
        %v1204 = vsel %vm600, %v1198, 0
        %1206 = vmatprep.subr.mxu0 0.0
        %1207 = vmatpush1.msra.mxu0 %v1194
        %1208 = vmatprep.subr.mxu0 0.0
        %1209 = vmatpush1.msra.mxu0 %v1196
        %1210 = vmatprep.subr.mxu0 0.0
        %1211 = vmatpush1.msra.mxu0 %v1204
        %1212 = vmatprep.subr.mxu0 0.0
        %1213 = vmatpush1.msra.mxu0 0.0
        %1214 = vmatprep.subr.mxu0 0.0
        %1215 = vmatpush1.msra.mxu0 0.0
        %1216 = vmatprep.subr.mxu0 0.0
        %1217 = vmatpush1.msra.mxu0 0.0
        %1218 = vmatprep.subr.mxu0 0.0
        %1219 = vmatpush1.msra.mxu0 0.0
        %1220 = vmatprep.subr.mxu0 0.0
        %1221 = vmatpush1.msra.mxu0 0.0
        %1222 = vmatprep.subr.mxu0 0.0
        %1223 = vmatpush1.msra.mxu0 0.0
        %1224 = vmatprep.subr.mxu0 0.0
        %1225 = vmatpush1.msra.mxu0 0.0
        %1226 = vmatprep.subr.mxu0 0.0
        %1227 = vmatpush1.msra.mxu0 0.0
        %1228 = vmatprep.subr.mxu0 0.0
        %1229 = vmatpush1.msra.mxu0 0.0
        %1230 = vmatprep.subr.mxu0 0.0
        %1231 = vmatpush1.msra.mxu0 0.0
        %1232 = vmatprep.subr.mxu0 0.0
        %1233 = vmatpush1.msra.mxu0 0.0
        %1234 = vmatprep.subr.mxu0 0.0
        %1235 = vmatpush1.msra.mxu0 0.0
        %1236 = vmatprep.subr.mxu0 0.0
        %1237 = vmatpush1.msra.mxu0 0.0
        %1238 = vmatprep.subr.mxu0 0.0
        %1239 = vmatpush1.msra.mxu0 0.0
        %1240 = vmatprep.subr.mxu0 0.0
        %1241 = vmatpush1.msra.mxu0 0.0
        %1242 = vmatprep.subr.mxu0 0.0
        %1243 = vmatpush1.msra.mxu0 0.0
        %1244 = vmatprep.subr.mxu0 0.0
        %1245 = vmatpush1.msra.mxu0 0.0
        %1246 = vmatprep.subr.mxu0 0.0
        %1247 = vmatpush1.msra.mxu0 0.0
        %1248 = vmatprep.subr.mxu0 0.0
        %1249 = vmatpush1.msra.mxu0 0.0
        %1250 = vmatprep.subr.mxu0 0.0
        %1251 = vmatpush1.msra.mxu0 0.0
        %1252 = vmatprep.subr.mxu0 0.0
        %1253 = vmatpush1.msra.mxu0 0.0
        %1254 = vmatprep.subr.mxu0 0.0
        %1255 = vmatpush1.msra.mxu0 0.0
        %1256 = vmatprep.subr.mxu0 0.0
        %1257 = vmatpush1.msra.mxu0 0.0
        %1258 = vmatprep.subr.mxu0 0.0
        %1259 = vmatpush1.msra.mxu0 0.0
        %1260 = vmatprep.subr.mxu0 0.0
        %1261 = vmatpush1.msra.mxu0 0.0
        %1262 = vmatprep.subr.mxu0 0.0
        %1263 = vmatpush1.msra.mxu0 0.0
        %1264 = vmatprep.subr.mxu0 0.0
        %1265 = vmatpush1.msra.mxu0 0.0
        %1266 = vmatprep.subr.mxu0 0.0
        %1267 = vmatpush1.msra.mxu0 0.0
        %1268 = vmatprep.subr.mxu0 0.0
        %1269 = vmatpush1.msra.mxu0 0.0
        %1270 = vmatprep.mubr.f32.mxu0 0.0
        %1271 = vmatmul.mubr.f32.gmra.mrb[0].mxu0 %v1202
        %v1272 = vpop.f32.mrb[0].mxu0
        %v1273 = vadd.f32 0.0, %v1272
        %v1274 = vpop.f32.mrb[0].mxu0
        %1275 = vdwg.mxu0
        %1277 = vrot.lane.b32.xlu0 %v1273, 64
        %v1278 = vpop.permute.xlu0 %1277
        %v1280 = vsel %vm923, %v1091, %v1278
        %v1281 = vld [vmem:[#allocation15] sm:$0xf]
        %v1282 = vld [vmem:[#allocation15 + $0x4] sm:$0xf]
        %v1283 = vld [vmem:[#allocation15 + $0x8] sm:$0xf]
        %v1284 = vld [vmem:[#allocation15 + $0xc] sm:$0xf]
        %v1285 = vld [vmem:[#allocation15 + $0x10] sm:$0xf]
        %v1286 = vld [vmem:[#allocation15 + $0x14] sm:$0xf]
        %v1287 = vld [vmem:[#allocation15 + $0x18] sm:$0xf]
        %v1288 = vld [vmem:[#allocation15 + $0x1c] sm:$0xf]
        %v1289 = vld [vmem:[#allocation15 + $0x20] sm:$0xf]
        %v1290 = vld [vmem:[#allocation15 + $0x24] sm:$0xf]
        %v1291 = vld [vmem:[#allocation15 + $0x28] sm:$0xf]
        %v1292 = vld [vmem:[#allocation15 + $0x2c] sm:$0xf]
        %v1293 = vld [vmem:[#allocation15 + $0x30] sm:$0xf]
        %v1294 = vld [vmem:[#allocation15 + $0x34] sm:$0xf]
        %v1295 = vld [vmem:[#allocation15 + $0x38] sm:$0xf]
        %v1296 = vld [vmem:[#allocation15 + $0x3c] sm:$0xf]
        %v1297 = vld [vmem:[#allocation16] sm:$0x1]
        %v1298 = vpack.c.bf16 %v1280, %v1280
        %v1300 = vlaneseq
        %v1301 = vshrl.u32 %v1300, 7
        %v1302 = vsub.s32 0, %v1301
        %v1303 = vrot.slane %v1297, %v1302
        %v1321 = vunpack.c.l.b16 %v1281
        %v1322 = vunpack.c.l.b16 %v1282
        %v1323 = vunpack.c.l.b16 %v1283
        %v1324 = vunpack.c.l.b16 %v1284
        %v1325 = vunpack.c.l.b16 %v1285
        %v1326 = vunpack.c.l.b16 %v1286
        %v1327 = vunpack.c.l.b16 %v1287
        %v1328 = vunpack.c.l.b16 %v1288
        %v1329 = vunpack.c.l.b16 %v1289
        %v1330 = vunpack.c.l.b16 %v1290
        %v1331 = vunpack.c.l.b16 %v1291
        %v1332 = vunpack.c.l.b16 %v1292
        %v1333 = vunpack.c.l.b16 %v1293
        %v1334 = vunpack.c.l.b16 %v1294
        %v1335 = vunpack.c.l.b16 %v1295
        %v1336 = vunpack.c.l.b16 %v1296
        %v1337 = vpack.c.b16 %v1322, %v1321
        %v1338 = vpack.c.b16 %v1324, %v1323
        %v1339 = vpack.c.b16 %v1326, %v1325
        %v1340 = vpack.c.b16 %v1328, %v1327
        %v1341 = vpack.c.b16 %v1330, %v1329
        %v1342 = vpack.c.b16 %v1332, %v1331
        %v1343 = vpack.c.b16 %v1334, %v1333
        %v1344 = vpack.c.b16 %v1336, %v1335
        %1353 = vmatprep.subr.bf16.mxu0 0
        %1354 = vmatpush1.bf16.msra.mxu0 %v1337
        %1355 = vmatprep.subr.bf16.mxu0 0
        %1356 = vmatpush1.bf16.msra.mxu0 %v1338
        %1357 = vmatprep.subr.bf16.mxu0 0
        %1358 = vmatpush1.bf16.msra.mxu0 %v1339
        %1359 = vmatprep.subr.bf16.mxu0 0
        %1360 = vmatpush1.bf16.msra.mxu0 %v1340
        %1361 = vmatprep.subr.bf16.mxu0 0
        %1362 = vmatpush1.bf16.msra.mxu0 %v1341
        %1363 = vmatprep.subr.bf16.mxu0 0
        %1364 = vmatpush1.bf16.msra.mxu0 %v1342
        %1365 = vmatprep.subr.bf16.mxu0 0
        %1366 = vmatpush1.bf16.msra.mxu0 %v1343
        %1367 = vmatprep.subr.bf16.mxu0 0
        %1368 = vmatpush1.bf16.msra.mxu0 %v1344
        %1369 = vmatprep.subr.bf16.mxu0 0
        %1370 = vmatpush1.bf16.msra.mxu0 0
        %1371 = vmatprep.subr.bf16.mxu0 0
        %1372 = vmatpush1.bf16.msra.mxu0 0
        %1373 = vmatprep.subr.bf16.mxu0 0
        %1374 = vmatpush1.bf16.msra.mxu0 0
        %1375 = vmatprep.subr.bf16.mxu0 0
        %1376 = vmatpush1.bf16.msra.mxu0 0
        %1377 = vmatprep.subr.bf16.mxu0 0
        %1378 = vmatpush1.bf16.msra.mxu0 0
        %1379 = vmatprep.subr.bf16.mxu0 0
        %1380 = vmatpush1.bf16.msra.mxu0 0
        %1381 = vmatprep.subr.bf16.mxu0 0
        %1382 = vmatpush1.bf16.msra.mxu0 0
        %1383 = vmatprep.subr.bf16.mxu0 0
        %1384 = vmatpush1.bf16.msra.mxu0 0
        %1385 = vmatprep.mubr.bf16.mxu0 0
        %1386 = vmatmul.mubr.bf16.gmra.mrb[0].mxu0 %v1298
        %v1387 = vpop.f32.mrb[0].mxu0
        %v1388 = vadd.f32 %v1303, %v1387
        %v1389 = vpop.f32.mrb[0].mxu0
        %v1390 = vpop.f32.mrb[0].mxu0
        %v1391 = vpop.f32.mrb[0].mxu0
        %1392 = vdwg.mxu0
        %v1393 = vpack.c.bf16 %v1388, %v1388
        %1394 = vst [vmem:[%s560] sm:$0xf] %v1393
        %p1395 = scmp.lt.s32.totalorder %s29, 1
        %s1396 = scalar_select %p1395, %s29, 1
        %s1397 = smul.addr %s1396, 4
        %s1398 = scalar_lea.vmem %s12, %s1397
        // Predicated region
        $region109: #{mma_forward.8} parent=67 // pred_check
          %p1399 = pneg %p309
        $region110: #{mma_forward.8} parent=67 // pred_check_branch
          %1401 = sbr.rel (%p1399) target = $region112
        $region111: #{mma_forward.8} parent=67 // pred_region
          _
        $region112: #{mma_forward.8} parent=67 // pred_fallthru
          _
      $region68: #{mma_forward.8} parent=5 // pred_fallthru
        _
      %p1402 = scmp.le.s32.totalorder 2, %s24
      // Predicated region
      $region113: #{mma_forward.8} parent=5 // pred_check
        %p1403 = pneg %p1402
      $region114: #{mma_forward.8} parent=5 // pred_check_branch
        %1405 = sbr.rel (%p1403) target = $region116
      $region115: #{mma_forward.8} parent=5 // pred_region
        %s1406 = ssub.s32 %s24, 2
        // Predicated region
        $region117: #{mma_forward.8} parent=115 // pred_check
          %p1407 = pneg %p315
        $region118: #{mma_forward.8} parent=115 // pred_check_branch
          %1409 = sbr.rel (%p1407) target = $region120
        $region119: #{mma_forward.8} parent=115 // pred_region
          %p1410 = scmp.lt.s32.totalorder %s30, 1
          %s1411 = scalar_select %p1410, %s30, 1
          %s1412 = smul.addr %s1411, 4
          %s1413 = scalar_lea.vmem %s12, %s1412
        $region120: #{mma_forward.8} parent=115 // pred_fallthru
          _
      $region116: #{mma_forward.8} parent=5 // pred_fallthru
        _
    $region6: #{mma_forward.8} parent=1 // loop_footer
      %s28 = sadd.s32 1, %s24
    $region7: #{mma_forward.8} parent=1 // loop_footer_branch
      %23 = sbr.rel target = $region3
    $region8: #{mma_forward.8} parent=1 // loop_exit
      _
    %1414 = vsyncpa [#allocation3], 1
    %s1415 = scalar_lea.sflag [#allocation3], 1
    %1416 = vsyncpa %s1415, 1
    %1417 = vsyncpa [#allocation5], 1
    %1418 = vsyncpa [#allocation8], 1
    %1419 = vsyncpa [#allocation11], 1
    %1420 = vsyncpa [#allocation14], 1
    %1421 = vsyncpa [#allocation17], 1

// kernel: mma_forward.10
$region0: #{mma_forward.10}
  #allocation0 [shape = 'u32[]', space=smem, size = 0x4, offset = 0x4, fixed_abs, tag = 'smem constant byte address 0x4 - core index']
  #allocation1 [shape = 'u32[144,128]{1,0:T(1,128)}', space=vmem, size = 0x12000, scoped, tag = 'internal scratch']
  %s0 = inlined_call_operand.vmem [shape: bf16[2,8,128], index: 0, kind: input, shape index: {}]
  %s1 = inlined_call_operand.vmem [shape: f32[1,128], index: 1, kind: input, shape index: {}]
  %s2 = inlined_call_operand.vmem [shape: f32[1,128], index: 2, kind: input, shape index: {}]
  %s3 = inlined_call_operand.vmem [shape: bf16[128,128], index: 3, kind: input, shape index: {}]
  %s4 = inlined_call_operand.vmem [shape: f32[1,128], index: 4, kind: input, shape index: {}]
  %s5 = inlined_call_operand.vmem [shape: f32[1,128], index: 5, kind: input, shape index: {}]
  %s6 = inlined_call_operand.vmem [shape: f32[1,128], index: 6, kind: input, shape index: {}]
  %s7 = inlined_call_operand.vmem [shape: bf16[2,8,128], index: 7, kind: output, shape index: {}]
  %s8 = sld [smem:[#allocation0]]
  $region61: #{mma_forward.10} parent=0
    _
  %s10 = ssub.s32 1, %s8
  %s11 = scalar_select 0, %s10, %s8
  loop: start=0, step=1, limit=4
  $region2: #{mma_forward.10} parent=0 // loop_pre_header
    _
  $region3: #{mma_forward.10} parent=0 // loop_header
    %s13 = sphi 0, %s17
    %p14 = scmp.ge.s32.totalorder %s13, 4
    %s23 = sphi 0, %s25
    %s26 = sphi 0, %s23
    %s27 = sphi 0, %s26
    %s43 = sphi 0, %s27
    %s47 = sphi 0, %s47
    %s49 = sphi 0, %s47
    %s50 = sphi 0, %s49
    %s64 = sphi 0, %s50
    %s68 = sphi 0, %s68
    %s70 = sphi 0, %s68
    %s71 = sphi 0, %s70
    %s85 = sphi 0, %s71
    %s89 = sphi 0, %s89
    %s91 = sphi 0, %s89
    %s92 = sphi 0, %s91
    %s106 = sphi 0, %s92
    %s110 = sphi 0, %s110
    %s112 = sphi 0, %s110
    %s113 = sphi 0, %s112
    %s127 = sphi 0, %s113
    %s131 = sphi 0, %s131
    %s133 = sphi 0, %s131
    %s134 = sphi 0, %s133
    %s148 = sphi 0, %s134
    %s152 = sphi 0, %s152
    %s154 = sphi 0, %s152
    %s155 = sphi 0, %s154
    %s169 = sphi 0, %s155
    %s175 = sphi 0, %s177
    %s178 = sphi 0, %s175
    %s179 = sphi 0, %s178
    %s195 = sphi 0, %s179
  $region4: #{mma_forward.10} parent=0 // loop_header_branch
    %16 = sbr.rel (%p14) target = $region8
  $region5: #{mma_forward.10} parent=0 // loop_body
    %s18 = ssub.s32 %s13, 1
    %s19 = ssub.s32 %s13, 2
    %s20 = sadd.s32 %s13, 1
    %s21 = ssub.s32 %s13, %s20
    %p22 = scmp.eq.s32.totalorder %s21, 0
    %s24 = sadd.s32 %s23, 1
    %s25 = scalar_select %p22, %s23, %s24
    %p28 = pneg %p22
    %p29 = scmp.eq.s32.totalorder %s13, 1
    %p30 = por %p28, %p29
    %p31 = scmp.ne.s32.totalorder %s23, %s26
    %p32 = scmp.eq.s32.totalorder %s13, 0
    %p33 = por %p31, %p32
    %p34 = scmp.ne.s32.totalorder %s23, %s26
    %p35 = scmp.eq.s32.totalorder %s18, 1
    %p36 = por %p34, %p35
    %p37 = scmp.ne.s32.totalorder %s26, %s27
    %p38 = scmp.eq.s32.totalorder %s18, 0
    %p39 = por %p37, %p38
    %p40 = scmp.ne.s32.totalorder %s26, %s27
    %p41 = scmp.eq.s32.totalorder %s19, 1
    %p42 = por %p40, %p41
    %p44 = scmp.ne.s32.totalorder %s27, %s43
    %p45 = scmp.eq.s32.totalorder %s19, 0
    %p46 = por %p44, %p45
    %s48 = sadd.s32 %s47, 1
    %p51 = scmp.eq.s32.totalorder %s13, 1
    %p52 = scmp.ne.s32.totalorder %s47, %s49
    %p53 = scmp.eq.s32.totalorder %s13, 0
    %p54 = por %p52, %p53
    %p55 = scmp.ne.s32.totalorder %s47, %s49
    %p56 = scmp.eq.s32.totalorder %s18, 1
    %p57 = por %p55, %p56
    %p58 = scmp.ne.s32.totalorder %s49, %s50
    %p59 = scmp.eq.s32.totalorder %s18, 0
    %p60 = por %p58, %p59
    %p61 = scmp.ne.s32.totalorder %s49, %s50
    %p62 = scmp.eq.s32.totalorder %s19, 1
    %p63 = por %p61, %p62
    %p65 = scmp.ne.s32.totalorder %s50, %s64
    %p66 = scmp.eq.s32.totalorder %s19, 0
    %p67 = por %p65, %p66
    %s69 = sadd.s32 %s68, 1
    %p72 = scmp.eq.s32.totalorder %s13, 1
    %p73 = scmp.ne.s32.totalorder %s68, %s70
    %p74 = scmp.eq.s32.totalorder %s13, 0
    %p75 = por %p73, %p74
    %p76 = scmp.ne.s32.totalorder %s68, %s70
    %p77 = scmp.eq.s32.totalorder %s18, 1
    %p78 = por %p76, %p77
    %p79 = scmp.ne.s32.totalorder %s70, %s71
    %p80 = scmp.eq.s32.totalorder %s18, 0
    %p81 = por %p79, %p80
    %p82 = scmp.ne.s32.totalorder %s70, %s71
    %p83 = scmp.eq.s32.totalorder %s19, 1
    %p84 = por %p82, %p83
    %p86 = scmp.ne.s32.totalorder %s71, %s85
    %p87 = scmp.eq.s32.totalorder %s19, 0
    %p88 = por %p86, %p87
    %s90 = sadd.s32 %s89, 1
    %p93 = scmp.eq.s32.totalorder %s13, 1
    %p94 = scmp.ne.s32.totalorder %s89, %s91
    %p95 = scmp.eq.s32.totalorder %s13, 0
    %p96 = por %p94, %p95
    %p97 = scmp.ne.s32.totalorder %s89, %s91
    %p98 = scmp.eq.s32.totalorder %s18, 1
    %p99 = por %p97, %p98
    %p100 = scmp.ne.s32.totalorder %s91, %s92
    %p101 = scmp.eq.s32.totalorder %s18, 0
    %p102 = por %p100, %p101
    %p103 = scmp.ne.s32.totalorder %s91, %s92
    %p104 = scmp.eq.s32.totalorder %s19, 1
    %p105 = por %p103, %p104
    %p107 = scmp.ne.s32.totalorder %s92, %s106
    %p108 = scmp.eq.s32.totalorder %s19, 0
    %p109 = por %p107, %p108
    %s111 = sadd.s32 %s110, 1
    %p114 = scmp.eq.s32.totalorder %s13, 1
    %p115 = scmp.ne.s32.totalorder %s110, %s112
    %p116 = scmp.eq.s32.totalorder %s13, 0
    %p117 = por %p115, %p116
    %p118 = scmp.ne.s32.totalorder %s110, %s112
    %p119 = scmp.eq.s32.totalorder %s18, 1
    %p120 = por %p118, %p119
    %p121 = scmp.ne.s32.totalorder %s112, %s113
    %p122 = scmp.eq.s32.totalorder %s18, 0
    %p123 = por %p121, %p122
    %p124 = scmp.ne.s32.totalorder %s112, %s113
    %p125 = scmp.eq.s32.totalorder %s19, 1
    %p126 = por %p124, %p125
    %p128 = scmp.ne.s32.totalorder %s113, %s127
    %p129 = scmp.eq.s32.totalorder %s19, 0
    %p130 = por %p128, %p129
    %s132 = sadd.s32 %s131, 1
    %p135 = scmp.eq.s32.totalorder %s13, 1
    %p136 = scmp.ne.s32.totalorder %s131, %s133
    %p137 = scmp.eq.s32.totalorder %s13, 0
    %p138 = por %p136, %p137
    %p139 = scmp.ne.s32.totalorder %s131, %s133
    %p140 = scmp.eq.s32.totalorder %s18, 1
    %p141 = por %p139, %p140
    %p142 = scmp.ne.s32.totalorder %s133, %s134
    %p143 = scmp.eq.s32.totalorder %s18, 0
    %p144 = por %p142, %p143
    %p145 = scmp.ne.s32.totalorder %s133, %s134
    %p146 = scmp.eq.s32.totalorder %s19, 1
    %p147 = por %p145, %p146
    %p149 = scmp.ne.s32.totalorder %s134, %s148
    %p150 = scmp.eq.s32.totalorder %s19, 0
    %p151 = por %p149, %p150
    %s153 = sadd.s32 %s152, 1
    %p156 = scmp.eq.s32.totalorder %s13, 1
    %p157 = scmp.ne.s32.totalorder %s152, %s154
    %p158 = scmp.eq.s32.totalorder %s13, 0
    %p159 = por %p157, %p158
    %p160 = scmp.ne.s32.totalorder %s152, %s154
    %p161 = scmp.eq.s32.totalorder %s18, 1
    %p162 = por %p160, %p161
    %p163 = scmp.ne.s32.totalorder %s154, %s155
    %p164 = scmp.eq.s32.totalorder %s18, 0
    %p165 = por %p163, %p164
    %p166 = scmp.ne.s32.totalorder %s154, %s155
    %p167 = scmp.eq.s32.totalorder %s19, 1
    %p168 = por %p166, %p167
    %p170 = scmp.ne.s32.totalorder %s155, %s169
    %p171 = scmp.eq.s32.totalorder %s19, 0
    %p172 = por %p170, %p171
    %s173 = ssub.s32 %s13, %s20
    %p174 = scmp.eq.s32.totalorder %s173, 0
    %s176 = sadd.s32 %s175, 1
    %s177 = scalar_select %p174, %s175, %s176
    %p180 = pneg %p174
    %p181 = scmp.eq.s32.totalorder %s13, 1
    %p182 = por %p180, %p181
    %p183 = scmp.ne.s32.totalorder %s175, %s178
    %p184 = scmp.eq.s32.totalorder %s13, 0
    %p185 = por %p183, %p184
    %p186 = scmp.ne.s32.totalorder %s175, %s178
    %p187 = scmp.eq.s32.totalorder %s18, 1
    %p188 = por %p186, %p187
    %p189 = scmp.ne.s32.totalorder %s178, %s179
    %p190 = scmp.eq.s32.totalorder %s18, 0
    %p191 = por %p189, %p190
    %p192 = scmp.ne.s32.totalorder %s178, %s179
    %p193 = scmp.eq.s32.totalorder %s19, 1
    %p194 = por %p192, %p193
    %p196 = scmp.ne.s32.totalorder %s179, %s195
    %p197 = scmp.eq.s32.totalorder %s19, 0
    %p198 = por %p196, %p197
    %p199 = scmp.le.s32.totalorder 1, %s13
    %p200 = scmp.lt.s32.totalorder %s13, 3
    %p201 = pnand %p199, %p200
    %p202 = pneg %p201
    // Predicated region
    $region9: #{mma_forward.10} parent=5 // pred_check
      _
    $region10: #{mma_forward.10} parent=5 // pred_check_branch
      %204 = sbr.rel (%p201) target = $region12
    $region11: #{mma_forward.10} parent=5 // pred_region
      %s205 = ssub.s32 %s13, 1
      // Predicated region
      $region13: #{mma_forward.10} parent=11 // pred_check
        %p206 = pneg %p60
      $region14: #{mma_forward.10} parent=11 // pred_check_branch
        %208 = sbr.rel (%p206) target = $region16
      $region15: #{mma_forward.10} parent=11 // pred_region
        _
      $region16: #{mma_forward.10} parent=11 // pred_fallthru
        _
      // Predicated region
      $region17: #{mma_forward.10} parent=11 // pred_check
        %p209 = pneg %p81
      $region18: #{mma_forward.10} parent=11 // pred_check_branch
        %211 = sbr.rel (%p209) target = $region20
      $region19: #{mma_forward.10} parent=11 // pred_region
        _
      $region20: #{mma_forward.10} parent=11 // pred_fallthru
        _
      // Predicated region
      $region21: #{mma_forward.10} parent=11 // pred_check
        %p212 = pneg %p102
      $region22: #{mma_forward.10} parent=11 // pred_check_branch
        %214 = sbr.rel (%p212) target = $region24
      $region23: #{mma_forward.10} parent=11 // pred_region
        _
      $region24: #{mma_forward.10} parent=11 // pred_fallthru
        _
      // Predicated region
      $region25: #{mma_forward.10} parent=11 // pred_check
        %p215 = pneg %p123
      $region26: #{mma_forward.10} parent=11 // pred_check_branch
        %217 = sbr.rel (%p215) target = $region28
      $region27: #{mma_forward.10} parent=11 // pred_region
        _
      $region28: #{mma_forward.10} parent=11 // pred_fallthru
        _
      // Predicated region
      $region29: #{mma_forward.10} parent=11 // pred_check
        %p218 = pneg %p144
      $region30: #{mma_forward.10} parent=11 // pred_check_branch
        %220 = sbr.rel (%p218) target = $region32
      $region31: #{mma_forward.10} parent=11 // pred_region
        _
      $region32: #{mma_forward.10} parent=11 // pred_fallthru
        _
      // Predicated region
      $region33: #{mma_forward.10} parent=11 // pred_check
        %p221 = pneg %p165
      $region34: #{mma_forward.10} parent=11 // pred_check_branch
        %223 = sbr.rel (%p221) target = $region36
      $region35: #{mma_forward.10} parent=11 // pred_region
        _
      $region36: #{mma_forward.10} parent=11 // pred_fallthru
        _
    $region12: #{mma_forward.10} parent=5 // pred_fallthru
      _
    %p224 = scmp.lt.s32.totalorder %s13, 2
    // Predicated region
    $region37: #{mma_forward.10} parent=5 // pred_check
      %p225 = pneg %p224
    $region38: #{mma_forward.10} parent=5 // pred_check_branch
      %227 = sbr.rel (%p225) target = $region40
    $region39: #{mma_forward.10} parent=5 // pred_region
      // Predicated region
      $region41: #{mma_forward.10} parent=39 // pred_check
        %p228 = pneg %p33
      $region42: #{mma_forward.10} parent=39 // pred_check_branch
        %230 = sbr.rel (%p228) target = $region44
      $region43: #{mma_forward.10} parent=39 // pred_region
        %p231 = scmp.lt.s32.totalorder %s13, 1
        %s232 = scalar_select %p231, %s13, 1
        %s233 = smul.addr %s232, 4
        %s234 = scalar_lea.vmem %s0, %s233
      $region44: #{mma_forward.10} parent=39 // pred_fallthru
        _
    $region40: #{mma_forward.10} parent=5 // pred_fallthru
      _
    %p235 = scmp.le.s32.totalorder 1, %s13
    %p236 = scmp.lt.s32.totalorder %s13, 3
    %p237 = pnand %p235, %p236
    %p238 = pneg %p237
    // Predicated region
    $region45: #{mma_forward.10} parent=5 // pred_check
      _
    $region46: #{mma_forward.10} parent=5 // pred_check_branch
      %240 = sbr.rel (%p237) target = $region48
    $region47: #{mma_forward.10} parent=5 // pred_region
      %s241 = ssub.s32 %s13, 1
      %p242 = scmp.lt.s32.totalorder %s18, 1
      %s243 = scalar_select %p242, %s18, 1
      %s244 = smul.addr %s243, 4
      %s245 = scalar_lea.vmem %s0, %s244
      %p246 = pneg %p39
      %p247 = pneg %p36
      %p248 = pneg %p60
      %p249 = pneg %p57
      %p250 = pneg %p81
      %p251 = pneg %p78
      %p252 = pneg %p102
      %p253 = pneg %p99
      %p254 = pneg %p123
      %p255 = pneg %p120
      %p256 = pneg %p144
      %p257 = pneg %p141
      %p258 = pneg %p165
      %p259 = pneg %p162
      %p260 = pneg %p191
      %p261 = pneg %p188
      %p262 = scmp.lt.s32.totalorder %s18, 1
      %s263 = scalar_select %p262, %s18, 1
      %s264 = smul.addr %s263, 4
      %s265 = scalar_lea.vmem %s7, %s264
      %p266 = scmp.lt.s32.totalorder %s18, 1
      %s267 = scalar_select %p266, %s18, 1
      %s268 = smul.addr %s267, 4
      %s269 = scalar_lea.vmem %s0, %s268
      %p270 = scmp.lt.s32.totalorder %s18, 1
      %s271 = scalar_select %p270, %s18, 1
      %s272 = smul.addr %s271, 4
      %s273 = scalar_lea.vmem %s7, %s272
      %v275 = vld [vmem:[%s269] sm:$0xf]
      %v276 = vunpack.c.l.bf16 %v275
      %v277 = vld [vmem:[%s1] sm:$0x1]
      %v278 = vld [vmem:[%s2] sm:$0x1]
      %279 = vadd.xlane.f32.xlu0 %v276
      %v280 = vpop.xlane.xlu0 %279
      %v281 = vrcp.pop 128.0
      %v282 = vmul.f32 %v280, %v281
      %v283 = vsub.f32 %v276, %v282
      %v284 = vmul.f32 %v283, %v283
      %285 = vadd.xlane.f32.xlu0 %v284
      %v286 = vpop.xlane.xlu0 %285
      %v287 = vmul.f32 %v286, %v281
      %v288 = vadd.f32 %v287, 1e-05
      %v289 = vrsqrt.pop %v288
      %v290 = vmul.f32 %v283, %v289
      %v292 = vlaneseq
      %v293 = vshrl.u32 %v292, 7
      %v294 = vsub.s32 0, %v293
      %v295 = vrot.slane %v277, %v294
      %v297 = vmul.f32 %v290, %v295
      %v299 = vlaneseq
      %v300 = vshrl.u32 %v299, 7
      %v301 = vsub.s32 0, %v300
      %v302 = vrot.slane %v278, %v301
      %v304 = vadd.f32 %v297, %v302
      %v305 = vld [vmem:[%s3] sm:$0xf]
      %v306 = vld [vmem:[%s3 + $0x4] sm:$0xf]
      %v307 = vld [vmem:[%s3 + $0x8] sm:$0xf]
      %v308 = vld [vmem:[%s3 + $0xc] sm:$0xf]
      %v309 = vld [vmem:[%s3 + $0x10] sm:$0xf]
      %v310 = vld [vmem:[%s3 + $0x14] sm:$0xf]
      %v311 = vld [vmem:[%s3 + $0x18] sm:$0xf]
      %v312 = vld [vmem:[%s3 + $0x1c] sm:$0xf]
      %v313 = vld [vmem:[%s3 + $0x20] sm:$0xf]
      %v314 = vld [vmem:[%s3 + $0x24] sm:$0xf]
      %v315 = vld [vmem:[%s3 + $0x28] sm:$0xf]
      %v316 = vld [vmem:[%s3 + $0x2c] sm:$0xf]
      %v317 = vld [vmem:[%s3 + $0x30] sm:$0xf]
      %v318 = vld [vmem:[%s3 + $0x34] sm:$0xf]
      %v319 = vld [vmem:[%s3 + $0x38] sm:$0xf]
      %v320 = vld [vmem:[%s3 + $0x3c] sm:$0xf]
      %v321 = vld [vmem:[%s4] sm:$0x1]
      %v322 = vpack.c.bf16 %v304, %v304
      %v324 = vlaneseq
      %v325 = vshrl.u32 %v324, 7
      %v326 = vsub.s32 0, %v325
      %v327 = vrot.slane %v321, %v326
      %v345 = vunpack.c.l.b16 %v305
      %v346 = vunpack.c.l.b16 %v306
      %v347 = vunpack.c.l.b16 %v307
      %v348 = vunpack.c.l.b16 %v308
      %v349 = vunpack.c.l.b16 %v309
      %v350 = vunpack.c.l.b16 %v310
      %v351 = vunpack.c.l.b16 %v311
      %v352 = vunpack.c.l.b16 %v312
      %v353 = vunpack.c.l.b16 %v313
      %v354 = vunpack.c.l.b16 %v314
      %v355 = vunpack.c.l.b16 %v315
      %v356 = vunpack.c.l.b16 %v316
      %v357 = vunpack.c.l.b16 %v317
      %v358 = vunpack.c.l.b16 %v318
      %v359 = vunpack.c.l.b16 %v319
      %v360 = vunpack.c.l.b16 %v320
      %v361 = vpack.c.b16 %v346, %v345
      %v362 = vpack.c.b16 %v348, %v347
      %v363 = vpack.c.b16 %v350, %v349
      %v364 = vpack.c.b16 %v352, %v351
      %v365 = vpack.c.b16 %v354, %v353
      %v366 = vpack.c.b16 %v356, %v355
      %v367 = vpack.c.b16 %v358, %v357
      %v368 = vpack.c.b16 %v360, %v359
      %377 = vmatprep.subr.bf16.mxu0 0
      %378 = vmatpush1.bf16.msra.mxu0 %v361
      %379 = vmatprep.subr.bf16.mxu0 0
      %380 = vmatpush1.bf16.msra.mxu0 %v362
      %381 = vmatprep.subr.bf16.mxu0 0
      %382 = vmatpush1.bf16.msra.mxu0 %v363
      %383 = vmatprep.subr.bf16.mxu0 0
      %384 = vmatpush1.bf16.msra.mxu0 %v364
      %385 = vmatprep.subr.bf16.mxu0 0
      %386 = vmatpush1.bf16.msra.mxu0 %v365
      %387 = vmatprep.subr.bf16.mxu0 0
      %388 = vmatpush1.bf16.msra.mxu0 %v366
      %389 = vmatprep.subr.bf16.mxu0 0
      %390 = vmatpush1.bf16.msra.mxu0 %v367
      %391 = vmatprep.subr.bf16.mxu0 0
      %392 = vmatpush1.bf16.msra.mxu0 %v368
      %393 = vmatprep.subr.bf16.mxu0 0
      %394 = vmatpush1.bf16.msra.mxu0 0
      %395 = vmatprep.subr.bf16.mxu0 0
      %396 = vmatpush1.bf16.msra.mxu0 0
      %397 = vmatprep.subr.bf16.mxu0 0
      %398 = vmatpush1.bf16.msra.mxu0 0
      %399 = vmatprep.subr.bf16.mxu0 0
      %400 = vmatpush1.bf16.msra.mxu0 0
      %401 = vmatprep.subr.bf16.mxu0 0
      %402 = vmatpush1.bf16.msra.mxu0 0
      %403 = vmatprep.subr.bf16.mxu0 0
      %404 = vmatpush1.bf16.msra.mxu0 0
      %405 = vmatprep.subr.bf16.mxu0 0
      %406 = vmatpush1.bf16.msra.mxu0 0
      %407 = vmatprep.subr.bf16.mxu0 0
      %408 = vmatpush1.bf16.msra.mxu0 0
      %409 = vmatprep.mubr.bf16.mxu0 0
      %410 = vmatmul.mubr.bf16.gmra.mrb[0].mxu0 %v322
      %v411 = vpop.f32.mrb[0].mxu0
      %v412 = vadd.f32 %v327, %v411
      %v413 = vpop.f32.mrb[0].mxu0
      %v414 = vpop.f32.mrb[0].mxu0
      %v415 = vpop.f32.mrb[0].mxu0
      %416 = vdwg.mxu0
      %v417 = vmul.f32 %v412, 1.702
      %v418 = vxor.u32 %v417, 2147483648
      %v419 = vmul.f32 %v418, 1.442695
      %v420 = vpow.pop %v419
      %v421 = vadd.f32 %v420, 1.0
      %v422 = vrcp.pop %v421
      %v423 = vmul.f32 1.0, %v422
      %v424 = vmul.f32 %v412, %v423
      %v425 = vld [vmem:[%s5] sm:$0x1]
      %v426 = vld [vmem:[%s6] sm:$0x1]
      %427 = vadd.xlane.f32.xlu0 %v424
      %v428 = vpop.xlane.xlu0 %427
      %v429 = vmul.f32 %v428, %v281
      %v430 = vsub.f32 %v424, %v429
      %v431 = vmul.f32 %v430, %v430
      %432 = vadd.xlane.f32.xlu0 %v431
      %v433 = vpop.xlane.xlu0 %432
      %v434 = vmul.f32 %v433, %v281
      %v435 = vadd.f32 %v434, 1e-05
      %v436 = vrsqrt.pop %v435
      %v437 = vmul.f32 %v430, %v436
      %v439 = vlaneseq
      %v440 = vshrl.u32 %v439, 7
      %v441 = vsub.s32 0, %v440
      %v442 = vrot.slane %v425, %v441
      %v444 = vmul.f32 %v437, %v442
      %v446 = vlaneseq
      %v447 = vshrl.u32 %v446, 7
      %v448 = vsub.s32 0, %v447
      %v449 = vrot.slane %v426, %v448
      %v451 = vadd.f32 %v444, %v449
      %v452 = vpack.c.bf16 %v451, %v451
      %453 = vst [vmem:[%s273] sm:$0xf] %v452
      %p454 = scmp.lt.s32.totalorder %s18, 1
      %s455 = scalar_select %p454, %s18, 1
      %s456 = smul.addr %s455, 4
      %s457 = scalar_lea.vmem %s7, %s456
      // Predicated region
      $region49: #{mma_forward.10} parent=47 // pred_check
        %p458 = pneg %p188
      $region50: #{mma_forward.10} parent=47 // pred_check_branch
        %460 = sbr.rel (%p458) target = $region52
      $region51: #{mma_forward.10} parent=47 // pred_region
        _
      $region52: #{mma_forward.10} parent=47 // pred_fallthru
        _
    $region48: #{mma_forward.10} parent=5 // pred_fallthru
      _
    %p461 = scmp.le.s32.totalorder 2, %s13
    // Predicated region
    $region53: #{mma_forward.10} parent=5 // pred_check
      %p462 = pneg %p461
    $region54: #{mma_forward.10} parent=5 // pred_check_branch
      %464 = sbr.rel (%p462) target = $region56
    $region55: #{mma_forward.10} parent=5 // pred_region
      %s465 = ssub.s32 %s13, 2
      // Predicated region
      $region57: #{mma_forward.10} parent=55 // pred_check
        %p466 = pneg %p194
      $region58: #{mma_forward.10} parent=55 // pred_check_branch
        %468 = sbr.rel (%p466) target = $region60
      $region59: #{mma_forward.10} parent=55 // pred_region
        %p469 = scmp.lt.s32.totalorder %s19, 1
        %s470 = scalar_select %p469, %s19, 1
        %s471 = smul.addr %s470, 4
        %s472 = scalar_lea.vmem %s7, %s471
      $region60: #{mma_forward.10} parent=55 // pred_fallthru
        _
    $region56: #{mma_forward.10} parent=5 // pred_fallthru
      _
  $region6: #{mma_forward.10} parent=0 // loop_footer
    %s17 = sadd.s32 1, %s13
  $region7: #{mma_forward.10} parent=0 // loop_footer_branch
    %12 = sbr.rel target = $region3
  $region8: #{mma_forward.10} parent=0 // loop_exit
    _

// kernel: mma_forward.9
$region0: #{mma_forward.9}
  #allocation0 [shape = 'u32[]', space=smem, size = 0x4, offset = 0x4, fixed_abs, tag = 'smem constant byte address 0x4 - core index']
  #allocation1 [shape = 'u32[144,128]{1,0:T(1,128)}', space=vmem, size = 0x12000, scoped, tag = 'internal scratch']
  #allocation2 [shape = 'f32[1,8,128]{2,1,0:T(8,128)}', space=vmem, size = 0x1000, scoped, tag = 'scratch operand']
  %s0 = inlined_call_operand.vmem [shape: bf16[2,8,128], index: 0, kind: input, shape index: {}]
  %s1 = inlined_call_operand.hbm [shape: f32[2,1,128], index: 1, kind: input, shape index: {}]
  %s2 = inlined_call_operand.hbm [shape: f32[2,1,128], index: 2, kind: input, shape index: {}]
  %s3 = inlined_call_operand.vmem [shape: bf16[2,128,384], index: 3, kind: input, shape index: {}]
  %s4 = inlined_call_operand.hbm [shape: f32[2,1,384], index: 4, kind: input, shape index: {}]
  %s5 = inlined_call_operand.hbm [shape: bf16[2,128,128], index: 5, kind: input, shape index: {}]
  %s6 = inlined_call_operand.hbm [shape: f32[2,1,128], index: 6, kind: input, shape index: {}]
  %s7 = inlined_call_operand.hbm [shape: f32[2,1,128], index: 7, kind: input, shape index: {}]
  %s8 = inlined_call_operand.hbm [shape: f32[2,1,128], index: 8, kind: input, shape index: {}]
  %s9 = inlined_call_operand.vmem [shape: bf16[2,128,512], index: 9, kind: input, shape index: {}]
  %s10 = inlined_call_operand.hbm [shape: f32[2,1,512], index: 10, kind: input, shape index: {}]
  %s11 = inlined_call_operand.hbm [shape: bf16[2,512,128], index: 11, kind: input, shape index: {}]
  %s12 = inlined_call_operand.hbm [shape: f32[2,1,128], index: 12, kind: input, shape index: {}]
  %s13 = inlined_call_operand.vmem [shape: bf16[2,8,128], index: 13, kind: output, shape index: {}]
  %s14 = sld [smem:[#allocation0]]
  $region133: #{mma_forward.9} parent=0
    _
  %s16 = ssub.s32 1, %s14
  %s17 = scalar_select 0, %s16, %s14
  $region1: #{mma_forward.9} parent=0
    #allocation3 [shape = 'u8[1024]{0}', space=vmem, size = 0x400, scoped, tag = 'input window, operand 1']
    #allocation4 [shape = 's32[2]{0}', space=sflag, size = 0x8, scoped, tag = 'scoped memory for mma_forward.9']
    #allocation5 [shape = 'u8[1024]{0}', space=vmem, size = 0x400, scoped, tag = 'input window, operand 2']
    #allocation6 [shape = 's32[2]{0}', space=sflag, size = 0x8, scoped, tag = 'scoped memory for mma_forward.9']
    #allocation7 [shape = 'u8[3072]{0}', space=vmem, size = 0xc00, scoped, tag = 'input window, operand 4']
    #allocation8 [shape = 'u8[65536]{0}', space=vmem, size = 0x10000, scoped, tag = 'input window, operand 5']
    #allocation9 [shape = 's32[2]{0}', space=sflag, size = 0x8, scoped, tag = 'scoped memory for mma_forward.9']
    #allocation10 [shape = 'u8[1024]{0}', space=vmem, size = 0x400, scoped, tag = 'input window, operand 6']
    #allocation11 [shape = 'u8[1024]{0}', space=vmem, size = 0x400, scoped, tag = 'input window, operand 7']
    #allocation12 [shape = 's32[2]{0}', space=sflag, size = 0x8, scoped, tag = 'scoped memory for mma_forward.9']
    #allocation13 [shape = 'u8[1024]{0}', space=vmem, size = 0x400, scoped, tag = 'input window, operand 8']
    #allocation14 [shape = 'u8[4096]{0}', space=vmem, size = 0x1000, scoped, tag = 'input window, operand 10']
    #allocation15 [shape = 's32[2]{0}', space=sflag, size = 0x8, scoped, tag = 'scoped memory for mma_forward.9']
    #allocation16 [shape = 'u8[262144]{0}', space=vmem, size = 0x40000, scoped, tag = 'input window, operand 11']
    #allocation17 [shape = 'u8[1024]{0}', space=vmem, size = 0x400, scoped, tag = 'input window, operand 12']
    #allocation18 [shape = 's32[2]{0}', space=sflag, size = 0x8, scoped, tag = 'scoped memory for mma_forward.9']
    %18 = vsyncpa [#allocation4], 0
    %s19 = scalar_lea.sflag [#allocation4], 1
    %20 = vsyncpa %s19, 0
    %21 = vsyncpa [#allocation6], 0
    %s22 = scalar_lea.sflag [#allocation6], 1
    %23 = vsyncpa %s22, 0
    %24 = vsyncpa [#allocation9], 0
    %s25 = scalar_lea.sflag [#allocation9], 1
    %26 = vsyncpa %s25, 0
    %27 = vsyncpa [#allocation12], 0
    %s28 = scalar_lea.sflag [#allocation12], 1
    %29 = vsyncpa %s28, 0
    %30 = vsyncpa [#allocation15], 0
    %s31 = scalar_lea.sflag [#allocation15], 1
    %32 = vsyncpa %s31, 0
    %33 = vsyncpa [#allocation18], 0
    %s34 = scalar_lea.sflag [#allocation18], 1
    %35 = vsyncpa %s34, 0
    loop: start=0, step=1, limit=6
    $region2: #{mma_forward.9} parent=1 // loop_pre_header
      _
    $region3: #{mma_forward.9} parent=1 // loop_header
      %s37 = sphi 0, %s41
      %p38 = scmp.ge.s32.totalorder %s37, 6
      %s44 = sphi 0, %s56
      %s45 = sphi 0, %s52
      %s46 = sphi 0, %s44
      %s47 = sphi 0, %s45
      %s48 = sphi 0, %s46
      %s49 = sphi 0, %s47
      %s59 = sphi 0, %s61
      %s62 = sphi 0, %s59
      %s63 = sphi 0, %s62
      %s79 = sphi 0, %s63
      %s85 = sphi 0, %s87
      %s88 = sphi 0, %s85
      %s89 = sphi 0, %s88
      %s105 = sphi 0, %s89
      %s111 = sphi 0, %s113
      %s114 = sphi 0, %s111
      %s115 = sphi 0, %s114
      %s131 = sphi 0, %s115
      %s137 = sphi 0, %s139
      %s140 = sphi 0, %s137
      %s141 = sphi 0, %s140
      %s157 = sphi 0, %s141
      %s163 = sphi 0, %s165
      %s166 = sphi 0, %s163
      %s167 = sphi 0, %s166
      %s183 = sphi 0, %s167
      %s189 = sphi 0, %s191
      %s192 = sphi 0, %s189
      %s193 = sphi 0, %s192
      %s209 = sphi 0, %s193
      %s215 = sphi 0, %s217
      %s218 = sphi 0, %s215
      %s219 = sphi 0, %s218
      %s235 = sphi 0, %s219
      %s241 = sphi 0, %s243
      %s244 = sphi 0, %s241
      %s245 = sphi 0, %s244
      %s261 = sphi 0, %s245
      %s267 = sphi 0, %s269
      %s270 = sphi 0, %s267
      %s271 = sphi 0, %s270
      %s287 = sphi 0, %s271
      %s293 = sphi 0, %s295
      %s296 = sphi 0, %s293
      %s297 = sphi 0, %s296
      %s313 = sphi 0, %s297
      %s319 = sphi 0, %s321
      %s322 = sphi 0, %s319
      %s323 = sphi 0, %s322
      %s339 = sphi 0, %s323
      %s345 = sphi 0, %s347
      %s348 = sphi 0, %s345
      %s349 = sphi 0, %s348
      %s365 = sphi 0, %s349
      %s371 = sphi 0, %s373
      %s374 = sphi 0, %s371
      %s375 = sphi 0, %s374
      %s391 = sphi 0, %s375
      %s397 = sphi 0, %s399
      %s400 = sphi 0, %s397
      %s401 = sphi 0, %s400
      %s417 = sphi 0, %s401
    $region4: #{mma_forward.9} parent=1 // loop_header_branch
      %40 = sbr.rel (%p38) target = $region8
    $region5: #{mma_forward.9} parent=1 // loop_body
      %s42 = ssub.s32 %s37, 1
      %s43 = ssub.s32 %s37, 2
      %s50 = sadd.s32 1, %s45
      %p51 = scmp.ge.s32.totalorder %s50, 2
      %s52 = scalar_select %p51, 0, %s50
      %s53 = sadd.s32 1, %s44
      %s54 = scalar_select %p51, %s53, %s44
      %p55 = scmp.ge.s32.totalorder %s54, 2
      %s56 = scalar_select %p55, 0, %s54
      %s57 = ssub.s32 %s44, %s56
      %p58 = scmp.eq.s32.totalorder %s57, 0
      %s60 = sadd.s32 %s59, 1
      %s61 = scalar_select %p58, %s59, %s60
      %p64 = pneg %p58
      %p65 = scmp.eq.s32.totalorder %s37, 3
      %p66 = por %p64, %p65
      %p67 = scmp.ne.s32.totalorder %s59, %s62
      %p68 = scmp.eq.s32.totalorder %s37, 0
      %p69 = por %p67, %p68
      %p70 = scmp.ne.s32.totalorder %s59, %s62
      %p71 = scmp.eq.s32.totalorder %s42, 3
      %p72 = por %p70, %p71
      %p73 = scmp.ne.s32.totalorder %s62, %s63
      %p74 = scmp.eq.s32.totalorder %s42, 0
      %p75 = por %p73, %p74
      %p76 = scmp.ne.s32.totalorder %s62, %s63
      %p77 = scmp.eq.s32.totalorder %s43, 3
      %p78 = por %p76, %p77
      %p80 = scmp.ne.s32.totalorder %s63, %s79
      %p81 = scmp.eq.s32.totalorder %s43, 0
      %p82 = por %p80, %p81
      %s83 = ssub.s32 %s45, %s52
      %p84 = scmp.eq.s32.totalorder %s83, 0
      %s86 = sadd.s32 %s85, 1
      %s87 = scalar_select %p84, %s85, %s86
      %p90 = pneg %p84
      %p91 = scmp.eq.s32.totalorder %s37, 3
      %p92 = por %p90, %p91
      %p93 = scmp.ne.s32.totalorder %s85, %s88
      %p94 = scmp.eq.s32.totalorder %s37, 0
      %p95 = por %p93, %p94
      %p96 = scmp.ne.s32.totalorder %s85, %s88
      %p97 = scmp.eq.s32.totalorder %s42, 3
      %p98 = por %p96, %p97
      %p99 = scmp.ne.s32.totalorder %s88, %s89
      %p100 = scmp.eq.s32.totalorder %s42, 0
      %p101 = por %p99, %p100
      %p102 = scmp.ne.s32.totalorder %s88, %s89
      %p103 = scmp.eq.s32.totalorder %s43, 3
      %p104 = por %p102, %p103
      %p106 = scmp.ne.s32.totalorder %s89, %s105
      %p107 = scmp.eq.s32.totalorder %s43, 0
      %p108 = por %p106, %p107
      %s109 = ssub.s32 %s45, %s52
      %p110 = scmp.eq.s32.totalorder %s109, 0
      %s112 = sadd.s32 %s111, 1
      %s113 = scalar_select %p110, %s111, %s112
      %p116 = pneg %p110
      %p117 = scmp.eq.s32.totalorder %s37, 3
      %p118 = por %p116, %p117
      %p119 = scmp.ne.s32.totalorder %s111, %s114
      %p120 = scmp.eq.s32.totalorder %s37, 0
      %p121 = por %p119, %p120
      %p122 = scmp.ne.s32.totalorder %s111, %s114
      %p123 = scmp.eq.s32.totalorder %s42, 3
      %p124 = por %p122, %p123
      %p125 = scmp.ne.s32.totalorder %s114, %s115
      %p126 = scmp.eq.s32.totalorder %s42, 0
      %p127 = por %p125, %p126
      %p128 = scmp.ne.s32.totalorder %s114, %s115
      %p129 = scmp.eq.s32.totalorder %s43, 3
      %p130 = por %p128, %p129
      %p132 = scmp.ne.s32.totalorder %s115, %s131
      %p133 = scmp.eq.s32.totalorder %s43, 0
      %p134 = por %p132, %p133
      %s135 = ssub.s32 %s45, %s52
      %p136 = scmp.eq.s32.totalorder %s135, 0
      %s138 = sadd.s32 %s137, 1
      %s139 = scalar_select %p136, %s137, %s138
      %p142 = pneg %p136
      %p143 = scmp.eq.s32.totalorder %s37, 3
      %p144 = por %p142, %p143
      %p145 = scmp.ne.s32.totalorder %s137, %s140
      %p146 = scmp.eq.s32.totalorder %s37, 0
      %p147 = por %p145, %p146
      %p148 = scmp.ne.s32.totalorder %s137, %s140
      %p149 = scmp.eq.s32.totalorder %s42, 3
      %p150 = por %p148, %p149
      %p151 = scmp.ne.s32.totalorder %s140, %s141
      %p152 = scmp.eq.s32.totalorder %s42, 0
      %p153 = por %p151, %p152
      %p154 = scmp.ne.s32.totalorder %s140, %s141
      %p155 = scmp.eq.s32.totalorder %s43, 3
      %p156 = por %p154, %p155
      %p158 = scmp.ne.s32.totalorder %s141, %s157
      %p159 = scmp.eq.s32.totalorder %s43, 0
      %p160 = por %p158, %p159
      %s161 = ssub.s32 %s45, %s52
      %p162 = scmp.eq.s32.totalorder %s161, 0
      %s164 = sadd.s32 %s163, 1
      %s165 = scalar_select %p162, %s163, %s164
      %p168 = pneg %p162
      %p169 = scmp.eq.s32.totalorder %s37, 3
      %p170 = por %p168, %p169
      %p171 = scmp.ne.s32.totalorder %s163, %s166
      %p172 = scmp.eq.s32.totalorder %s37, 0
      %p173 = por %p171, %p172
      %p174 = scmp.ne.s32.totalorder %s163, %s166
      %p175 = scmp.eq.s32.totalorder %s42, 3
      %p176 = por %p174, %p175
      %p177 = scmp.ne.s32.totalorder %s166, %s167
      %p178 = scmp.eq.s32.totalorder %s42, 0
      %p179 = por %p177, %p178
      %p180 = scmp.ne.s32.totalorder %s166, %s167
      %p181 = scmp.eq.s32.totalorder %s43, 3
      %p182 = por %p180, %p181
      %p184 = scmp.ne.s32.totalorder %s167, %s183
      %p185 = scmp.eq.s32.totalorder %s43, 0
      %p186 = por %p184, %p185
      %s187 = ssub.s32 %s45, %s52
      %p188 = scmp.eq.s32.totalorder %s187, 0
      %s190 = sadd.s32 %s189, 1
      %s191 = scalar_select %p188, %s189, %s190
      %p194 = pneg %p188
      %p195 = scmp.eq.s32.totalorder %s37, 3
      %p196 = por %p194, %p195
      %p197 = scmp.ne.s32.totalorder %s189, %s192
      %p198 = scmp.eq.s32.totalorder %s37, 0
      %p199 = por %p197, %p198
      %p200 = scmp.ne.s32.totalorder %s189, %s192
      %p201 = scmp.eq.s32.totalorder %s42, 3
      %p202 = por %p200, %p201
      %p203 = scmp.ne.s32.totalorder %s192, %s193
      %p204 = scmp.eq.s32.totalorder %s42, 0
      %p205 = por %p203, %p204
      %p206 = scmp.ne.s32.totalorder %s192, %s193
      %p207 = scmp.eq.s32.totalorder %s43, 3
      %p208 = por %p206, %p207
      %p210 = scmp.ne.s32.totalorder %s193, %s209
      %p211 = scmp.eq.s32.totalorder %s43, 0
      %p212 = por %p210, %p211
      %s213 = ssub.s32 %s45, %s52
      %p214 = scmp.eq.s32.totalorder %s213, 0
      %s216 = sadd.s32 %s215, 1
      %s217 = scalar_select %p214, %s215, %s216
      %p220 = pneg %p214
      %p221 = scmp.eq.s32.totalorder %s37, 3
      %p222 = por %p220, %p221
      %p223 = scmp.ne.s32.totalorder %s215, %s218
      %p224 = scmp.eq.s32.totalorder %s37, 0
      %p225 = por %p223, %p224
      %p226 = scmp.ne.s32.totalorder %s215, %s218
      %p227 = scmp.eq.s32.totalorder %s42, 3
      %p228 = por %p226, %p227
      %p229 = scmp.ne.s32.totalorder %s218, %s219
      %p230 = scmp.eq.s32.totalorder %s42, 0
      %p231 = por %p229, %p230
      %p232 = scmp.ne.s32.totalorder %s218, %s219
      %p233 = scmp.eq.s32.totalorder %s43, 3
      %p234 = por %p232, %p233
      %p236 = scmp.ne.s32.totalorder %s219, %s235
      %p237 = scmp.eq.s32.totalorder %s43, 0
      %p238 = por %p236, %p237
      %s239 = ssub.s32 %s45, %s52
      %p240 = scmp.eq.s32.totalorder %s239, 0
      %s242 = sadd.s32 %s241, 1
      %s243 = scalar_select %p240, %s241, %s242
      %p246 = pneg %p240
      %p247 = scmp.eq.s32.totalorder %s37, 3
      %p248 = por %p246, %p247
      %p249 = scmp.ne.s32.totalorder %s241, %s244
      %p250 = scmp.eq.s32.totalorder %s37, 0
      %p251 = por %p249, %p250
      %p252 = scmp.ne.s32.totalorder %s241, %s244
      %p253 = scmp.eq.s32.totalorder %s42, 3
      %p254 = por %p252, %p253
      %p255 = scmp.ne.s32.totalorder %s244, %s245
      %p256 = scmp.eq.s32.totalorder %s42, 0
      %p257 = por %p255, %p256
      %p258 = scmp.ne.s32.totalorder %s244, %s245
      %p259 = scmp.eq.s32.totalorder %s43, 3
      %p260 = por %p258, %p259
      %p262 = scmp.ne.s32.totalorder %s245, %s261
      %p263 = scmp.eq.s32.totalorder %s43, 0
      %p264 = por %p262, %p263
      %s265 = ssub.s32 %s45, %s52
      %p266 = scmp.eq.s32.totalorder %s265, 0
      %s268 = sadd.s32 %s267, 1
      %s269 = scalar_select %p266, %s267, %s268
      %p272 = pneg %p266
      %p273 = scmp.eq.s32.totalorder %s37, 3
      %p274 = por %p272, %p273
      %p275 = scmp.ne.s32.totalorder %s267, %s270
      %p276 = scmp.eq.s32.totalorder %s37, 0
      %p277 = por %p275, %p276
      %p278 = scmp.ne.s32.totalorder %s267, %s270
      %p279 = scmp.eq.s32.totalorder %s42, 3
      %p280 = por %p278, %p279
      %p281 = scmp.ne.s32.totalorder %s270, %s271
      %p282 = scmp.eq.s32.totalorder %s42, 0
      %p283 = por %p281, %p282
      %p284 = scmp.ne.s32.totalorder %s270, %s271
      %p285 = scmp.eq.s32.totalorder %s43, 3
      %p286 = por %p284, %p285
      %p288 = scmp.ne.s32.totalorder %s271, %s287
      %p289 = scmp.eq.s32.totalorder %s43, 0
      %p290 = por %p288, %p289
      %s291 = ssub.s32 %s45, %s52
      %p292 = scmp.eq.s32.totalorder %s291, 0
      %s294 = sadd.s32 %s293, 1
      %s295 = scalar_select %p292, %s293, %s294
      %p298 = pneg %p292
      %p299 = scmp.eq.s32.totalorder %s37, 3
      %p300 = por %p298, %p299
      %p301 = scmp.ne.s32.totalorder %s293, %s296
      %p302 = scmp.eq.s32.totalorder %s37, 0
      %p303 = por %p301, %p302
      %p304 = scmp.ne.s32.totalorder %s293, %s296
      %p305 = scmp.eq.s32.totalorder %s42, 3
      %p306 = por %p304, %p305
      %p307 = scmp.ne.s32.totalorder %s296, %s297
      %p308 = scmp.eq.s32.totalorder %s42, 0
      %p309 = por %p307, %p308
      %p310 = scmp.ne.s32.totalorder %s296, %s297
      %p311 = scmp.eq.s32.totalorder %s43, 3
      %p312 = por %p310, %p311
      %p314 = scmp.ne.s32.totalorder %s297, %s313
      %p315 = scmp.eq.s32.totalorder %s43, 0
      %p316 = por %p314, %p315
      %s317 = ssub.s32 %s45, %s52
      %p318 = scmp.eq.s32.totalorder %s317, 0
      %s320 = sadd.s32 %s319, 1
      %s321 = scalar_select %p318, %s319, %s320
      %p324 = pneg %p318
      %p325 = scmp.eq.s32.totalorder %s37, 3
      %p326 = por %p324, %p325
      %p327 = scmp.ne.s32.totalorder %s319, %s322
      %p328 = scmp.eq.s32.totalorder %s37, 0
      %p329 = por %p327, %p328
      %p330 = scmp.ne.s32.totalorder %s319, %s322
      %p331 = scmp.eq.s32.totalorder %s42, 3
      %p332 = por %p330, %p331
      %p333 = scmp.ne.s32.totalorder %s322, %s323
      %p334 = scmp.eq.s32.totalorder %s42, 0
      %p335 = por %p333, %p334
      %p336 = scmp.ne.s32.totalorder %s322, %s323
      %p337 = scmp.eq.s32.totalorder %s43, 3
      %p338 = por %p336, %p337
      %p340 = scmp.ne.s32.totalorder %s323, %s339
      %p341 = scmp.eq.s32.totalorder %s43, 0
      %p342 = por %p340, %p341
      %s343 = ssub.s32 %s45, %s52
      %p344 = scmp.eq.s32.totalorder %s343, 0
      %s346 = sadd.s32 %s345, 1
      %s347 = scalar_select %p344, %s345, %s346
      %p350 = pneg %p344
      %p351 = scmp.eq.s32.totalorder %s37, 3
      %p352 = por %p350, %p351
      %p353 = scmp.ne.s32.totalorder %s345, %s348
      %p354 = scmp.eq.s32.totalorder %s37, 0
      %p355 = por %p353, %p354
      %p356 = scmp.ne.s32.totalorder %s345, %s348
      %p357 = scmp.eq.s32.totalorder %s42, 3
      %p358 = por %p356, %p357
      %p359 = scmp.ne.s32.totalorder %s348, %s349
      %p360 = scmp.eq.s32.totalorder %s42, 0
      %p361 = por %p359, %p360
      %p362 = scmp.ne.s32.totalorder %s348, %s349
      %p363 = scmp.eq.s32.totalorder %s43, 3
      %p364 = por %p362, %p363
      %p366 = scmp.ne.s32.totalorder %s349, %s365
      %p367 = scmp.eq.s32.totalorder %s43, 0
      %p368 = por %p366, %p367
      %s369 = ssub.s32 %s45, %s52
      %p370 = scmp.eq.s32.totalorder %s369, 0
      %s372 = sadd.s32 %s371, 1
      %s373 = scalar_select %p370, %s371, %s372
      %p376 = pneg %p370
      %p377 = scmp.eq.s32.totalorder %s37, 3
      %p378 = por %p376, %p377
      %p379 = scmp.ne.s32.totalorder %s371, %s374
      %p380 = scmp.eq.s32.totalorder %s37, 0
      %p381 = por %p379, %p380
      %p382 = scmp.ne.s32.totalorder %s371, %s374
      %p383 = scmp.eq.s32.totalorder %s42, 3
      %p384 = por %p382, %p383
      %p385 = scmp.ne.s32.totalorder %s374, %s375
      %p386 = scmp.eq.s32.totalorder %s42, 0
      %p387 = por %p385, %p386
      %p388 = scmp.ne.s32.totalorder %s374, %s375
      %p389 = scmp.eq.s32.totalorder %s43, 3
      %p390 = por %p388, %p389
      %p392 = scmp.ne.s32.totalorder %s375, %s391
      %p393 = scmp.eq.s32.totalorder %s43, 0
      %p394 = por %p392, %p393
      %s395 = ssub.s32 %s44, %s56
      %p396 = scmp.eq.s32.totalorder %s395, 0
      %s398 = sadd.s32 %s397, 1
      %s399 = scalar_select %p396, %s397, %s398
      %p402 = pneg %p396
      %p403 = scmp.eq.s32.totalorder %s37, 3
      %p404 = por %p402, %p403
      %p405 = scmp.ne.s32.totalorder %s397, %s400
      %p406 = scmp.eq.s32.totalorder %s37, 0
      %p407 = por %p405, %p406
      %p408 = scmp.ne.s32.totalorder %s397, %s400
      %p409 = scmp.eq.s32.totalorder %s42, 3
      %p410 = por %p408, %p409
      %p411 = scmp.ne.s32.totalorder %s400, %s401
      %p412 = scmp.eq.s32.totalorder %s42, 0
      %p413 = por %p411, %p412
      %p414 = scmp.ne.s32.totalorder %s400, %s401
      %p415 = scmp.eq.s32.totalorder %s43, 3
      %p416 = por %p414, %p415
      %p418 = scmp.ne.s32.totalorder %s401, %s417
      %p419 = scmp.eq.s32.totalorder %s43, 0
      %p420 = por %p418, %p419
      %p421 = scmp.le.s32.totalorder 1, %s37
      %p422 = scmp.lt.s32.totalorder %s37, 5
      %p423 = pnand %p421, %p422
      %p424 = pneg %p423
      // Predicated region
      $region9: #{mma_forward.9} parent=5 // pred_check
        _
      $region10: #{mma_forward.9} parent=5 // pred_check_branch
        %426 = sbr.rel (%p423) target = $region12
      $region11: #{mma_forward.9} parent=5 // pred_region
        %s427 = ssub.s32 %s37, 1
      $region12: #{mma_forward.9} parent=5 // pred_fallthru
        _
      %p428 = scmp.lt.s32.totalorder %s37, 4
      // Predicated region
      $region13: #{mma_forward.9} parent=5 // pred_check
        %p429 = pneg %p428
      $region14: #{mma_forward.9} parent=5 // pred_check_branch
        %431 = sbr.rel (%p429) target = $region16
      $region15: #{mma_forward.9} parent=5 // pred_region
        // Predicated region
        $region17: #{mma_forward.9} parent=15 // pred_check
          %p432 = pneg %p69
        $region18: #{mma_forward.9} parent=15 // pred_check_branch
          %434 = sbr.rel (%p432) target = $region20
        $region19: #{mma_forward.9} parent=15 // pred_region
          %p435 = scmp.lt.s32.totalorder %s44, 1
          %s436 = scalar_select %p435, %s44, 1
          %s437 = smul.addr %s436, 4
          %s438 = scalar_lea.vmem %s0, %s437
        $region20: #{mma_forward.9} parent=15 // pred_fallthru
          _
        // Predicated region
        $region21: #{mma_forward.9} parent=15 // pred_check
          %p439 = pneg %p95
        $region22: #{mma_forward.9} parent=15 // pred_check_branch
          %441 = sbr.rel (%p439) target = $region24
        $region23: #{mma_forward.9} parent=15 // pred_region
          %s442 = sand.u32 %s85, 1
          %s443 = scalar_lea.sflag [#allocation4], %s442
          %s444 = sand.u32 %s85, 1
          %s445 = scalar_lea.vmem [#allocation3], %s444
          %s447 = ssub.s32 16, 16
          %448 = vsyncadd %s443, %s447
          %s449 = smul.addr %s45, 16
          %s450 = scalar_lea.hbm %s1, %s449
          %s452 = sshll.u32 %s445, 4
          %s453 = int_to_ptr.vmem [resolvable:$true] %s452
          %455 = dma.hbm_to_vmem [thread:$0]  %s450, 16, %s453, %s443
        $region24: #{mma_forward.9} parent=15 // pred_fallthru
          _
        // Predicated region
        $region25: #{mma_forward.9} parent=15 // pred_check
          %p456 = pneg %p121
        $region26: #{mma_forward.9} parent=15 // pred_check_branch
          %458 = sbr.rel (%p456) target = $region28
        $region27: #{mma_forward.9} parent=15 // pred_region
          %s459 = sand.u32 %s37, 1
          %s460 = scalar_lea.sflag [#allocation6], %s459
          %s461 = sand.u32 %s111, 1
          %s462 = scalar_lea.vmem [#allocation5], %s461
          %s464 = ssub.s32 16, 16
          %465 = vsyncadd %s460, %s464
          %s466 = smul.addr %s45, 16
          %s467 = scalar_lea.hbm %s2, %s466
          %s469 = sshll.u32 %s462, 4
          %s470 = int_to_ptr.vmem [resolvable:$true] %s469
          %472 = dma.hbm_to_vmem [thread:$0]  %s467, 16, %s470, %s460
        $region28: #{mma_forward.9} parent=15 // pred_fallthru
          _
        // Predicated region
        $region29: #{mma_forward.9} parent=15 // pred_check
          %p473 = pneg %p147
        $region30: #{mma_forward.9} parent=15 // pred_check_branch
          %475 = sbr.rel (%p473) target = $region32
        $region31: #{mma_forward.9} parent=15 // pred_region
          %p476 = scmp.lt.s32.totalorder %s45, 1
          %s477 = scalar_select %p476, %s45, 1
          %s478 = smul.addr %s477, 48
          %s479 = smul.addr %s478, 4
          %s480 = scalar_lea.vmem %s3, %s479
        $region32: #{mma_forward.9} parent=15 // pred_fallthru
          _
        // Predicated region
        $region33: #{mma_forward.9} parent=15 // pred_check
          %p481 = pneg %p173
        $region34: #{mma_forward.9} parent=15 // pred_check_branch
          %483 = sbr.rel (%p481) target = $region36
        $region35: #{mma_forward.9} parent=15 // pred_region
          %s484 = sand.u32 %s37, 1
          %s485 = scalar_lea.sflag [#allocation6], %s484
          %s486 = sand.u32 %s163, 1
          %s487 = smul.addr %s486, 3
          %s488 = scalar_lea.vmem [#allocation7], %s487
          %s490 = ssub.s32 48, 48
          %491 = vsyncadd %s485, %s490
          %s492 = smul.addr %s45, 3
          %s493 = smul.addr %s492, 16
          %s494 = scalar_lea.hbm %s4, %s493
          %s496 = sshll.u32 %s488, 4
          %s497 = int_to_ptr.vmem [resolvable:$true] %s496
          %499 = dma.hbm_to_vmem [thread:$0]  %s494, 48, %s497, %s485
        $region36: #{mma_forward.9} parent=15 // pred_fallthru
          _
        // Predicated region
        $region37: #{mma_forward.9} parent=15 // pred_check
          %p500 = pneg %p199
        $region38: #{mma_forward.9} parent=15 // pred_check_branch
          %502 = sbr.rel (%p500) target = $region40
        $region39: #{mma_forward.9} parent=15 // pred_region
          %s503 = sand.u32 %s37, 1
          %s504 = scalar_lea.sflag [#allocation9], %s503
          %s505 = sand.u32 %s189, 1
          %s506 = smul.addr %s505, 64
          %s507 = scalar_lea.vmem [#allocation8], %s506
          %s509 = ssub.s32 1024, 1024
          %510 = vsyncadd %s504, %s509
          %s511 = smul.addr %s45, 16
          %s512 = smul.addr %s511, 64
          %s513 = scalar_lea.hbm %s5, %s512
          %s514 = sshll.u32 %s507, 4
          %s515 = int_to_ptr.vmem [resolvable:$true] %s514
          %520 = dma.hbm_to_vmem [thread:$0]  %s513, 1024, %s515, %s504, 64, 64, 4
        $region40: #{mma_forward.9} parent=15 // pred_fallthru
          _
        // Predicated region
        $region41: #{mma_forward.9} parent=15 // pred_check
          %p521 = pneg %p225
        $region42: #{mma_forward.9} parent=15 // pred_check_branch
          %523 = sbr.rel (%p521) target = $region44
        $region43: #{mma_forward.9} parent=15 // pred_region
          %s524 = sand.u32 %s37, 1
          %s525 = scalar_lea.sflag [#allocation9], %s524
          %s526 = sand.u32 %s215, 1
          %s527 = scalar_lea.vmem [#allocation10], %s526
          %s529 = ssub.s32 16, 16
          %530 = vsyncadd %s525, %s529
          %s531 = smul.addr %s45, 16
          %s532 = scalar_lea.hbm %s6, %s531
          %s534 = sshll.u32 %s527, 4
          %s535 = int_to_ptr.vmem [resolvable:$true] %s534
          %537 = dma.hbm_to_vmem [thread:$0]  %s532, 16, %s535, %s525
        $region44: #{mma_forward.9} parent=15 // pred_fallthru
          _
        // Predicated region
        $region45: #{mma_forward.9} parent=15 // pred_check
          %p538 = pneg %p251
        $region46: #{mma_forward.9} parent=15 // pred_check_branch
          %540 = sbr.rel (%p538) target = $region48
        $region47: #{mma_forward.9} parent=15 // pred_region
          %s541 = sand.u32 %s37, 1
          %s542 = scalar_lea.sflag [#allocation12], %s541
          %s543 = sand.u32 %s241, 1
          %s544 = scalar_lea.vmem [#allocation11], %s543
          %s546 = ssub.s32 16, 16
          %547 = vsyncadd %s542, %s546
          %s548 = smul.addr %s45, 16
          %s549 = scalar_lea.hbm %s7, %s548
          %s551 = sshll.u32 %s544, 4
          %s552 = int_to_ptr.vmem [resolvable:$true] %s551
          %554 = dma.hbm_to_vmem [thread:$0]  %s549, 16, %s552, %s542
        $region48: #{mma_forward.9} parent=15 // pred_fallthru
          _
        // Predicated region
        $region49: #{mma_forward.9} parent=15 // pred_check
          %p555 = pneg %p277
        $region50: #{mma_forward.9} parent=15 // pred_check_branch
          %557 = sbr.rel (%p555) target = $region52
        $region51: #{mma_forward.9} parent=15 // pred_region
          %s558 = sand.u32 %s37, 1
          %s559 = scalar_lea.sflag [#allocation12], %s558
          %s560 = sand.u32 %s267, 1
          %s561 = scalar_lea.vmem [#allocation13], %s560
          %s563 = ssub.s32 16, 16
          %564 = vsyncadd %s559, %s563
          %s565 = smul.addr %s45, 16
          %s566 = scalar_lea.hbm %s8, %s565
          %s568 = sshll.u32 %s561, 4
          %s569 = int_to_ptr.vmem [resolvable:$true] %s568
          %571 = dma.hbm_to_vmem [thread:$0]  %s566, 16, %s569, %s559
        $region52: #{mma_forward.9} parent=15 // pred_fallthru
          _
        // Predicated region
        $region53: #{mma_forward.9} parent=15 // pred_check
          %p572 = pneg %p303
        $region54: #{mma_forward.9} parent=15 // pred_check_branch
          %574 = sbr.rel (%p572) target = $region56
        $region55: #{mma_forward.9} parent=15 // pred_region
          %p575 = scmp.lt.s32.totalorder %s45, 1
          %s576 = scalar_select %p575, %s45, 1
          %s577 = smul.addr %s576, 64
          %s578 = smul.addr %s577, 4
          %s579 = scalar_lea.vmem %s9, %s578
        $region56: #{mma_forward.9} parent=15 // pred_fallthru
          _
        // Predicated region
        $region57: #{mma_forward.9} parent=15 // pred_check
          %p580 = pneg %p329
        $region58: #{mma_forward.9} parent=15 // pred_check_branch
          %582 = sbr.rel (%p580) target = $region60
        $region59: #{mma_forward.9} parent=15 // pred_region
          %s583 = sand.u32 %s37, 1
          %s584 = scalar_lea.sflag [#allocation15], %s583
          %s585 = sand.u32 %s319, 1
          %s586 = smul.addr %s585, 4
          %s587 = scalar_lea.vmem [#allocation14], %s586
          %s589 = ssub.s32 64, 64
          %590 = vsyncadd %s584, %s589
          %s591 = smul.addr %s45, 4
          %s592 = smul.addr %s591, 16
          %s593 = scalar_lea.hbm %s10, %s592
          %s595 = sshll.u32 %s587, 4
          %s596 = int_to_ptr.vmem [resolvable:$true] %s595
          %598 = dma.hbm_to_vmem [thread:$0]  %s593, 64, %s596, %s584
        $region60: #{mma_forward.9} parent=15 // pred_fallthru
          _
        // Predicated region
        $region61: #{mma_forward.9} parent=15 // pred_check
          %p599 = pneg %p355
        $region62: #{mma_forward.9} parent=15 // pred_check_branch
          %601 = sbr.rel (%p599) target = $region64
        $region63: #{mma_forward.9} parent=15 // pred_region
          %s602 = sand.u32 %s37, 1
          %s603 = scalar_lea.sflag [#allocation15], %s602
          %s604 = sand.u32 %s345, 1
          %s605 = smul.addr %s604, 256
          %s606 = scalar_lea.vmem [#allocation16], %s605
          %s608 = ssub.s32 4096, 4096
          %609 = vsyncadd %s603, %s608
          %s610 = smul.addr %s45, 64
          %s611 = smul.addr %s610, 64
          %s612 = scalar_lea.hbm %s11, %s611
          %s613 = sshll.u32 %s606, 4
          %s614 = int_to_ptr.vmem [resolvable:$true] %s613
          %619 = dma.hbm_to_vmem [thread:$0]  %s612, 4096, %s614, %s603, 64, 64, 4
        $region64: #{mma_forward.9} parent=15 // pred_fallthru
          _
        // Predicated region
        $region65: #{mma_forward.9} parent=15 // pred_check
          %p620 = pneg %p381
        $region66: #{mma_forward.9} parent=15 // pred_check_branch
          %622 = sbr.rel (%p620) target = $region68
        $region67: #{mma_forward.9} parent=15 // pred_region
          %s623 = sand.u32 %s371, 1
          %s624 = scalar_lea.sflag [#allocation18], %s623
          %s625 = sand.u32 %s371, 1
          %s626 = scalar_lea.vmem [#allocation17], %s625
          %s628 = ssub.s32 16, 16
          %629 = vsyncadd %s624, %s628
          %s630 = smul.addr %s45, 16
          %s631 = scalar_lea.hbm %s12, %s630
          %s633 = sshll.u32 %s626, 4
          %s634 = int_to_ptr.vmem [resolvable:$true] %s633
          %636 = dma.hbm_to_vmem [thread:$0]  %s631, 16, %s634, %s624
        $region68: #{mma_forward.9} parent=15 // pred_fallthru
          _
      $region16: #{mma_forward.9} parent=5 // pred_fallthru
        _
      %p637 = scmp.le.s32.totalorder 1, %s37
      %p638 = scmp.lt.s32.totalorder %s37, 5
      %p639 = pnand %p637, %p638
      %p640 = pneg %p639
      // Predicated region
      $region69: #{mma_forward.9} parent=5 // pred_check
        _
      $region70: #{mma_forward.9} parent=5 // pred_check_branch
        %642 = sbr.rel (%p639) target = $region72
      $region71: #{mma_forward.9} parent=5 // pred_region
        %s643 = ssub.s32 %s37, 1
        %s644 = sand.u32 %s88, 1
        %s645 = scalar_lea.sflag [#allocation4], %s644
        %s646 = sand.u32 %s88, 1
        %s647 = scalar_lea.vmem [#allocation3], %s646
        // Predicated region
        $region73: #{mma_forward.9} parent=71 // pred_check
          %p648 = pneg %p101
        $region74: #{mma_forward.9} parent=71 // pred_check_branch
          %650 = sbr.rel (%p648) target = $region76
        $region75: #{mma_forward.9} parent=71 // pred_region
          %651 = dma.done %s645, 16
        $region76: #{mma_forward.9} parent=71 // pred_fallthru
          _
        %s652 = sand.u32 %s42, 1
        %s653 = scalar_lea.sflag [#allocation6], %s652
        %s654 = sand.u32 %s114, 1
        %s655 = scalar_lea.vmem [#allocation5], %s654
        // Predicated region
        $region77: #{mma_forward.9} parent=71 // pred_check
          %p656 = pneg %p127
        $region78: #{mma_forward.9} parent=71 // pred_check_branch
          %658 = sbr.rel (%p656) target = $region80
        $region79: #{mma_forward.9} parent=71 // pred_region
          %659 = dma.done %s653, 16
        $region80: #{mma_forward.9} parent=71 // pred_fallthru
          _
        %s660 = sand.u32 %s42, 1
        %s661 = scalar_lea.sflag [#allocation6], %s660
        %s662 = sand.u32 %s166, 1
        %s663 = smul.addr %s662, 3
        %s664 = scalar_lea.vmem [#allocation7], %s663
        // Predicated region
        $region81: #{mma_forward.9} parent=71 // pred_check
          %p665 = pneg %p179
        $region82: #{mma_forward.9} parent=71 // pred_check_branch
          %667 = sbr.rel (%p665) target = $region84
        $region83: #{mma_forward.9} parent=71 // pred_region
          %668 = dma.done %s661, 48
        $region84: #{mma_forward.9} parent=71 // pred_fallthru
          _
        %s669 = sand.u32 %s42, 1
        %s670 = scalar_lea.sflag [#allocation9], %s669
        %s671 = sand.u32 %s192, 1
        %s672 = smul.addr %s671, 64
        %s673 = scalar_lea.vmem [#allocation8], %s672
        // Predicated region
        $region85: #{mma_forward.9} parent=71 // pred_check
          %p674 = pneg %p205
        $region86: #{mma_forward.9} parent=71 // pred_check_branch
          %676 = sbr.rel (%p674) target = $region88
        $region87: #{mma_forward.9} parent=71 // pred_region
          %677 = dma.done %s670, 1024
        $region88: #{mma_forward.9} parent=71 // pred_fallthru
          _
        %s678 = sand.u32 %s42, 1
        %s679 = scalar_lea.sflag [#allocation9], %s678
        %s680 = sand.u32 %s218, 1
        %s681 = scalar_lea.vmem [#allocation10], %s680
        // Predicated region
        $region89: #{mma_forward.9} parent=71 // pred_check
          %p682 = pneg %p231
        $region90: #{mma_forward.9} parent=71 // pred_check_branch
          %684 = sbr.rel (%p682) target = $region92
        $region91: #{mma_forward.9} parent=71 // pred_region
          %685 = dma.done %s679, 16
        $region92: #{mma_forward.9} parent=71 // pred_fallthru
          _
        %s686 = sand.u32 %s42, 1
        %s687 = scalar_lea.sflag [#allocation12], %s686
        %s688 = sand.u32 %s244, 1
        %s689 = scalar_lea.vmem [#allocation11], %s688
        // Predicated region
        $region93: #{mma_forward.9} parent=71 // pred_check
          %p690 = pneg %p257
        $region94: #{mma_forward.9} parent=71 // pred_check_branch
          %692 = sbr.rel (%p690) target = $region96
        $region95: #{mma_forward.9} parent=71 // pred_region
          %693 = dma.done %s687, 16
        $region96: #{mma_forward.9} parent=71 // pred_fallthru
          _
        %s694 = sand.u32 %s42, 1
        %s695 = scalar_lea.sflag [#allocation12], %s694
        %s696 = sand.u32 %s270, 1
        %s697 = scalar_lea.vmem [#allocation13], %s696
        // Predicated region
        $region97: #{mma_forward.9} parent=71 // pred_check
          %p698 = pneg %p283
        $region98: #{mma_forward.9} parent=71 // pred_check_branch
          %700 = sbr.rel (%p698) target = $region100
        $region99: #{mma_forward.9} parent=71 // pred_region
          %701 = dma.done %s695, 16
        $region100: #{mma_forward.9} parent=71 // pred_fallthru
          _
        %s702 = sand.u32 %s42, 1
        %s703 = scalar_lea.sflag [#allocation15], %s702
        %s704 = sand.u32 %s322, 1
        %s705 = smul.addr %s704, 4
        %s706 = scalar_lea.vmem [#allocation14], %s705
        // Predicated region
        $region101: #{mma_forward.9} parent=71 // pred_check
          %p707 = pneg %p335
        $region102: #{mma_forward.9} parent=71 // pred_check_branch
          %709 = sbr.rel (%p707) target = $region104
        $region103: #{mma_forward.9} parent=71 // pred_region
          %710 = dma.done %s703, 64
        $region104: #{mma_forward.9} parent=71 // pred_fallthru
          _
        %s711 = sand.u32 %s42, 1
        %s712 = scalar_lea.sflag [#allocation15], %s711
        %s713 = sand.u32 %s348, 1
        %s714 = smul.addr %s713, 256
        %s715 = scalar_lea.vmem [#allocation16], %s714
        // Predicated region
        $region105: #{mma_forward.9} parent=71 // pred_check
          %p716 = pneg %p361
        $region106: #{mma_forward.9} parent=71 // pred_check_branch
          %718 = sbr.rel (%p716) target = $region108
        $region107: #{mma_forward.9} parent=71 // pred_region
          %719 = dma.done %s712, 4096
        $region108: #{mma_forward.9} parent=71 // pred_fallthru
          _
        %s720 = sand.u32 %s374, 1
        %s721 = scalar_lea.sflag [#allocation18], %s720
        %s722 = sand.u32 %s374, 1
        %s723 = scalar_lea.vmem [#allocation17], %s722
        // Predicated region
        $region109: #{mma_forward.9} parent=71 // pred_check
          %p724 = pneg %p387
        $region110: #{mma_forward.9} parent=71 // pred_check_branch
          %726 = sbr.rel (%p724) target = $region112
        $region111: #{mma_forward.9} parent=71 // pred_region
          %727 = dma.done %s721, 16
        $region112: #{mma_forward.9} parent=71 // pred_fallthru
          _
        %p728 = scmp.lt.s32.totalorder %s46, 1
        %s729 = scalar_select %p728, %s46, 1
        %s730 = smul.addr %s729, 4
        %s731 = scalar_lea.vmem %s0, %s730
        %p732 = pneg %p75
        %p733 = pneg %p72
        %s734 = sand.u32 %s88, 1
        %s735 = scalar_lea.sflag [#allocation4], %s734
        %s736 = sand.u32 %s88, 1
        %s737 = scalar_lea.vmem [#allocation3], %s736
        %p738 = pneg %p101
        %p739 = pneg %p98
        %s740 = sand.u32 %s42, 1
        %s741 = scalar_lea.sflag [#allocation6], %s740
        %s742 = sand.u32 %s114, 1
        %s743 = scalar_lea.vmem [#allocation5], %s742
        %p744 = pneg %p127
        %p745 = pneg %p124
        %p746 = scmp.lt.s32.totalorder %s47, 1
        %s747 = scalar_select %p746, %s47, 1
        %s748 = smul.addr %s747, 48
        %s749 = smul.addr %s748, 4
        %s750 = scalar_lea.vmem %s3, %s749
        %p751 = pneg %p153
        %p752 = pneg %p150
        %s753 = sand.u32 %s42, 1
        %s754 = scalar_lea.sflag [#allocation6], %s753
        %s755 = sand.u32 %s166, 1
        %s756 = smul.addr %s755, 3
        %s757 = scalar_lea.vmem [#allocation7], %s756
        %p758 = pneg %p179
        %p759 = pneg %p176
        %s760 = sand.u32 %s42, 1
        %s761 = scalar_lea.sflag [#allocation9], %s760
        %s762 = sand.u32 %s192, 1
        %s763 = smul.addr %s762, 64
        %s764 = scalar_lea.vmem [#allocation8], %s763
        %p765 = pneg %p205
        %p766 = pneg %p202
        %s767 = sand.u32 %s42, 1
        %s768 = scalar_lea.sflag [#allocation9], %s767
        %s769 = sand.u32 %s218, 1
        %s770 = scalar_lea.vmem [#allocation10], %s769
        %p771 = pneg %p231
        %p772 = pneg %p228
        %s773 = sand.u32 %s42, 1
        %s774 = scalar_lea.sflag [#allocation12], %s773
        %s775 = sand.u32 %s244, 1
        %s776 = scalar_lea.vmem [#allocation11], %s775
        %p777 = pneg %p257
        %p778 = pneg %p254
        %s779 = sand.u32 %s42, 1
        %s780 = scalar_lea.sflag [#allocation12], %s779
        %s781 = sand.u32 %s270, 1
        %s782 = scalar_lea.vmem [#allocation13], %s781
        %p783 = pneg %p283
        %p784 = pneg %p280
        %p785 = scmp.lt.s32.totalorder %s47, 1
        %s786 = scalar_select %p785, %s47, 1
        %s787 = smul.addr %s786, 64
        %s788 = smul.addr %s787, 4
        %s789 = scalar_lea.vmem %s9, %s788
        %p790 = pneg %p309
        %p791 = pneg %p306
        %s792 = sand.u32 %s42, 1
        %s793 = scalar_lea.sflag [#allocation15], %s792
        %s794 = sand.u32 %s322, 1
        %s795 = smul.addr %s794, 4
        %s796 = scalar_lea.vmem [#allocation14], %s795
        %p797 = pneg %p335
        %p798 = pneg %p332
        %s799 = sand.u32 %s42, 1
        %s800 = scalar_lea.sflag [#allocation15], %s799
        %s801 = sand.u32 %s348, 1
        %s802 = smul.addr %s801, 256
        %s803 = scalar_lea.vmem [#allocation16], %s802
        %p804 = pneg %p361
        %p805 = pneg %p358
        %s806 = sand.u32 %s374, 1
        %s807 = scalar_lea.sflag [#allocation18], %s806
        %s808 = sand.u32 %s374, 1
        %s809 = scalar_lea.vmem [#allocation17], %s808
        %p810 = pneg %p387
        %p811 = pneg %p384
        %p812 = pneg %p413
        %p813 = pneg %p410
        %p814 = scmp.lt.s32.totalorder %s46, 1
        %s815 = scalar_select %p814, %s46, 1
        %s816 = smul.addr %s815, 4
        %s817 = scalar_lea.vmem %s13, %s816
        %p818 = scmp.lt.s32.totalorder %s46, 1
        %s819 = scalar_select %p818, %s46, 1
        %s820 = smul.addr %s819, 4
        %s821 = scalar_lea.vmem %s0, %s820
        %p822 = scmp.lt.s32.totalorder %s47, 1
        %s823 = scalar_select %p822, %s47, 1
        %s824 = smul.addr %s823, 48
        %s825 = smul.addr %s824, 4
        %s826 = scalar_lea.vmem %s3, %s825
        %p827 = scmp.lt.s32.totalorder %s47, 1
        %s828 = scalar_select %p827, %s47, 1
        %s829 = smul.addr %s828, 64
        %s830 = smul.addr %s829, 4
        %s831 = scalar_lea.vmem %s9, %s830
        %p832 = scmp.lt.s32.totalorder %s46, 1
        %s833 = scalar_select %p832, %s46, 1
        %s834 = smul.addr %s833, 4
        %s835 = scalar_lea.vmem %s13, %s834
        %p837 = scmp.eq.s32.totalorder %s47, 0
        // Predicated region
        $region113: #{mma_forward.9} parent=71 // pred_check
          %p838 = pneg %p837
        $region114: #{mma_forward.9} parent=71 // pred_check_branch
          %840 = sbr.rel (%p838) target = $region116
        $region115: #{mma_forward.9} parent=71 // pred_region
          %v841 = vld [vmem:[%s821] sm:$0xf]
          %v842 = vunpack.c.l.bf16 %v841
          %843 = vst [vmem:[#allocation2] sm:$0xff] %v842
        $region116: #{mma_forward.9} parent=71 // pred_fallthru
          _
        %v844 = vld [vmem:[#allocation2] sm:$0xff]
        %v845 = vld [vmem:[%s647] sm:$0x1]
        %v846 = vld [vmem:[%s655] sm:$0x1]
        %847 = vadd.xlane.f32.xlu0 %v844
        %v848 = vpop.xlane.xlu0 %847
        %v849 = vrcp.pop 128.0
        %v850 = vmul.f32 %v848, %v849
        %v851 = vsub.f32 %v844, %v850
        %v852 = vmul.f32 %v851, %v851
        %853 = vadd.xlane.f32.xlu0 %v852
        %v854 = vpop.xlane.xlu0 %853
        %v855 = vmul.f32 %v854, %v849
        %v856 = vadd.f32 %v855, 1e-05
        %v857 = vrsqrt.pop %v856
        %v858 = vmul.f32 %v851, %v857
        %v860 = vlaneseq
        %v861 = vshrl.u32 %v860, 7
        %v862 = vsub.s32 0, %v861
        %v863 = vrot.slane %v845, %v862
        %v865 = vmul.f32 %v858, %v863
        %v867 = vlaneseq
        %v868 = vshrl.u32 %v867, 7
        %v869 = vsub.s32 0, %v868
        %v870 = vrot.slane %v846, %v869
        %v872 = vadd.f32 %v865, %v870
        %v873 = vld [vmem:[%s826] sm:$0xff]
        %v874 = vld [vmem:[%s826 + $0x8] sm:$0xf]
        %v875 = vld [vmem:[%s826 + $0xc] sm:$0xff]
        %v876 = vld [vmem:[%s826 + $0x14] sm:$0xf]
        %v877 = vld [vmem:[%s826 + $0x18] sm:$0xff]
        %v878 = vld [vmem:[%s826 + $0x20] sm:$0xf]
        %v879 = vld [vmem:[%s826 + $0x24] sm:$0xff]
        %v880 = vld [vmem:[%s826 + $0x2c] sm:$0xf]
        %v881 = vld [vmem:[%s826 + $0x30] sm:$0xff]
        %v882 = vld [vmem:[%s826 + $0x38] sm:$0xf]
        %v883 = vld [vmem:[%s826 + $0x3c] sm:$0xff]
        %v884 = vld [vmem:[%s826 + $0x44] sm:$0xf]
        %v885 = vld [vmem:[%s826 + $0x48] sm:$0xff]
        %v886 = vld [vmem:[%s826 + $0x50] sm:$0xf]
        %v887 = vld [vmem:[%s826 + $0x54] sm:$0xff]
        %v888 = vld [vmem:[%s826 + $0x5c] sm:$0xf]
        %v889 = vld [vmem:[%s826 + $0x60] sm:$0xff]
        %v890 = vld [vmem:[%s826 + $0x68] sm:$0xf]
        %v891 = vld [vmem:[%s826 + $0x6c] sm:$0xff]
        %v892 = vld [vmem:[%s826 + $0x74] sm:$0xf]
        %v893 = vld [vmem:[%s826 + $0x78] sm:$0xff]
        %v894 = vld [vmem:[%s826 + $0x80] sm:$0xf]
        %v895 = vld [vmem:[%s826 + $0x84] sm:$0xff]
        %v896 = vld [vmem:[%s826 + $0x8c] sm:$0xf]
        %v897 = vld [vmem:[%s826 + $0x90] sm:$0xff]
        %v898 = vld [vmem:[%s826 + $0x98] sm:$0xf]
        %v899 = vld [vmem:[%s826 + $0x9c] sm:$0xff]
        %v900 = vld [vmem:[%s826 + $0xa4] sm:$0xf]
        %v901 = vld [vmem:[%s826 + $0xa8] sm:$0xff]
        %v902 = vld [vmem:[%s826 + $0xb0] sm:$0xf]
        %v903 = vld [vmem:[%s826 + $0xb4] sm:$0xff]
        %v904 = vld [vmem:[%s826 + $0xbc] sm:$0xf]
        %v905 = vld [vmem:[%s664] sm:$0x7]
        %v906 = vpack.c.bf16 %v872, %v872
        %v908 = vlaneseq
        %v909 = vshrl.u32 %v908, 7
        %v910 = vsub.s32 0, %v909
        %v911 = vrot.slane %v905, %v910
        %v912 = vlaneseq
        %v913 = vshrl.u32 %v912, 7
        %v914 = vsub.s32 1, %v913
        %v915 = vrot.slane %v905, %v914
        %v916 = vlaneseq
        %v917 = vshrl.u32 %v916, 7
        %v918 = vsub.s32 2, %v917
        %v919 = vrot.slane %v905, %v918
        %v955 = vunpack.c.l.b16 %v873
        %v956 = vunpack.c.h.b16 %v873
        %v957 = vunpack.c.l.b16 %v874
        %v958 = vunpack.c.l.b16 %v875
        %v959 = vunpack.c.h.b16 %v875
        %v960 = vunpack.c.l.b16 %v876
        %v961 = vunpack.c.l.b16 %v877
        %v962 = vunpack.c.h.b16 %v877
        %v963 = vunpack.c.l.b16 %v878
        %v964 = vunpack.c.l.b16 %v879
        %v965 = vunpack.c.h.b16 %v879
        %v966 = vunpack.c.l.b16 %v880
        %v967 = vunpack.c.l.b16 %v881
        %v968 = vunpack.c.h.b16 %v881
        %v969 = vunpack.c.l.b16 %v882
        %v970 = vunpack.c.l.b16 %v883
        %v971 = vunpack.c.h.b16 %v883
        %v972 = vunpack.c.l.b16 %v884
        %v973 = vunpack.c.l.b16 %v885
        %v974 = vunpack.c.h.b16 %v885
        %v975 = vunpack.c.l.b16 %v886
        %v976 = vunpack.c.l.b16 %v887
        %v977 = vunpack.c.h.b16 %v887
        %v978 = vunpack.c.l.b16 %v888
        %v979 = vunpack.c.l.b16 %v889
        %v980 = vunpack.c.h.b16 %v889
        %v981 = vunpack.c.l.b16 %v890
        %v982 = vunpack.c.l.b16 %v891
        %v983 = vunpack.c.h.b16 %v891
        %v984 = vunpack.c.l.b16 %v892
        %v985 = vunpack.c.l.b16 %v893
        %v986 = vunpack.c.h.b16 %v893
        %v987 = vunpack.c.l.b16 %v894
        %v988 = vunpack.c.l.b16 %v895
        %v989 = vunpack.c.h.b16 %v895
        %v990 = vunpack.c.l.b16 %v896
        %v991 = vunpack.c.l.b16 %v897
        %v992 = vunpack.c.h.b16 %v897
        %v993 = vunpack.c.l.b16 %v898
        %v994 = vunpack.c.l.b16 %v899
        %v995 = vunpack.c.h.b16 %v899
        %v996 = vunpack.c.l.b16 %v900
        %v997 = vunpack.c.l.b16 %v901
        %v998 = vunpack.c.h.b16 %v901
        %v999 = vunpack.c.l.b16 %v902
        %v1000 = vunpack.c.l.b16 %v903
        %v1001 = vunpack.c.h.b16 %v903
        %v1002 = vunpack.c.l.b16 %v904
        %v1003 = vpack.c.b16 %v958, %v955
        %v1004 = vpack.c.b16 %v959, %v956
        %v1005 = vpack.c.b16 %v960, %v957
        %v1006 = vpack.c.b16 %v964, %v961
        %v1007 = vpack.c.b16 %v965, %v962
        %v1008 = vpack.c.b16 %v966, %v963
        %v1009 = vpack.c.b16 %v970, %v967
        %v1010 = vpack.c.b16 %v971, %v968
        %v1011 = vpack.c.b16 %v972, %v969
        %v1012 = vpack.c.b16 %v976, %v973
        %v1013 = vpack.c.b16 %v977, %v974
        %v1014 = vpack.c.b16 %v978, %v975
        %v1015 = vpack.c.b16 %v982, %v979
        %v1016 = vpack.c.b16 %v983, %v980
        %v1017 = vpack.c.b16 %v984, %v981
        %v1018 = vpack.c.b16 %v988, %v985
        %v1019 = vpack.c.b16 %v989, %v986
        %v1020 = vpack.c.b16 %v990, %v987
        %v1021 = vpack.c.b16 %v994, %v991
        %v1022 = vpack.c.b16 %v995, %v992
        %v1023 = vpack.c.b16 %v996, %v993
        %v1024 = vpack.c.b16 %v1000, %v997
        %v1025 = vpack.c.b16 %v1001, %v998
        %v1026 = vpack.c.b16 %v1002, %v999
        %1051 = vmatprep.subr.bf16.mxu0 %v1004
        %1052 = vmatpush1.bf16.msra.mxu0 %v1003
        %1053 = vmatprep.subr.bf16.mxu0 %v1007
        %1054 = vmatpush1.bf16.msra.mxu0 %v1006
        %1055 = vmatprep.subr.bf16.mxu0 %v1010
        %1056 = vmatpush1.bf16.msra.mxu0 %v1009
        %1057 = vmatprep.subr.bf16.mxu0 %v1013
        %1058 = vmatpush1.bf16.msra.mxu0 %v1012
        %1059 = vmatprep.subr.bf16.mxu0 %v1016
        %1060 = vmatpush1.bf16.msra.mxu0 %v1015
        %1061 = vmatprep.subr.bf16.mxu0 %v1019
        %1062 = vmatpush1.bf16.msra.mxu0 %v1018
        %1063 = vmatprep.subr.bf16.mxu0 %v1022
        %1064 = vmatpush1.bf16.msra.mxu0 %v1021
        %1065 = vmatprep.subr.bf16.mxu0 %v1025
        %1066 = vmatpush1.bf16.msra.mxu0 %v1024
        %1067 = vmatprep.subr.bf16.mxu0 0
        %1068 = vmatpush1.bf16.msra.mxu0 0
        %1069 = vmatprep.subr.bf16.mxu0 0
        %1070 = vmatpush1.bf16.msra.mxu0 0
        %1071 = vmatprep.subr.bf16.mxu0 0
        %1072 = vmatpush1.bf16.msra.mxu0 0
        %1073 = vmatprep.subr.bf16.mxu0 0
        %1074 = vmatpush1.bf16.msra.mxu0 0
        %1075 = vmatprep.subr.bf16.mxu0 0
        %1076 = vmatpush1.bf16.msra.mxu0 0
        %1077 = vmatprep.subr.bf16.mxu0 0
        %1078 = vmatpush1.bf16.msra.mxu0 0
        %1079 = vmatprep.subr.bf16.mxu0 0
        %1080 = vmatpush1.bf16.msra.mxu0 0
        %1081 = vmatprep.subr.bf16.mxu0 0
        %1082 = vmatpush1.bf16.msra.mxu0 0
        %1083 = vmatprep.mubr.bf16.mxu0 0
        %1084 = vmatmul.mubr.bf16.gmra.mrb[0].mxu0 %v906
        %v1085 = vpop.f32.mrb[0].mxu0
        %v1086 = vadd.f32 %v911, %v1085
        %v1087 = vpop.f32.mrb[0].mxu0
        %v1088 = vadd.f32 %v915, %v1087
        %v1089 = vpop.f32.mrb[0].mxu0
        %v1090 = vpop.f32.mrb[0].mxu0
        %1091 = vdwg.mxu0
        %1092 = vmatprep.subr.bf16.mxu0 0
        %1093 = vmatpush1.bf16.msra.mxu0 %v1005
        %1094 = vmatprep.subr.bf16.mxu0 0
        %1095 = vmatpush1.bf16.msra.mxu0 %v1008
        %1096 = vmatprep.subr.bf16.mxu0 0
        %1097 = vmatpush1.bf16.msra.mxu0 %v1011
        %1098 = vmatprep.subr.bf16.mxu0 0
        %1099 = vmatpush1.bf16.msra.mxu0 %v1014
        %1100 = vmatprep.subr.bf16.mxu0 0
        %1101 = vmatpush1.bf16.msra.mxu0 %v1017
        %1102 = vmatprep.subr.bf16.mxu0 0
        %1103 = vmatpush1.bf16.msra.mxu0 %v1020
        %1104 = vmatprep.subr.bf16.mxu0 0
        %1105 = vmatpush1.bf16.msra.mxu0 %v1023
        %1106 = vmatprep.subr.bf16.mxu0 0
        %1107 = vmatpush1.bf16.msra.mxu0 %v1026
        %1108 = vmatprep.subr.bf16.mxu0 0
        %1109 = vmatpush1.bf16.msra.mxu0 0
        %1110 = vmatprep.subr.bf16.mxu0 0
        %1111 = vmatpush1.bf16.msra.mxu0 0
        %1112 = vmatprep.subr.bf16.mxu0 0
        %1113 = vmatpush1.bf16.msra.mxu0 0
        %1114 = vmatprep.subr.bf16.mxu0 0
        %1115 = vmatpush1.bf16.msra.mxu0 0
        %1116 = vmatprep.subr.bf16.mxu0 0
        %1117 = vmatpush1.bf16.msra.mxu0 0
        %1118 = vmatprep.subr.bf16.mxu0 0
        %1119 = vmatpush1.bf16.msra.mxu0 0
        %1120 = vmatprep.subr.bf16.mxu0 0
        %1121 = vmatpush1.bf16.msra.mxu0 0
        %1122 = vmatprep.subr.bf16.mxu0 0
        %1123 = vmatpush1.bf16.msra.mxu0 0
        %1124 = vmatprep.mubr.bf16.mxu0 0
        %1125 = vmatmul.mubr.bf16.gmra.mrb[0].mxu0 %v906
        %v1126 = vpop.f32.mrb[0].mxu0
        %v1127 = vadd.f32 %v919, %v1126
        %v1128 = vpop.f32.mrb[0].mxu0
        %v1129 = vpop.f32.mrb[0].mxu0
        %v1130 = vpop.f32.mrb[0].mxu0
        %1131 = vdwg.mxu0
        %vm1132 = vcmask 523264
        %v1134 = vsel %vm1132, %v1086, 0
        %v1137 = vsel %vm1132, %v1088, 0
        %1139 = vmatprep.subr.mxu0 0.0
        %1140 = vmatpush1.xpose.msra.mxu0 %v1137
        %1141 = vmatprep.subr.mxu0 0.0
        %1142 = vmatpush1.xpose.msra.mxu0 0.0
        %1143 = vmatprep.subr.mxu0 0.0
        %1144 = vmatpush1.xpose.msra.mxu0 0.0
        %1145 = vmatprep.subr.mxu0 0.0
        %1146 = vmatpush1.xpose.msra.mxu0 0.0
        %1147 = vmatprep.subr.mxu0 0.0
        %1148 = vmatpush1.xpose.msra.mxu0 0.0
        %1149 = vmatprep.subr.mxu0 0.0
        %1150 = vmatpush1.xpose.msra.mxu0 0.0
        %1151 = vmatprep.subr.mxu0 0.0
        %1152 = vmatpush1.xpose.msra.mxu0 0.0
        %1153 = vmatprep.subr.mxu0 0.0
        %1154 = vmatpush1.xpose.msra.mxu0 0.0
        %1155 = vmatprep.subr.mxu0 0.0
        %1156 = vmatpush1.xpose.msra.mxu0 0.0
        %1157 = vmatprep.subr.mxu0 0.0
        %1158 = vmatpush1.xpose.msra.mxu0 0.0
        %1159 = vmatprep.subr.mxu0 0.0
        %1160 = vmatpush1.xpose.msra.mxu0 0.0
        %1161 = vmatprep.subr.mxu0 0.0
        %1162 = vmatpush1.xpose.msra.mxu0 0.0
        %1163 = vmatprep.subr.mxu0 0.0
        %1164 = vmatpush1.xpose.msra.mxu0 0.0
        %1165 = vmatprep.subr.mxu0 0.0
        %1166 = vmatpush1.xpose.msra.mxu0 0.0
        %1167 = vmatprep.subr.mxu0 0.0
        %1168 = vmatpush1.xpose.msra.mxu0 0.0
        %1169 = vmatprep.subr.mxu0 0.0
        %1170 = vmatpush1.xpose.msra.mxu0 0.0
        %1171 = vmatprep.subr.mxu0 0.0
        %1172 = vmatpush1.xpose.msra.mxu0 0.0
        %1173 = vmatprep.subr.mxu0 0.0
        %1174 = vmatpush1.xpose.msra.mxu0 0.0
        %1175 = vmatprep.subr.mxu0 0.0
        %1176 = vmatpush1.xpose.msra.mxu0 0.0
        %1177 = vmatprep.subr.mxu0 0.0
        %1178 = vmatpush1.xpose.msra.mxu0 0.0
        %1179 = vmatprep.subr.mxu0 0.0
        %1180 = vmatpush1.xpose.msra.mxu0 0.0
        %1181 = vmatprep.subr.mxu0 0.0
        %1182 = vmatpush1.xpose.msra.mxu0 0.0
        %1183 = vmatprep.subr.mxu0 0.0
        %1184 = vmatpush1.xpose.msra.mxu0 0.0
        %1185 = vmatprep.subr.mxu0 0.0
        %1186 = vmatpush1.xpose.msra.mxu0 0.0
        %1187 = vmatprep.subr.mxu0 0.0
        %1188 = vmatpush1.xpose.msra.mxu0 0.0
        %1189 = vmatprep.subr.mxu0 0.0
        %1190 = vmatpush1.xpose.msra.mxu0 0.0
        %1191 = vmatprep.subr.mxu0 0.0
        %1192 = vmatpush1.xpose.msra.mxu0 0.0
        %1193 = vmatprep.subr.mxu0 0.0
        %1194 = vmatpush1.xpose.msra.mxu0 0.0
        %1195 = vmatprep.subr.mxu0 0.0
        %1196 = vmatpush1.xpose.msra.mxu0 0.0
        %1197 = vmatprep.subr.mxu0 0.0
        %1198 = vmatpush1.xpose.msra.mxu0 0.0
        %1199 = vmatprep.subr.mxu0 0.0
        %1200 = vmatpush1.xpose.msra.mxu0 0.0
        %1201 = vmatprep.subr.mxu0 0.0
        %1202 = vmatpush1.xpose.msra.mxu0 0.0
        %1203 = vmatprep.mubr.f32.mxu0 0.0
        %1204 = vmatmul.mubr.f32.gmra.mrb[0].mxu0 %v1134
        %v1205 = vpop.f32.mrb[0].mxu0
        %v1206 = vadd.f32 0.0, %v1205
        %v1207 = vpop.f32.mrb[0].mxu0
        %1208 = vdwg.mxu0
        %vm1209 = vcmask 64512
        %v1210 = vsel %vm1209, %v1206, -inf
        %1211 = vmax.xlane.f32.xlu0 %v1210
        %v1212 = vpop.xlane.xlu0 %1211
        %v1213 = vsub.f32 %v1206, %v1212
        %v1214 = vmul.f32 %v1213, 1.442695
        %v1215 = vpow.pop %v1214
        %v1216 = vsel %vm1209, %v1215, 0.0
        %1217 = vadd.xlane.f32.xlu0 %v1216
        %v1218 = vpop.xlane.xlu0 %1217
        %v1219 = vrcp.pop %v1218
        %v1220 = vmul.f32 %v1215, %v1219
        %v1222 = vsel %vm1209, %v1220, 0
        %1224 = vmatprep.subr.mxu0 0.0
        %1225 = vmatpush1.msra.mxu0 %v1127
        %1226 = vmatprep.subr.mxu0 0.0
        %1227 = vmatpush1.msra.mxu0 0.0
        %1228 = vmatprep.subr.mxu0 0.0
        %1229 = vmatpush1.msra.mxu0 0.0
        %1230 = vmatprep.subr.mxu0 0.0
        %1231 = vmatpush1.msra.mxu0 0.0
        %1232 = vmatprep.subr.mxu0 0.0
        %1233 = vmatpush1.msra.mxu0 0.0
        %1234 = vmatprep.subr.mxu0 0.0
        %1235 = vmatpush1.msra.mxu0 0.0
        %1236 = vmatprep.subr.mxu0 0.0
        %1237 = vmatpush1.msra.mxu0 0.0
        %1238 = vmatprep.subr.mxu0 0.0
        %1239 = vmatpush1.msra.mxu0 0.0
        %1240 = vmatprep.subr.mxu0 0.0
        %1241 = vmatpush1.msra.mxu0 0.0
        %1242 = vmatprep.subr.mxu0 0.0
        %1243 = vmatpush1.msra.mxu0 0.0
        %1244 = vmatprep.subr.mxu0 0.0
        %1245 = vmatpush1.msra.mxu0 0.0
        %1246 = vmatprep.subr.mxu0 0.0
        %1247 = vmatpush1.msra.mxu0 0.0
        %1248 = vmatprep.subr.mxu0 0.0
        %1249 = vmatpush1.msra.mxu0 0.0
        %1250 = vmatprep.subr.mxu0 0.0
        %1251 = vmatpush1.msra.mxu0 0.0
        %1252 = vmatprep.subr.mxu0 0.0
        %1253 = vmatpush1.msra.mxu0 0.0
        %1254 = vmatprep.subr.mxu0 0.0
        %1255 = vmatpush1.msra.mxu0 0.0
        %1256 = vmatprep.subr.mxu0 0.0
        %1257 = vmatpush1.msra.mxu0 0.0
        %1258 = vmatprep.subr.mxu0 0.0
        %1259 = vmatpush1.msra.mxu0 0.0
        %1260 = vmatprep.subr.mxu0 0.0
        %1261 = vmatpush1.msra.mxu0 0.0
        %1262 = vmatprep.subr.mxu0 0.0
        %1263 = vmatpush1.msra.mxu0 0.0
        %1264 = vmatprep.subr.mxu0 0.0
        %1265 = vmatpush1.msra.mxu0 0.0
        %1266 = vmatprep.subr.mxu0 0.0
        %1267 = vmatpush1.msra.mxu0 0.0
        %1268 = vmatprep.subr.mxu0 0.0
        %1269 = vmatpush1.msra.mxu0 0.0
        %1270 = vmatprep.subr.mxu0 0.0
        %1271 = vmatpush1.msra.mxu0 0.0
        %1272 = vmatprep.subr.mxu0 0.0
        %1273 = vmatpush1.msra.mxu0 0.0
        %1274 = vmatprep.subr.mxu0 0.0
        %1275 = vmatpush1.msra.mxu0 0.0
        %1276 = vmatprep.subr.mxu0 0.0
        %1277 = vmatpush1.msra.mxu0 0.0
        %1278 = vmatprep.subr.mxu0 0.0
        %1279 = vmatpush1.msra.mxu0 0.0
        %1280 = vmatprep.subr.mxu0 0.0
        %1281 = vmatpush1.msra.mxu0 0.0
        %1282 = vmatprep.subr.mxu0 0.0
        %1283 = vmatpush1.msra.mxu0 0.0
        %1284 = vmatprep.subr.mxu0 0.0
        %1285 = vmatpush1.msra.mxu0 0.0
        %1286 = vmatprep.subr.mxu0 0.0
        %1287 = vmatpush1.msra.mxu0 0.0
        %1288 = vmatprep.mubr.f32.mxu0 0.0
        %1289 = vmatmul.mubr.f32.gmra.mrb[0].mxu0 %v1222
        %v1290 = vpop.f32.mrb[0].mxu0
        %v1291 = vadd.f32 0.0, %v1290
        %v1292 = vpop.f32.mrb[0].mxu0
        %1293 = vdwg.mxu0
        %1294 = vrot.lane.b32.xlu0 %v1086, 64
        %v1295 = vpop.permute.xlu0 %1294
        %1296 = vrot.lane.b32.xlu0 %v1088, 64
        %v1297 = vpop.permute.xlu0 %1296
        %v1298 = vsel %vm1132, %v1295, 0
        %v1300 = vsel %vm1132, %v1297, 0
        %1302 = vmatprep.subr.mxu0 0.0
        %1303 = vmatpush1.xpose.msra.mxu0 %v1300
        %1304 = vmatprep.subr.mxu0 0.0
        %1305 = vmatpush1.xpose.msra.mxu0 0.0
        %1306 = vmatprep.subr.mxu0 0.0
        %1307 = vmatpush1.xpose.msra.mxu0 0.0
        %1308 = vmatprep.subr.mxu0 0.0
        %1309 = vmatpush1.xpose.msra.mxu0 0.0
        %1310 = vmatprep.subr.mxu0 0.0
        %1311 = vmatpush1.xpose.msra.mxu0 0.0
        %1312 = vmatprep.subr.mxu0 0.0
        %1313 = vmatpush1.xpose.msra.mxu0 0.0
        %1314 = vmatprep.subr.mxu0 0.0
        %1315 = vmatpush1.xpose.msra.mxu0 0.0
        %1316 = vmatprep.subr.mxu0 0.0
        %1317 = vmatpush1.xpose.msra.mxu0 0.0
        %1318 = vmatprep.subr.mxu0 0.0
        %1319 = vmatpush1.xpose.msra.mxu0 0.0
        %1320 = vmatprep.subr.mxu0 0.0
        %1321 = vmatpush1.xpose.msra.mxu0 0.0
        %1322 = vmatprep.subr.mxu0 0.0
        %1323 = vmatpush1.xpose.msra.mxu0 0.0
        %1324 = vmatprep.subr.mxu0 0.0
        %1325 = vmatpush1.xpose.msra.mxu0 0.0
        %1326 = vmatprep.subr.mxu0 0.0
        %1327 = vmatpush1.xpose.msra.mxu0 0.0
        %1328 = vmatprep.subr.mxu0 0.0
        %1329 = vmatpush1.xpose.msra.mxu0 0.0
        %1330 = vmatprep.subr.mxu0 0.0
        %1331 = vmatpush1.xpose.msra.mxu0 0.0
        %1332 = vmatprep.subr.mxu0 0.0
        %1333 = vmatpush1.xpose.msra.mxu0 0.0
        %1334 = vmatprep.subr.mxu0 0.0
        %1335 = vmatpush1.xpose.msra.mxu0 0.0
        %1336 = vmatprep.subr.mxu0 0.0
        %1337 = vmatpush1.xpose.msra.mxu0 0.0
        %1338 = vmatprep.subr.mxu0 0.0
        %1339 = vmatpush1.xpose.msra.mxu0 0.0
        %1340 = vmatprep.subr.mxu0 0.0
        %1341 = vmatpush1.xpose.msra.mxu0 0.0
        %1342 = vmatprep.subr.mxu0 0.0
        %1343 = vmatpush1.xpose.msra.mxu0 0.0
        %1344 = vmatprep.subr.mxu0 0.0
        %1345 = vmatpush1.xpose.msra.mxu0 0.0
        %1346 = vmatprep.subr.mxu0 0.0
        %1347 = vmatpush1.xpose.msra.mxu0 0.0
        %1348 = vmatprep.subr.mxu0 0.0
        %1349 = vmatpush1.xpose.msra.mxu0 0.0
        %1350 = vmatprep.subr.mxu0 0.0
        %1351 = vmatpush1.xpose.msra.mxu0 0.0
        %1352 = vmatprep.subr.mxu0 0.0
        %1353 = vmatpush1.xpose.msra.mxu0 0.0
        %1354 = vmatprep.subr.mxu0 0.0
        %1355 = vmatpush1.xpose.msra.mxu0 0.0
        %1356 = vmatprep.subr.mxu0 0.0
        %1357 = vmatpush1.xpose.msra.mxu0 0.0
        %1358 = vmatprep.subr.mxu0 0.0
        %1359 = vmatpush1.xpose.msra.mxu0 0.0
        %1360 = vmatprep.subr.mxu0 0.0
        %1361 = vmatpush1.xpose.msra.mxu0 0.0
        %1362 = vmatprep.subr.mxu0 0.0
        %1363 = vmatpush1.xpose.msra.mxu0 0.0
        %1364 = vmatprep.subr.mxu0 0.0
        %1365 = vmatpush1.xpose.msra.mxu0 0.0
        %1366 = vmatprep.mubr.f32.mxu0 0.0
        %1367 = vmatmul.mubr.f32.gmra.mrb[0].mxu0 %v1298
        %v1368 = vpop.f32.mrb[0].mxu0
        %v1369 = vadd.f32 0.0, %v1368
        %v1370 = vpop.f32.mrb[0].mxu0
        %1371 = vdwg.mxu0
        %v1372 = vsel %vm1209, %v1369, -inf
        %1373 = vmax.xlane.f32.xlu0 %v1372
        %v1374 = vpop.xlane.xlu0 %1373
        %v1375 = vsub.f32 %v1369, %v1374
        %v1376 = vmul.f32 %v1375, 1.442695
        %v1377 = vpow.pop %v1376
        %v1378 = vsel %vm1209, %v1377, 0.0
        %1379 = vadd.xlane.f32.xlu0 %v1378
        %v1380 = vpop.xlane.xlu0 %1379
        %v1381 = vrcp.pop %v1380
        %v1382 = vmul.f32 %v1377, %v1381
        %1384 = vrot.lane.b32.xlu0 %v1127, 64
        %v1385 = vpop.permute.xlu0 %1384
        %v1388 = vsel %vm1209, %v1382, 0
        %1390 = vmatprep.subr.mxu0 0.0
        %1391 = vmatpush1.msra.mxu0 %v1385
        %1392 = vmatprep.subr.mxu0 0.0
        %1393 = vmatpush1.msra.mxu0 0.0
        %1394 = vmatprep.subr.mxu0 0.0
        %1395 = vmatpush1.msra.mxu0 0.0
        %1396 = vmatprep.subr.mxu0 0.0
        %1397 = vmatpush1.msra.mxu0 0.0
        %1398 = vmatprep.subr.mxu0 0.0
        %1399 = vmatpush1.msra.mxu0 0.0
        %1400 = vmatprep.subr.mxu0 0.0
        %1401 = vmatpush1.msra.mxu0 0.0
        %1402 = vmatprep.subr.mxu0 0.0
        %1403 = vmatpush1.msra.mxu0 0.0
        %1404 = vmatprep.subr.mxu0 0.0
        %1405 = vmatpush1.msra.mxu0 0.0
        %1406 = vmatprep.subr.mxu0 0.0
        %1407 = vmatpush1.msra.mxu0 0.0
        %1408 = vmatprep.subr.mxu0 0.0
        %1409 = vmatpush1.msra.mxu0 0.0
        %1410 = vmatprep.subr.mxu0 0.0
        %1411 = vmatpush1.msra.mxu0 0.0
        %1412 = vmatprep.subr.mxu0 0.0
        %1413 = vmatpush1.msra.mxu0 0.0
        %1414 = vmatprep.subr.mxu0 0.0
        %1415 = vmatpush1.msra.mxu0 0.0
        %1416 = vmatprep.subr.mxu0 0.0
        %1417 = vmatpush1.msra.mxu0 0.0
        %1418 = vmatprep.subr.mxu0 0.0
        %1419 = vmatpush1.msra.mxu0 0.0
        %1420 = vmatprep.subr.mxu0 0.0
        %1421 = vmatpush1.msra.mxu0 0.0
        %1422 = vmatprep.subr.mxu0 0.0
        %1423 = vmatpush1.msra.mxu0 0.0
        %1424 = vmatprep.subr.mxu0 0.0
        %1425 = vmatpush1.msra.mxu0 0.0
        %1426 = vmatprep.subr.mxu0 0.0
        %1427 = vmatpush1.msra.mxu0 0.0
        %1428 = vmatprep.subr.mxu0 0.0
        %1429 = vmatpush1.msra.mxu0 0.0
        %1430 = vmatprep.subr.mxu0 0.0
        %1431 = vmatpush1.msra.mxu0 0.0
        %1432 = vmatprep.subr.mxu0 0.0
        %1433 = vmatpush1.msra.mxu0 0.0
        %1434 = vmatprep.subr.mxu0 0.0
        %1435 = vmatpush1.msra.mxu0 0.0
        %1436 = vmatprep.subr.mxu0 0.0
        %1437 = vmatpush1.msra.mxu0 0.0
        %1438 = vmatprep.subr.mxu0 0.0
        %1439 = vmatpush1.msra.mxu0 0.0
        %1440 = vmatprep.subr.mxu0 0.0
        %1441 = vmatpush1.msra.mxu0 0.0
        %1442 = vmatprep.subr.mxu0 0.0
        %1443 = vmatpush1.msra.mxu0 0.0
        %1444 = vmatprep.subr.mxu0 0.0
        %1445 = vmatpush1.msra.mxu0 0.0
        %1446 = vmatprep.subr.mxu0 0.0
        %1447 = vmatpush1.msra.mxu0 0.0
        %1448 = vmatprep.subr.mxu0 0.0
        %1449 = vmatpush1.msra.mxu0 0.0
        %1450 = vmatprep.subr.mxu0 0.0
        %1451 = vmatpush1.msra.mxu0 0.0
        %1452 = vmatprep.subr.mxu0 0.0
        %1453 = vmatpush1.msra.mxu0 0.0
        %1454 = vmatprep.mubr.f32.mxu0 0.0
        %1455 = vmatmul.mubr.f32.gmra.mrb[0].mxu0 %v1388
        %v1456 = vpop.f32.mrb[0].mxu0
        %v1457 = vadd.f32 0.0, %v1456
        %v1458 = vpop.f32.mrb[0].mxu0
        %1459 = vdwg.mxu0
        %1461 = vrot.lane.b32.xlu0 %v1457, 64
        %v1462 = vpop.permute.xlu0 %1461
        %v1464 = vsel %vm1132, %v1291, %v1462
        %v1465 = vld [vmem:[%s673] sm:$0xf]
        %v1466 = vld [vmem:[%s673 + $0x4] sm:$0xf]
        %v1467 = vld [vmem:[%s673 + $0x8] sm:$0xf]
        %v1468 = vld [vmem:[%s673 + $0xc] sm:$0xf]
        %v1469 = vld [vmem:[%s673 + $0x10] sm:$0xf]
        %v1470 = vld [vmem:[%s673 + $0x14] sm:$0xf]
        %v1471 = vld [vmem:[%s673 + $0x18] sm:$0xf]
        %v1472 = vld [vmem:[%s673 + $0x1c] sm:$0xf]
        %v1473 = vld [vmem:[%s673 + $0x20] sm:$0xf]
        %v1474 = vld [vmem:[%s673 + $0x24] sm:$0xf]
        %v1475 = vld [vmem:[%s673 + $0x28] sm:$0xf]
        %v1476 = vld [vmem:[%s673 + $0x2c] sm:$0xf]
        %v1477 = vld [vmem:[%s673 + $0x30] sm:$0xf]
        %v1478 = vld [vmem:[%s673 + $0x34] sm:$0xf]
        %v1479 = vld [vmem:[%s673 + $0x38] sm:$0xf]
        %v1480 = vld [vmem:[%s673 + $0x3c] sm:$0xf]
        %v1481 = vld [vmem:[%s681] sm:$0x1]
        %v1482 = vpack.c.bf16 %v1464, %v1464
        %v1484 = vlaneseq
        %v1485 = vshrl.u32 %v1484, 7
        %v1486 = vsub.s32 0, %v1485
        %v1487 = vrot.slane %v1481, %v1486
        %v1505 = vunpack.c.l.b16 %v1465
        %v1506 = vunpack.c.l.b16 %v1466
        %v1507 = vunpack.c.l.b16 %v1467
        %v1508 = vunpack.c.l.b16 %v1468
        %v1509 = vunpack.c.l.b16 %v1469
        %v1510 = vunpack.c.l.b16 %v1470
        %v1511 = vunpack.c.l.b16 %v1471
        %v1512 = vunpack.c.l.b16 %v1472
        %v1513 = vunpack.c.l.b16 %v1473
        %v1514 = vunpack.c.l.b16 %v1474
        %v1515 = vunpack.c.l.b16 %v1475
        %v1516 = vunpack.c.l.b16 %v1476
        %v1517 = vunpack.c.l.b16 %v1477
        %v1518 = vunpack.c.l.b16 %v1478
        %v1519 = vunpack.c.l.b16 %v1479
        %v1520 = vunpack.c.l.b16 %v1480
        %v1521 = vpack.c.b16 %v1506, %v1505
        %v1522 = vpack.c.b16 %v1508, %v1507
        %v1523 = vpack.c.b16 %v1510, %v1509
        %v1524 = vpack.c.b16 %v1512, %v1511
        %v1525 = vpack.c.b16 %v1514, %v1513
        %v1526 = vpack.c.b16 %v1516, %v1515
        %v1527 = vpack.c.b16 %v1518, %v1517
        %v1528 = vpack.c.b16 %v1520, %v1519
        %1537 = vmatprep.subr.bf16.mxu0 0
        %1538 = vmatpush1.bf16.msra.mxu0 %v1521
        %1539 = vmatprep.subr.bf16.mxu0 0
        %1540 = vmatpush1.bf16.msra.mxu0 %v1522
        %1541 = vmatprep.subr.bf16.mxu0 0
        %1542 = vmatpush1.bf16.msra.mxu0 %v1523
        %1543 = vmatprep.subr.bf16.mxu0 0
        %1544 = vmatpush1.bf16.msra.mxu0 %v1524
        %1545 = vmatprep.subr.bf16.mxu0 0
        %1546 = vmatpush1.bf16.msra.mxu0 %v1525
        %1547 = vmatprep.subr.bf16.mxu0 0
        %1548 = vmatpush1.bf16.msra.mxu0 %v1526
        %1549 = vmatprep.subr.bf16.mxu0 0
        %1550 = vmatpush1.bf16.msra.mxu0 %v1527
        %1551 = vmatprep.subr.bf16.mxu0 0
        %1552 = vmatpush1.bf16.msra.mxu0 %v1528
        %1553 = vmatprep.subr.bf16.mxu0 0
        %1554 = vmatpush1.bf16.msra.mxu0 0
        %1555 = vmatprep.subr.bf16.mxu0 0
        %1556 = vmatpush1.bf16.msra.mxu0 0
        %1557 = vmatprep.subr.bf16.mxu0 0
        %1558 = vmatpush1.bf16.msra.mxu0 0
        %1559 = vmatprep.subr.bf16.mxu0 0
        %1560 = vmatpush1.bf16.msra.mxu0 0
        %1561 = vmatprep.subr.bf16.mxu0 0
        %1562 = vmatpush1.bf16.msra.mxu0 0
        %1563 = vmatprep.subr.bf16.mxu0 0
        %1564 = vmatpush1.bf16.msra.mxu0 0
        %1565 = vmatprep.subr.bf16.mxu0 0
        %1566 = vmatpush1.bf16.msra.mxu0 0
        %1567 = vmatprep.subr.bf16.mxu0 0
        %1568 = vmatpush1.bf16.msra.mxu0 0
        %1569 = vmatprep.mubr.bf16.mxu0 0
        %1570 = vmatmul.mubr.bf16.gmra.mrb[0].mxu0 %v1482
        %v1571 = vpop.f32.mrb[0].mxu0
        %v1572 = vadd.f32 %v1487, %v1571
        %v1573 = vpop.f32.mrb[0].mxu0
        %v1574 = vpop.f32.mrb[0].mxu0
        %v1575 = vpop.f32.mrb[0].mxu0
        %1576 = vdwg.mxu0
        %v1577 = vadd.f32 %v844, %v1572
        %v1578 = vld [vmem:[%s689] sm:$0x1]
        %v1579 = vld [vmem:[%s697] sm:$0x1]
        %1580 = vadd.xlane.f32.xlu0 %v1577
        %v1581 = vpop.xlane.xlu0 %1580
        %v1582 = vmul.f32 %v1581, %v849
        %v1583 = vsub.f32 %v1577, %v1582
        %v1584 = vmul.f32 %v1583, %v1583
        %1585 = vadd.xlane.f32.xlu0 %v1584
        %v1586 = vpop.xlane.xlu0 %1585
        %v1587 = vmul.f32 %v1586, %v849
        %v1588 = vadd.f32 %v1587, 1e-05
        %v1589 = vrsqrt.pop %v1588
        %v1590 = vmul.f32 %v1583, %v1589
        %v1592 = vlaneseq
        %v1593 = vshrl.u32 %v1592, 7
        %v1594 = vsub.s32 0, %v1593
        %v1595 = vrot.slane %v1578, %v1594
        %v1597 = vmul.f32 %v1590, %v1595
        %v1599 = vlaneseq
        %v1600 = vshrl.u32 %v1599, 7
        %v1601 = vsub.s32 0, %v1600
        %v1602 = vrot.slane %v1579, %v1601
        %v1604 = vadd.f32 %v1597, %v1602
        %v1605 = vld [vmem:[%s831] sm:$0xff]
        %v1606 = vld [vmem:[%s831 + $0x8] sm:$0xff]
        %v1607 = vld [vmem:[%s831 + $0x10] sm:$0xff]
        %v1608 = vld [vmem:[%s831 + $0x18] sm:$0xff]
        %v1609 = vld [vmem:[%s831 + $0x20] sm:$0xff]
        %v1610 = vld [vmem:[%s831 + $0x28] sm:$0xff]
        %v1611 = vld [vmem:[%s831 + $0x30] sm:$0xff]
        %v1612 = vld [vmem:[%s831 + $0x38] sm:$0xff]
        %v1613 = vld [vmem:[%s831 + $0x40] sm:$0xff]
        %v1614 = vld [vmem:[%s831 + $0x48] sm:$0xff]
        %v1615 = vld [vmem:[%s831 + $0x50] sm:$0xff]
        %v1616 = vld [vmem:[%s831 + $0x58] sm:$0xff]
        %v1617 = vld [vmem:[%s831 + $0x60] sm:$0xff]
        %v1618 = vld [vmem:[%s831 + $0x68] sm:$0xff]
        %v1619 = vld [vmem:[%s831 + $0x70] sm:$0xff]
        %v1620 = vld [vmem:[%s831 + $0x78] sm:$0xff]
        %v1621 = vld [vmem:[%s831 + $0x80] sm:$0xff]
        %v1622 = vld [vmem:[%s831 + $0x88] sm:$0xff]
        %v1623 = vld [vmem:[%s831 + $0x90] sm:$0xff]
        %v1624 = vld [vmem:[%s831 + $0x98] sm:$0xff]
        %v1625 = vld [vmem:[%s831 + $0xa0] sm:$0xff]
        %v1626 = vld [vmem:[%s831 + $0xa8] sm:$0xff]
        %v1627 = vld [vmem:[%s831 + $0xb0] sm:$0xff]
        %v1628 = vld [vmem:[%s831 + $0xb8] sm:$0xff]
        %v1629 = vld [vmem:[%s831 + $0xc0] sm:$0xff]
        %v1630 = vld [vmem:[%s831 + $0xc8] sm:$0xff]
        %v1631 = vld [vmem:[%s831 + $0xd0] sm:$0xff]
        %v1632 = vld [vmem:[%s831 + $0xd8] sm:$0xff]
        %v1633 = vld [vmem:[%s831 + $0xe0] sm:$0xff]
        %v1634 = vld [vmem:[%s831 + $0xe8] sm:$0xff]
        %v1635 = vld [vmem:[%s831 + $0xf0] sm:$0xff]
        %v1636 = vld [vmem:[%s831 + $0xf8] sm:$0xff]
        %v1637 = vld [vmem:[%s706] sm:$0xf]
        %v1638 = vpack.c.bf16 %v1604, %v1604
        %v1640 = vlaneseq
        %v1641 = vshrl.u32 %v1640, 7
        %v1642 = vsub.s32 0, %v1641
        %v1643 = vrot.slane %v1637, %v1642
        %v1644 = vlaneseq
        %v1645 = vshrl.u32 %v1644, 7
        %v1646 = vsub.s32 1, %v1645
        %v1647 = vrot.slane %v1637, %v1646
        %v1648 = vlaneseq
        %v1649 = vshrl.u32 %v1648, 7
        %v1650 = vsub.s32 2, %v1649
        %v1651 = vrot.slane %v1637, %v1650
        %v1652 = vlaneseq
        %v1653 = vshrl.u32 %v1652, 7
        %v1654 = vsub.s32 3, %v1653
        %v1655 = vrot.slane %v1637, %v1654
        %v1692 = vunpack.c.l.b16 %v1605
        %v1693 = vunpack.c.h.b16 %v1605
        %v1694 = vunpack.c.l.b16 %v1606
        %v1695 = vunpack.c.h.b16 %v1606
        %v1696 = vunpack.c.l.b16 %v1607
        %v1697 = vunpack.c.h.b16 %v1607
        %v1698 = vunpack.c.l.b16 %v1608
        %v1699 = vunpack.c.h.b16 %v1608
        %v1700 = vunpack.c.l.b16 %v1609
        %v1701 = vunpack.c.h.b16 %v1609
        %v1702 = vunpack.c.l.b16 %v1610
        %v1703 = vunpack.c.h.b16 %v1610
        %v1704 = vunpack.c.l.b16 %v1611
        %v1705 = vunpack.c.h.b16 %v1611
        %v1706 = vunpack.c.l.b16 %v1612
        %v1707 = vunpack.c.h.b16 %v1612
        %v1708 = vunpack.c.l.b16 %v1613
        %v1709 = vunpack.c.h.b16 %v1613
        %v1710 = vunpack.c.l.b16 %v1614
        %v1711 = vunpack.c.h.b16 %v1614
        %v1712 = vunpack.c.l.b16 %v1615
        %v1713 = vunpack.c.h.b16 %v1615
        %v1714 = vunpack.c.l.b16 %v1616
        %v1715 = vunpack.c.h.b16 %v1616
        %v1716 = vunpack.c.l.b16 %v1617
        %v1717 = vunpack.c.h.b16 %v1617
        %v1718 = vunpack.c.l.b16 %v1618
        %v1719 = vunpack.c.h.b16 %v1618
        %v1720 = vunpack.c.l.b16 %v1619
        %v1721 = vunpack.c.h.b16 %v1619
        %v1722 = vunpack.c.l.b16 %v1620
        %v1723 = vunpack.c.h.b16 %v1620
        %v1724 = vunpack.c.l.b16 %v1621
        %v1725 = vunpack.c.h.b16 %v1621
        %v1726 = vunpack.c.l.b16 %v1622
        %v1727 = vunpack.c.h.b16 %v1622
        %v1728 = vunpack.c.l.b16 %v1623
        %v1729 = vunpack.c.h.b16 %v1623
        %v1730 = vunpack.c.l.b16 %v1624
        %v1731 = vunpack.c.h.b16 %v1624
        %v1732 = vunpack.c.l.b16 %v1625
        %v1733 = vunpack.c.h.b16 %v1625
        %v1734 = vunpack.c.l.b16 %v1626
        %v1735 = vunpack.c.h.b16 %v1626
        %v1736 = vunpack.c.l.b16 %v1627
        %v1737 = vunpack.c.h.b16 %v1627
        %v1738 = vunpack.c.l.b16 %v1628
        %v1739 = vunpack.c.h.b16 %v1628
        %v1740 = vunpack.c.l.b16 %v1629
        %v1741 = vunpack.c.h.b16 %v1629
        %v1742 = vunpack.c.l.b16 %v1630
        %v1743 = vunpack.c.h.b16 %v1630
        %v1744 = vunpack.c.l.b16 %v1631
        %v1745 = vunpack.c.h.b16 %v1631
        %v1746 = vunpack.c.l.b16 %v1632
        %v1747 = vunpack.c.h.b16 %v1632
        %v1748 = vunpack.c.l.b16 %v1633
        %v1749 = vunpack.c.h.b16 %v1633
        %v1750 = vunpack.c.l.b16 %v1634
        %v1751 = vunpack.c.h.b16 %v1634
        %v1752 = vunpack.c.l.b16 %v1635
        %v1753 = vunpack.c.h.b16 %v1635
        %v1754 = vunpack.c.l.b16 %v1636
        %v1755 = vunpack.c.h.b16 %v1636
        %v1756 = vpack.c.b16 %v1696, %v1692
        %v1757 = vpack.c.b16 %v1697, %v1693
        %v1758 = vpack.c.b16 %v1698, %v1694
        %v1759 = vpack.c.b16 %v1699, %v1695
        %v1760 = vpack.c.b16 %v1704, %v1700
        %v1761 = vpack.c.b16 %v1705, %v1701
        %v1762 = vpack.c.b16 %v1706, %v1702
        %v1763 = vpack.c.b16 %v1707, %v1703
        %v1764 = vpack.c.b16 %v1712, %v1708
        %v1765 = vpack.c.b16 %v1713, %v1709
        %v1766 = vpack.c.b16 %v1714, %v1710
        %v1767 = vpack.c.b16 %v1715, %v1711
        %v1768 = vpack.c.b16 %v1720, %v1716
        %v1769 = vpack.c.b16 %v1721, %v1717
        %v1770 = vpack.c.b16 %v1722, %v1718
        %v1771 = vpack.c.b16 %v1723, %v1719
        %v1772 = vpack.c.b16 %v1728, %v1724
        %v1773 = vpack.c.b16 %v1729, %v1725
        %v1774 = vpack.c.b16 %v1730, %v1726
        %v1775 = vpack.c.b16 %v1731, %v1727
        %v1776 = vpack.c.b16 %v1736, %v1732
        %v1777 = vpack.c.b16 %v1737, %v1733
        %v1778 = vpack.c.b16 %v1738, %v1734
        %v1779 = vpack.c.b16 %v1739, %v1735
        %v1780 = vpack.c.b16 %v1744, %v1740
        %v1781 = vpack.c.b16 %v1745, %v1741
        %v1782 = vpack.c.b16 %v1746, %v1742
        %v1783 = vpack.c.b16 %v1747, %v1743
        %v1784 = vpack.c.b16 %v1752, %v1748
        %v1785 = vpack.c.b16 %v1753, %v1749
        %v1786 = vpack.c.b16 %v1754, %v1750
        %v1787 = vpack.c.b16 %v1755, %v1751
        %1820 = vmatprep.subr.bf16.mxu0 %v1757
        %1821 = vmatpush1.bf16.msra.mxu0 %v1756
        %1822 = vmatprep.subr.bf16.mxu0 %v1761
        %1823 = vmatpush1.bf16.msra.mxu0 %v1760
        %1824 = vmatprep.subr.bf16.mxu0 %v1765
        %1825 = vmatpush1.bf16.msra.mxu0 %v1764
        %1826 = vmatprep.subr.bf16.mxu0 %v1769
        %1827 = vmatpush1.bf16.msra.mxu0 %v1768
        %1828 = vmatprep.subr.bf16.mxu0 %v1773
        %1829 = vmatpush1.bf16.msra.mxu0 %v1772
        %1830 = vmatprep.subr.bf16.mxu0 %v1777
        %1831 = vmatpush1.bf16.msra.mxu0 %v1776
        %1832 = vmatprep.subr.bf16.mxu0 %v1781
        %1833 = vmatpush1.bf16.msra.mxu0 %v1780
        %1834 = vmatprep.subr.bf16.mxu0 %v1785
        %1835 = vmatpush1.bf16.msra.mxu0 %v1784
        %1836 = vmatprep.subr.bf16.mxu0 0
        %1837 = vmatpush1.bf16.msra.mxu0 0
        %1838 = vmatprep.subr.bf16.mxu0 0
        %1839 = vmatpush1.bf16.msra.mxu0 0
        %1840 = vmatprep.subr.bf16.mxu0 0
        %1841 = vmatpush1.bf16.msra.mxu0 0
        %1842 = vmatprep.subr.bf16.mxu0 0
        %1843 = vmatpush1.bf16.msra.mxu0 0
        %1844 = vmatprep.subr.bf16.mxu0 0
        %1845 = vmatpush1.bf16.msra.mxu0 0
        %1846 = vmatprep.subr.bf16.mxu0 0
        %1847 = vmatpush1.bf16.msra.mxu0 0
        %1848 = vmatprep.subr.bf16.mxu0 0
        %1849 = vmatpush1.bf16.msra.mxu0 0
        %1850 = vmatprep.subr.bf16.mxu0 0
        %1851 = vmatpush1.bf16.msra.mxu0 0
        %1852 = vmatprep.mubr.bf16.mxu0 0
        %1853 = vmatmul.mubr.bf16.gmra.mrb[0].mxu0 %v1638
        %v1854 = vpop.f32.mrb[0].mxu0
        %v1855 = vadd.f32 %v1643, %v1854
        %v1856 = vpop.f32.mrb[0].mxu0
        %v1857 = vadd.f32 %v1647, %v1856
        %v1858 = vpop.f32.mrb[0].mxu0
        %v1859 = vpop.f32.mrb[0].mxu0
        %1860 = vdwg.mxu0
        %1861 = vmatprep.subr.bf16.mxu0 %v1759
        %1862 = vmatpush1.bf16.msra.mxu0 %v1758
        %1863 = vmatprep.subr.bf16.mxu0 %v1763
        %1864 = vmatpush1.bf16.msra.mxu0 %v1762
        %1865 = vmatprep.subr.bf16.mxu0 %v1767
        %1866 = vmatpush1.bf16.msra.mxu0 %v1766
        %1867 = vmatprep.subr.bf16.mxu0 %v1771
        %1868 = vmatpush1.bf16.msra.mxu0 %v1770
        %1869 = vmatprep.subr.bf16.mxu0 %v1775
        %1870 = vmatpush1.bf16.msra.mxu0 %v1774
        %1871 = vmatprep.subr.bf16.mxu0 %v1779
        %1872 = vmatpush1.bf16.msra.mxu0 %v1778
        %1873 = vmatprep.subr.bf16.mxu0 %v1783
        %1874 = vmatpush1.bf16.msra.mxu0 %v1782
        %1875 = vmatprep.subr.bf16.mxu0 %v1787
        %1876 = vmatpush1.bf16.msra.mxu0 %v1786
        %1877 = vmatprep.subr.bf16.mxu0 0
        %1878 = vmatpush1.bf16.msra.mxu0 0
        %1879 = vmatprep.subr.bf16.mxu0 0
        %1880 = vmatpush1.bf16.msra.mxu0 0
        %1881 = vmatprep.subr.bf16.mxu0 0
        %1882 = vmatpush1.bf16.msra.mxu0 0
        %1883 = vmatprep.subr.bf16.mxu0 0
        %1884 = vmatpush1.bf16.msra.mxu0 0
        %1885 = vmatprep.subr.bf16.mxu0 0
        %1886 = vmatpush1.bf16.msra.mxu0 0
        %1887 = vmatprep.subr.bf16.mxu0 0
        %1888 = vmatpush1.bf16.msra.mxu0 0
        %1889 = vmatprep.subr.bf16.mxu0 0
        %1890 = vmatpush1.bf16.msra.mxu0 0
        %1891 = vmatprep.subr.bf16.mxu0 0
        %1892 = vmatpush1.bf16.msra.mxu0 0
        %1893 = vmatprep.mubr.bf16.mxu0 0
        %1894 = vmatmul.mubr.bf16.gmra.mrb[0].mxu0 %v1638
        %v1895 = vpop.f32.mrb[0].mxu0
        %v1896 = vadd.f32 %v1651, %v1895
        %v1897 = vpop.f32.mrb[0].mxu0
        %v1898 = vadd.f32 %v1655, %v1897
        %v1899 = vpop.f32.mrb[0].mxu0
        %v1900 = vpop.f32.mrb[0].mxu0
        %1901 = vdwg.mxu0
        %v1902 = vmul.f32 %v1855, 1.702
        %v1903 = vmul.f32 %v1857, 1.702
        %v1904 = vmul.f32 %v1896, 1.702
        %v1905 = vmul.f32 %v1898, 1.702
        %v1906 = vxor.u32 %v1902, 2147483648
        %v1907 = vxor.u32 %v1903, 2147483648
        %v1908 = vxor.u32 %v1904, 2147483648
        %v1909 = vxor.u32 %v1905, 2147483648
        %v1910 = vmul.f32 %v1906, 1.442695
        %v1911 = vpow.pop %v1910
        %v1912 = vmul.f32 %v1907, 1.442695
        %v1913 = vpow.pop %v1912
        %v1914 = vmul.f32 %v1908, 1.442695
        %v1915 = vpow.pop %v1914
        %v1916 = vmul.f32 %v1909, 1.442695
        %v1917 = vpow.pop %v1916
        %v1918 = vadd.f32 %v1911, 1.0
        %v1919 = vadd.f32 %v1913, 1.0
        %v1920 = vadd.f32 %v1915, 1.0
        %v1921 = vadd.f32 %v1917, 1.0
        %v1922 = vrcp.pop %v1918
        %v1923 = vmul.f32 1.0, %v1922
        %v1924 = vrcp.pop %v1919
        %v1925 = vmul.f32 1.0, %v1924
        %v1926 = vrcp.pop %v1920
        %v1927 = vmul.f32 1.0, %v1926
        %v1928 = vrcp.pop %v1921
        %v1929 = vmul.f32 1.0, %v1928
        %v1930 = vmul.f32 %v1855, %v1923
        %v1931 = vmul.f32 %v1857, %v1925
        %v1932 = vmul.f32 %v1896, %v1927
        %v1933 = vmul.f32 %v1898, %v1929
        %v1934 = vld [vmem:[%s715] sm:$0xf]
        %v1935 = vld [vmem:[%s715 + $0x4] sm:$0xf]
        %v1936 = vld [vmem:[%s715 + $0x8] sm:$0xf]
        %v1937 = vld [vmem:[%s715 + $0xc] sm:$0xf]
        %v1938 = vld [vmem:[%s715 + $0x10] sm:$0xf]
        %v1939 = vld [vmem:[%s715 + $0x14] sm:$0xf]
        %v1940 = vld [vmem:[%s715 + $0x18] sm:$0xf]
        %v1941 = vld [vmem:[%s715 + $0x1c] sm:$0xf]
        %v1942 = vld [vmem:[%s715 + $0x20] sm:$0xf]
        %v1943 = vld [vmem:[%s715 + $0x24] sm:$0xf]
        %v1944 = vld [vmem:[%s715 + $0x28] sm:$0xf]
        %v1945 = vld [vmem:[%s715 + $0x2c] sm:$0xf]
        %v1946 = vld [vmem:[%s715 + $0x30] sm:$0xf]
        %v1947 = vld [vmem:[%s715 + $0x34] sm:$0xf]
        %v1948 = vld [vmem:[%s715 + $0x38] sm:$0xf]
        %v1949 = vld [vmem:[%s715 + $0x3c] sm:$0xf]
        %v1950 = vld [vmem:[%s715 + $0x40] sm:$0xf]
        %v1951 = vld [vmem:[%s715 + $0x44] sm:$0xf]
        %v1952 = vld [vmem:[%s715 + $0x48] sm:$0xf]
        %v1953 = vld [vmem:[%s715 + $0x4c] sm:$0xf]
        %v1954 = vld [vmem:[%s715 + $0x50] sm:$0xf]
        %v1955 = vld [vmem:[%s715 + $0x54] sm:$0xf]
        %v1956 = vld [vmem:[%s715 + $0x58] sm:$0xf]
        %v1957 = vld [vmem:[%s715 + $0x5c] sm:$0xf]
        %v1958 = vld [vmem:[%s715 + $0x60] sm:$0xf]
        %v1959 = vld [vmem:[%s715 + $0x64] sm:$0xf]
        %v1960 = vld [vmem:[%s715 + $0x68] sm:$0xf]
        %v1961 = vld [vmem:[%s715 + $0x6c] sm:$0xf]
        %v1962 = vld [vmem:[%s715 + $0x70] sm:$0xf]
        %v1963 = vld [vmem:[%s715 + $0x74] sm:$0xf]
        %v1964 = vld [vmem:[%s715 + $0x78] sm:$0xf]
        %v1965 = vld [vmem:[%s715 + $0x7c] sm:$0xf]
        %v1966 = vld [vmem:[%s715 + $0x80] sm:$0xf]
        %v1967 = vld [vmem:[%s715 + $0x84] sm:$0xf]
        %v1968 = vld [vmem:[%s715 + $0x88] sm:$0xf]
        %v1969 = vld [vmem:[%s715 + $0x8c] sm:$0xf]
        %v1970 = vld [vmem:[%s715 + $0x90] sm:$0xf]
        %v1971 = vld [vmem:[%s715 + $0x94] sm:$0xf]
        %v1972 = vld [vmem:[%s715 + $0x98] sm:$0xf]
        %v1973 = vld [vmem:[%s715 + $0x9c] sm:$0xf]
        %v1974 = vld [vmem:[%s715 + $0xa0] sm:$0xf]
        %v1975 = vld [vmem:[%s715 + $0xa4] sm:$0xf]
        %v1976 = vld [vmem:[%s715 + $0xa8] sm:$0xf]
        %v1977 = vld [vmem:[%s715 + $0xac] sm:$0xf]
        %v1978 = vld [vmem:[%s715 + $0xb0] sm:$0xf]
        %v1979 = vld [vmem:[%s715 + $0xb4] sm:$0xf]
        %v1980 = vld [vmem:[%s715 + $0xb8] sm:$0xf]
        %v1981 = vld [vmem:[%s715 + $0xbc] sm:$0xf]
        %v1982 = vld [vmem:[%s715 + $0xc0] sm:$0xf]
        %v1983 = vld [vmem:[%s715 + $0xc4] sm:$0xf]
        %v1984 = vld [vmem:[%s715 + $0xc8] sm:$0xf]
        %v1985 = vld [vmem:[%s715 + $0xcc] sm:$0xf]
        %v1986 = vld [vmem:[%s715 + $0xd0] sm:$0xf]
        %v1987 = vld [vmem:[%s715 + $0xd4] sm:$0xf]
        %v1988 = vld [vmem:[%s715 + $0xd8] sm:$0xf]
        %v1989 = vld [vmem:[%s715 + $0xdc] sm:$0xf]
        %v1990 = vld [vmem:[%s715 + $0xe0] sm:$0xf]
        %v1991 = vld [vmem:[%s715 + $0xe4] sm:$0xf]
        %v1992 = vld [vmem:[%s715 + $0xe8] sm:$0xf]
        %v1993 = vld [vmem:[%s715 + $0xec] sm:$0xf]
        %v1994 = vld [vmem:[%s715 + $0xf0] sm:$0xf]
        %v1995 = vld [vmem:[%s715 + $0xf4] sm:$0xf]
        %v1996 = vld [vmem:[%s715 + $0xf8] sm:$0xf]
        %v1997 = vld [vmem:[%s715 + $0xfc] sm:$0xf]
        %v1998 = vld [vmem:[%s723] sm:$0x1]
        %v1999 = vpack.c.bf16 %v1930, %v1930
        %v2000 = vpack.c.bf16 %v1931, %v1931
        %v2001 = vpack.c.bf16 %v1932, %v1932
        %v2002 = vpack.c.bf16 %v1933, %v1933
        %v2004 = vlaneseq
        %v2005 = vshrl.u32 %v2004, 7
        %v2006 = vsub.s32 0, %v2005
        %v2007 = vrot.slane %v1998, %v2006
        %v2073 = vunpack.c.l.b16 %v1934
        %v2074 = vunpack.c.l.b16 %v1935
        %v2075 = vunpack.c.l.b16 %v1936
        %v2076 = vunpack.c.l.b16 %v1937
        %v2077 = vunpack.c.l.b16 %v1938
        %v2078 = vunpack.c.l.b16 %v1939
        %v2079 = vunpack.c.l.b16 %v1940
        %v2080 = vunpack.c.l.b16 %v1941
        %v2081 = vunpack.c.l.b16 %v1942
        %v2082 = vunpack.c.l.b16 %v1943
        %v2083 = vunpack.c.l.b16 %v1944
        %v2084 = vunpack.c.l.b16 %v1945
        %v2085 = vunpack.c.l.b16 %v1946
        %v2086 = vunpack.c.l.b16 %v1947
        %v2087 = vunpack.c.l.b16 %v1948
        %v2088 = vunpack.c.l.b16 %v1949
        %v2089 = vunpack.c.l.b16 %v1950
        %v2090 = vunpack.c.l.b16 %v1951
        %v2091 = vunpack.c.l.b16 %v1952
        %v2092 = vunpack.c.l.b16 %v1953
        %v2093 = vunpack.c.l.b16 %v1954
        %v2094 = vunpack.c.l.b16 %v1955
        %v2095 = vunpack.c.l.b16 %v1956
        %v2096 = vunpack.c.l.b16 %v1957
        %v2097 = vunpack.c.l.b16 %v1958
        %v2098 = vunpack.c.l.b16 %v1959
        %v2099 = vunpack.c.l.b16 %v1960
        %v2100 = vunpack.c.l.b16 %v1961
        %v2101 = vunpack.c.l.b16 %v1962
        %v2102 = vunpack.c.l.b16 %v1963
        %v2103 = vunpack.c.l.b16 %v1964
        %v2104 = vunpack.c.l.b16 %v1965
        %v2105 = vunpack.c.l.b16 %v1966
        %v2106 = vunpack.c.l.b16 %v1967
        %v2107 = vunpack.c.l.b16 %v1968
        %v2108 = vunpack.c.l.b16 %v1969
        %v2109 = vunpack.c.l.b16 %v1970
        %v2110 = vunpack.c.l.b16 %v1971
        %v2111 = vunpack.c.l.b16 %v1972
        %v2112 = vunpack.c.l.b16 %v1973
        %v2113 = vunpack.c.l.b16 %v1974
        %v2114 = vunpack.c.l.b16 %v1975
        %v2115 = vunpack.c.l.b16 %v1976
        %v2116 = vunpack.c.l.b16 %v1977
        %v2117 = vunpack.c.l.b16 %v1978
        %v2118 = vunpack.c.l.b16 %v1979
        %v2119 = vunpack.c.l.b16 %v1980
        %v2120 = vunpack.c.l.b16 %v1981
        %v2121 = vunpack.c.l.b16 %v1982
        %v2122 = vunpack.c.l.b16 %v1983
        %v2123 = vunpack.c.l.b16 %v1984
        %v2124 = vunpack.c.l.b16 %v1985
        %v2125 = vunpack.c.l.b16 %v1986
        %v2126 = vunpack.c.l.b16 %v1987
        %v2127 = vunpack.c.l.b16 %v1988
        %v2128 = vunpack.c.l.b16 %v1989
        %v2129 = vunpack.c.l.b16 %v1990
        %v2130 = vunpack.c.l.b16 %v1991
        %v2131 = vunpack.c.l.b16 %v1992
        %v2132 = vunpack.c.l.b16 %v1993
        %v2133 = vunpack.c.l.b16 %v1994
        %v2134 = vunpack.c.l.b16 %v1995
        %v2135 = vunpack.c.l.b16 %v1996
        %v2136 = vunpack.c.l.b16 %v1997
        %v2137 = vpack.c.b16 %v2074, %v2073
        %v2138 = vpack.c.b16 %v2076, %v2075
        %v2139 = vpack.c.b16 %v2078, %v2077
        %v2140 = vpack.c.b16 %v2080, %v2079
        %v2141 = vpack.c.b16 %v2082, %v2081
        %v2142 = vpack.c.b16 %v2084, %v2083
        %v2143 = vpack.c.b16 %v2086, %v2085
        %v2144 = vpack.c.b16 %v2088, %v2087
        %v2145 = vpack.c.b16 %v2090, %v2089
        %v2146 = vpack.c.b16 %v2092, %v2091
        %v2147 = vpack.c.b16 %v2094, %v2093
        %v2148 = vpack.c.b16 %v2096, %v2095
        %v2149 = vpack.c.b16 %v2098, %v2097
        %v2150 = vpack.c.b16 %v2100, %v2099
        %v2151 = vpack.c.b16 %v2102, %v2101
        %v2152 = vpack.c.b16 %v2104, %v2103
        %v2153 = vpack.c.b16 %v2106, %v2105
        %v2154 = vpack.c.b16 %v2108, %v2107
        %v2155 = vpack.c.b16 %v2110, %v2109
        %v2156 = vpack.c.b16 %v2112, %v2111
        %v2157 = vpack.c.b16 %v2114, %v2113
        %v2158 = vpack.c.b16 %v2116, %v2115
        %v2159 = vpack.c.b16 %v2118, %v2117
        %v2160 = vpack.c.b16 %v2120, %v2119
        %v2161 = vpack.c.b16 %v2122, %v2121
        %v2162 = vpack.c.b16 %v2124, %v2123
        %v2163 = vpack.c.b16 %v2126, %v2125
        %v2164 = vpack.c.b16 %v2128, %v2127
        %v2165 = vpack.c.b16 %v2130, %v2129
        %v2166 = vpack.c.b16 %v2132, %v2131
        %v2167 = vpack.c.b16 %v2134, %v2133
        %v2168 = vpack.c.b16 %v2136, %v2135
        %2201 = vmatprep.subr.bf16.mxu0 0
        %2202 = vmatpush1.bf16.msra.mxu0 %v2137
        %2203 = vmatprep.subr.bf16.mxu0 0
        %2204 = vmatpush1.bf16.msra.mxu0 %v2138
        %2205 = vmatprep.subr.bf16.mxu0 0
        %2206 = vmatpush1.bf16.msra.mxu0 %v2139
        %2207 = vmatprep.subr.bf16.mxu0 0
        %2208 = vmatpush1.bf16.msra.mxu0 %v2140
        %2209 = vmatprep.subr.bf16.mxu0 0
        %2210 = vmatpush1.bf16.msra.mxu0 %v2141
        %2211 = vmatprep.subr.bf16.mxu0 0
        %2212 = vmatpush1.bf16.msra.mxu0 %v2142
        %2213 = vmatprep.subr.bf16.mxu0 0
        %2214 = vmatpush1.bf16.msra.mxu0 %v2143
        %2215 = vmatprep.subr.bf16.mxu0 0
        %2216 = vmatpush1.bf16.msra.mxu0 %v2144
        %2217 = vmatprep.subr.bf16.mxu0 0
        %2218 = vmatpush1.bf16.msra.mxu0 %v2145
        %2219 = vmatprep.subr.bf16.mxu0 0
        %2220 = vmatpush1.bf16.msra.mxu0 %v2146
        %2221 = vmatprep.subr.bf16.mxu0 0
        %2222 = vmatpush1.bf16.msra.mxu0 %v2147
        %2223 = vmatprep.subr.bf16.mxu0 0
        %2224 = vmatpush1.bf16.msra.mxu0 %v2148
        %2225 = vmatprep.subr.bf16.mxu0 0
        %2226 = vmatpush1.bf16.msra.mxu0 %v2149
        %2227 = vmatprep.subr.bf16.mxu0 0
        %2228 = vmatpush1.bf16.msra.mxu0 %v2150
        %2229 = vmatprep.subr.bf16.mxu0 0
        %2230 = vmatpush1.bf16.msra.mxu0 %v2151
        %2231 = vmatprep.subr.bf16.mxu0 0
        %2232 = vmatpush1.bf16.msra.mxu0 %v2152
        %2233 = vmatprep.mubr.bf16.mxu0 %v2000
        %2234 = vmatmul.mubr.bf16.gmra.mrb[0].mxu0 %v1999
        %v2235 = vpop.f32.mrb[0].mxu0
        %v2236 = vadd.f32 %v2007, %v2235
        %v2237 = vpop.f32.mrb[0].mxu0
        %v2238 = vpop.f32.mrb[0].mxu0
        %v2239 = vpop.f32.mrb[0].mxu0
        %2240 = vdwg.mxu0
        %2241 = vmatprep.subr.bf16.mxu0 0
        %2242 = vmatpush1.bf16.msra.mxu0 %v2153
        %2243 = vmatprep.subr.bf16.mxu0 0
        %2244 = vmatpush1.bf16.msra.mxu0 %v2154
        %2245 = vmatprep.subr.bf16.mxu0 0
        %2246 = vmatpush1.bf16.msra.mxu0 %v2155
        %2247 = vmatprep.subr.bf16.mxu0 0
        %2248 = vmatpush1.bf16.msra.mxu0 %v2156
        %2249 = vmatprep.subr.bf16.mxu0 0
        %2250 = vmatpush1.bf16.msra.mxu0 %v2157
        %2251 = vmatprep.subr.bf16.mxu0 0
        %2252 = vmatpush1.bf16.msra.mxu0 %v2158
        %2253 = vmatprep.subr.bf16.mxu0 0
        %2254 = vmatpush1.bf16.msra.mxu0 %v2159
        %2255 = vmatprep.subr.bf16.mxu0 0
        %2256 = vmatpush1.bf16.msra.mxu0 %v2160
        %2257 = vmatprep.subr.bf16.mxu0 0
        %2258 = vmatpush1.bf16.msra.mxu0 %v2161
        %2259 = vmatprep.subr.bf16.mxu0 0
        %2260 = vmatpush1.bf16.msra.mxu0 %v2162
        %2261 = vmatprep.subr.bf16.mxu0 0
        %2262 = vmatpush1.bf16.msra.mxu0 %v2163
        %2263 = vmatprep.subr.bf16.mxu0 0
        %2264 = vmatpush1.bf16.msra.mxu0 %v2164
        %2265 = vmatprep.subr.bf16.mxu0 0
        %2266 = vmatpush1.bf16.msra.mxu0 %v2165
        %2267 = vmatprep.subr.bf16.mxu0 0
        %2268 = vmatpush1.bf16.msra.mxu0 %v2166
        %2269 = vmatprep.subr.bf16.mxu0 0
        %2270 = vmatpush1.bf16.msra.mxu0 %v2167
        %2271 = vmatprep.subr.bf16.mxu0 0
        %2272 = vmatpush1.bf16.msra.mxu0 %v2168
        %2273 = vmatprep.mubr.bf16.mxu0 %v2002
        %2274 = vmatmul.mubr.bf16.gmra.mrb[0].mxu0 %v2001
        %v2275 = vpop.f32.mrb[0].mxu0
        %v2276 = vadd.f32 %v2236, %v2275
        %v2277 = vpop.f32.mrb[0].mxu0
        %v2278 = vpop.f32.mrb[0].mxu0
        %v2279 = vpop.f32.mrb[0].mxu0
        %2280 = vdwg.mxu0
        %v2281 = vadd.f32 %v1577, %v2276
        %2282 = vst [vmem:[#allocation2] sm:$0xff] %v2281
        %p2283 = scmp.eq.s32.totalorder %s47, 1
        // Predicated region
        $region117: #{mma_forward.9} parent=71 // pred_check
          %p2284 = pneg %p2283
        $region118: #{mma_forward.9} parent=71 // pred_check_branch
          %2286 = sbr.rel (%p2284) target = $region120
        $region119: #{mma_forward.9} parent=71 // pred_region
          %v2287 = vpack.c.bf16 %v2281, %v2281
          %2288 = vst [vmem:[%s835] sm:$0xf] %v2287
        $region120: #{mma_forward.9} parent=71 // pred_fallthru
          _
        %p2289 = scmp.lt.s32.totalorder %s46, 1
        %s2290 = scalar_select %p2289, %s46, 1
        %s2291 = smul.addr %s2290, 4
        %s2292 = scalar_lea.vmem %s13, %s2291
        // Predicated region
        $region121: #{mma_forward.9} parent=71 // pred_check
          %p2293 = pneg %p410
        $region122: #{mma_forward.9} parent=71 // pred_check_branch
          %2295 = sbr.rel (%p2293) target = $region124
        $region123: #{mma_forward.9} parent=71 // pred_region
          _
        $region124: #{mma_forward.9} parent=71 // pred_fallthru
          _
      $region72: #{mma_forward.9} parent=5 // pred_fallthru
        _
      %p2296 = scmp.le.s32.totalorder 2, %s37
      // Predicated region
      $region125: #{mma_forward.9} parent=5 // pred_check
        %p2297 = pneg %p2296
      $region126: #{mma_forward.9} parent=5 // pred_check_branch
        %2299 = sbr.rel (%p2297) target = $region128
      $region127: #{mma_forward.9} parent=5 // pred_region
        %s2300 = ssub.s32 %s37, 2
        // Predicated region
        $region129: #{mma_forward.9} parent=127 // pred_check
          %p2301 = pneg %p416
        $region130: #{mma_forward.9} parent=127 // pred_check_branch
          %2303 = sbr.rel (%p2301) target = $region132
        $region131: #{mma_forward.9} parent=127 // pred_region
          %p2304 = scmp.lt.s32.totalorder %s48, 1
          %s2305 = scalar_select %p2304, %s48, 1
          %s2306 = smul.addr %s2305, 4
          %s2307 = scalar_lea.vmem %s13, %s2306
        $region132: #{mma_forward.9} parent=127 // pred_fallthru
          _
      $region128: #{mma_forward.9} parent=5 // pred_fallthru
        _
    $region6: #{mma_forward.9} parent=1 // loop_footer
      %s41 = sadd.s32 1, %s37
    $region7: #{mma_forward.9} parent=1 // loop_footer_branch
      %36 = sbr.rel target = $region3
    $region8: #{mma_forward.9} parent=1 // loop_exit
      _
    %2308 = vsyncpa [#allocation4], 1
    %s2309 = scalar_lea.sflag [#allocation4], 1
    %2310 = vsyncpa %s2309, 1
    %2311 = vsyncpa [#allocation6], 1
    %s2312 = scalar_lea.sflag [#allocation6], 1
    %2313 = vsyncpa %s2312, 1
    %2314 = vsyncpa [#allocation9], 1
    %s2315 = scalar_lea.sflag [#allocation9], 1
    %2316 = vsyncpa %s2315, 1
    %2317 = vsyncpa [#allocation12], 1
    %s2318 = scalar_lea.sflag [#allocation12], 1
    %2319 = vsyncpa %s2318, 1
    %2320 = vsyncpa [#allocation15], 1
    %s2321 = scalar_lea.sflag [#allocation15], 1
    %2322 = vsyncpa %s2321, 1
    %2323 = vsyncpa [#allocation18], 1
    %s2324 = scalar_lea.sflag [#allocation18], 1
    %2325 = vsyncpa %s2324, 1

// kernel: mma_forward.11
$region0: #{mma_forward.11}
  #allocation0 [shape = 'u32[]', space=smem, size = 0x4, offset = 0x4, fixed_abs, tag = 'smem constant byte address 0x4 - core index']
  #allocation1 [shape = 'u32[144,128]{1,0:T(1,128)}', space=vmem, size = 0x12000, scoped, tag = 'internal scratch']
  %s0 = inlined_call_operand.vmem [shape: bf16[16,128], index: 0, kind: input, shape index: {}]
  %s1 = inlined_call_operand.vmem [shape: bf16[128,512], index: 1, kind: input, shape index: {}]
  %s2 = inlined_call_operand.vmem [shape: f32[1,512], index: 2, kind: input, shape index: {}]
  %s3 = inlined_call_operand.hbm [shape: f32[16,512], index: 3, kind: output, shape index: {}]
  %s4 = sld [smem:[#allocation0]]
  $region22: #{mma_forward.11} parent=0
    _
  %s6 = ssub.s32 1, %s4
  %s7 = scalar_select 0, %s6, %s4
  $region1: #{mma_forward.11} parent=0
    #allocation2 [shape = 'u8[32768]{0}', space=vmem, size = 0x8000, scoped, tag = 'output window, operand 0, single buffered']
    #allocation3 [shape = 's32[1]{0}', space=sflag, size = 0x4, scoped, tag = 'scoped memory for mma_forward.11']
    %8 = vsyncpa [#allocation3], 0
    // Predicated region
    $region2: #{mma_forward.11} parent=1 // pred_check
      _
    $region3: #{mma_forward.11} parent=1 // pred_check_branch
      %10 = sbr.rel (0) target = $region5
    $region4: #{mma_forward.11} parent=1 // pred_region
      _
    $region5: #{mma_forward.11} parent=1 // pred_fallthru
      _
    // Predicated region
    $region6: #{mma_forward.11} parent=1 // pred_check
      _
    $region7: #{mma_forward.11} parent=1 // pred_check_branch
      %12 = sbr.rel (0) target = $region9
    $region8: #{mma_forward.11} parent=1 // pred_region
      _
    $region9: #{mma_forward.11} parent=1 // pred_fallthru
      _
    // Predicated region
    $region10: #{mma_forward.11} parent=1 // pred_check
      _
    $region11: #{mma_forward.11} parent=1 // pred_check_branch
      %14 = sbr.rel (0) target = $region13
    $region12: #{mma_forward.11} parent=1 // pred_region
      _
    $region13: #{mma_forward.11} parent=1 // pred_fallthru
      _
    %v16 = vld [vmem:[%s0] sm:$0xf]
    %v17 = vld [vmem:[%s0 + $0x4] sm:$0xf]
    %v18 = vld [vmem:[%s1] sm:$0xff]
    %v19 = vld [vmem:[%s1 + $0x8] sm:$0xff]
    %v20 = vld [vmem:[%s1 + $0x10] sm:$0xff]
    %v21 = vld [vmem:[%s1 + $0x18] sm:$0xff]
    %v22 = vld [vmem:[%s1 + $0x20] sm:$0xff]
    %v23 = vld [vmem:[%s1 + $0x28] sm:$0xff]
    %v24 = vld [vmem:[%s1 + $0x30] sm:$0xff]
    %v25 = vld [vmem:[%s1 + $0x38] sm:$0xff]
    %v26 = vld [vmem:[%s1 + $0x40] sm:$0xff]
    %v27 = vld [vmem:[%s1 + $0x48] sm:$0xff]
    %v28 = vld [vmem:[%s1 + $0x50] sm:$0xff]
    %v29 = vld [vmem:[%s1 + $0x58] sm:$0xff]
    %v30 = vld [vmem:[%s1 + $0x60] sm:$0xff]
    %v31 = vld [vmem:[%s1 + $0x68] sm:$0xff]
    %v32 = vld [vmem:[%s1 + $0x70] sm:$0xff]
    %v33 = vld [vmem:[%s1 + $0x78] sm:$0xff]
    %v34 = vld [vmem:[%s1 + $0x80] sm:$0xff]
    %v35 = vld [vmem:[%s1 + $0x88] sm:$0xff]
    %v36 = vld [vmem:[%s1 + $0x90] sm:$0xff]
    %v37 = vld [vmem:[%s1 + $0x98] sm:$0xff]
    %v38 = vld [vmem:[%s1 + $0xa0] sm:$0xff]
    %v39 = vld [vmem:[%s1 + $0xa8] sm:$0xff]
    %v40 = vld [vmem:[%s1 + $0xb0] sm:$0xff]
    %v41 = vld [vmem:[%s1 + $0xb8] sm:$0xff]
    %v42 = vld [vmem:[%s1 + $0xc0] sm:$0xff]
    %v43 = vld [vmem:[%s1 + $0xc8] sm:$0xff]
    %v44 = vld [vmem:[%s1 + $0xd0] sm:$0xff]
    %v45 = vld [vmem:[%s1 + $0xd8] sm:$0xff]
    %v46 = vld [vmem:[%s1 + $0xe0] sm:$0xff]
    %v47 = vld [vmem:[%s1 + $0xe8] sm:$0xff]
    %v48 = vld [vmem:[%s1 + $0xf0] sm:$0xff]
    %v49 = vld [vmem:[%s1 + $0xf8] sm:$0xff]
    %v50 = vld [vmem:[%s2] sm:$0xf]
    %v52 = vlaneseq
    %v53 = vshrl.u32 %v52, 7
    %v54 = vsub.s32 0, %v53
    %v55 = vrot.slane %v50, %v54
    %v56 = vlaneseq
    %v57 = vshrl.u32 %v56, 7
    %v58 = vsub.s32 1, %v57
    %v59 = vrot.slane %v50, %v58
    %v60 = vlaneseq
    %v61 = vshrl.u32 %v60, 7
    %v62 = vsub.s32 2, %v61
    %v63 = vrot.slane %v50, %v62
    %v64 = vlaneseq
    %v65 = vshrl.u32 %v64, 7
    %v66 = vsub.s32 3, %v65
    %v67 = vrot.slane %v50, %v66
    %v74 = vunpack.c.l.b16 %v16
    %v75 = vunpack.c.l.b16 %v17
    %v76 = vpack.c.b16 %v75, %v74
    %v110 = vunpack.c.l.b16 %v18
    %v111 = vunpack.c.h.b16 %v18
    %v112 = vunpack.c.l.b16 %v19
    %v113 = vunpack.c.h.b16 %v19
    %v114 = vunpack.c.l.b16 %v20
    %v115 = vunpack.c.h.b16 %v20
    %v116 = vunpack.c.l.b16 %v21
    %v117 = vunpack.c.h.b16 %v21
    %v118 = vunpack.c.l.b16 %v22
    %v119 = vunpack.c.h.b16 %v22
    %v120 = vunpack.c.l.b16 %v23
    %v121 = vunpack.c.h.b16 %v23
    %v122 = vunpack.c.l.b16 %v24
    %v123 = vunpack.c.h.b16 %v24
    %v124 = vunpack.c.l.b16 %v25
    %v125 = vunpack.c.h.b16 %v25
    %v126 = vunpack.c.l.b16 %v26
    %v127 = vunpack.c.h.b16 %v26
    %v128 = vunpack.c.l.b16 %v27
    %v129 = vunpack.c.h.b16 %v27
    %v130 = vunpack.c.l.b16 %v28
    %v131 = vunpack.c.h.b16 %v28
    %v132 = vunpack.c.l.b16 %v29
    %v133 = vunpack.c.h.b16 %v29
    %v134 = vunpack.c.l.b16 %v30
    %v135 = vunpack.c.h.b16 %v30
    %v136 = vunpack.c.l.b16 %v31
    %v137 = vunpack.c.h.b16 %v31
    %v138 = vunpack.c.l.b16 %v32
    %v139 = vunpack.c.h.b16 %v32
    %v140 = vunpack.c.l.b16 %v33
    %v141 = vunpack.c.h.b16 %v33
    %v142 = vunpack.c.l.b16 %v34
    %v143 = vunpack.c.h.b16 %v34
    %v144 = vunpack.c.l.b16 %v35
    %v145 = vunpack.c.h.b16 %v35
    %v146 = vunpack.c.l.b16 %v36
    %v147 = vunpack.c.h.b16 %v36
    %v148 = vunpack.c.l.b16 %v37
    %v149 = vunpack.c.h.b16 %v37
    %v150 = vunpack.c.l.b16 %v38
    %v151 = vunpack.c.h.b16 %v38
    %v152 = vunpack.c.l.b16 %v39
    %v153 = vunpack.c.h.b16 %v39
    %v154 = vunpack.c.l.b16 %v40
    %v155 = vunpack.c.h.b16 %v40
    %v156 = vunpack.c.l.b16 %v41
    %v157 = vunpack.c.h.b16 %v41
    %v158 = vunpack.c.l.b16 %v42
    %v159 = vunpack.c.h.b16 %v42
    %v160 = vunpack.c.l.b16 %v43
    %v161 = vunpack.c.h.b16 %v43
    %v162 = vunpack.c.l.b16 %v44
    %v163 = vunpack.c.h.b16 %v44
    %v164 = vunpack.c.l.b16 %v45
    %v165 = vunpack.c.h.b16 %v45
    %v166 = vunpack.c.l.b16 %v46
    %v167 = vunpack.c.h.b16 %v46
    %v168 = vunpack.c.l.b16 %v47
    %v169 = vunpack.c.h.b16 %v47
    %v170 = vunpack.c.l.b16 %v48
    %v171 = vunpack.c.h.b16 %v48
    %v172 = vunpack.c.l.b16 %v49
    %v173 = vunpack.c.h.b16 %v49
    %v174 = vpack.c.b16 %v114, %v110
    %v175 = vpack.c.b16 %v115, %v111
    %v176 = vpack.c.b16 %v116, %v112
    %v177 = vpack.c.b16 %v117, %v113
    %v178 = vpack.c.b16 %v122, %v118
    %v179 = vpack.c.b16 %v123, %v119
    %v180 = vpack.c.b16 %v124, %v120
    %v181 = vpack.c.b16 %v125, %v121
    %v182 = vpack.c.b16 %v130, %v126
    %v183 = vpack.c.b16 %v131, %v127
    %v184 = vpack.c.b16 %v132, %v128
    %v185 = vpack.c.b16 %v133, %v129
    %v186 = vpack.c.b16 %v138, %v134
    %v187 = vpack.c.b16 %v139, %v135
    %v188 = vpack.c.b16 %v140, %v136
    %v189 = vpack.c.b16 %v141, %v137
    %v190 = vpack.c.b16 %v146, %v142
    %v191 = vpack.c.b16 %v147, %v143
    %v192 = vpack.c.b16 %v148, %v144
    %v193 = vpack.c.b16 %v149, %v145
    %v194 = vpack.c.b16 %v154, %v150
    %v195 = vpack.c.b16 %v155, %v151
    %v196 = vpack.c.b16 %v156, %v152
    %v197 = vpack.c.b16 %v157, %v153
    %v198 = vpack.c.b16 %v162, %v158
    %v199 = vpack.c.b16 %v163, %v159
    %v200 = vpack.c.b16 %v164, %v160
    %v201 = vpack.c.b16 %v165, %v161
    %v202 = vpack.c.b16 %v170, %v166
    %v203 = vpack.c.b16 %v171, %v167
    %v204 = vpack.c.b16 %v172, %v168
    %v205 = vpack.c.b16 %v173, %v169
    %238 = vmatprep.subr.bf16.mxu0 %v175
    %239 = vmatpush1.bf16.msra.mxu0 %v174
    %240 = vmatprep.subr.bf16.mxu0 %v179
    %241 = vmatpush1.bf16.msra.mxu0 %v178
    %242 = vmatprep.subr.bf16.mxu0 %v183
    %243 = vmatpush1.bf16.msra.mxu0 %v182
    %244 = vmatprep.subr.bf16.mxu0 %v187
    %245 = vmatpush1.bf16.msra.mxu0 %v186
    %246 = vmatprep.subr.bf16.mxu0 %v191
    %247 = vmatpush1.bf16.msra.mxu0 %v190
    %248 = vmatprep.subr.bf16.mxu0 %v195
    %249 = vmatpush1.bf16.msra.mxu0 %v194
    %250 = vmatprep.subr.bf16.mxu0 %v199
    %251 = vmatpush1.bf16.msra.mxu0 %v198
    %252 = vmatprep.subr.bf16.mxu0 %v203
    %253 = vmatpush1.bf16.msra.mxu0 %v202
    %254 = vmatprep.subr.bf16.mxu0 0
    %255 = vmatpush1.bf16.msra.mxu0 0
    %256 = vmatprep.subr.bf16.mxu0 0
    %257 = vmatpush1.bf16.msra.mxu0 0
    %258 = vmatprep.subr.bf16.mxu0 0
    %259 = vmatpush1.bf16.msra.mxu0 0
    %260 = vmatprep.subr.bf16.mxu0 0
    %261 = vmatpush1.bf16.msra.mxu0 0
    %262 = vmatprep.subr.bf16.mxu0 0
    %263 = vmatpush1.bf16.msra.mxu0 0
    %264 = vmatprep.subr.bf16.mxu0 0
    %265 = vmatpush1.bf16.msra.mxu0 0
    %266 = vmatprep.subr.bf16.mxu0 0
    %267 = vmatpush1.bf16.msra.mxu0 0
    %268 = vmatprep.subr.bf16.mxu0 0
    %269 = vmatpush1.bf16.msra.mxu0 0
    %270 = vmatprep.mubr.bf16.mxu0 0
    %271 = vmatmul.mubr.bf16.gmra.mrb[0].mxu0 %v76
    %v272 = vpop.f32.mrb[0].mxu0
    %v273 = vadd.f32 %v55, %v272
    %v274 = vpop.f32.mrb[0].mxu0
    %v275 = vadd.f32 %v59, %v274
    %v276 = vpop.f32.mrb[0].mxu0
    %v277 = vadd.f32 %v55, %v276
    %v278 = vpop.f32.mrb[0].mxu0
    %v279 = vadd.f32 %v59, %v278
    %280 = vdwg.mxu0
    %281 = vmatprep.subr.bf16.mxu0 %v177
    %282 = vmatpush1.bf16.msra.mxu0 %v176
    %283 = vmatprep.subr.bf16.mxu0 %v181
    %284 = vmatpush1.bf16.msra.mxu0 %v180
    %285 = vmatprep.subr.bf16.mxu0 %v185
    %286 = vmatpush1.bf16.msra.mxu0 %v184
    %287 = vmatprep.subr.bf16.mxu0 %v189
    %288 = vmatpush1.bf16.msra.mxu0 %v188
    %289 = vmatprep.subr.bf16.mxu0 %v193
    %290 = vmatpush1.bf16.msra.mxu0 %v192
    %291 = vmatprep.subr.bf16.mxu0 %v197
    %292 = vmatpush1.bf16.msra.mxu0 %v196
    %293 = vmatprep.subr.bf16.mxu0 %v201
    %294 = vmatpush1.bf16.msra.mxu0 %v200
    %295 = vmatprep.subr.bf16.mxu0 %v205
    %296 = vmatpush1.bf16.msra.mxu0 %v204
    %297 = vmatprep.subr.bf16.mxu0 0
    %298 = vmatpush1.bf16.msra.mxu0 0
    %299 = vmatprep.subr.bf16.mxu0 0
    %300 = vmatpush1.bf16.msra.mxu0 0
    %301 = vmatprep.subr.bf16.mxu0 0
    %302 = vmatpush1.bf16.msra.mxu0 0
    %303 = vmatprep.subr.bf16.mxu0 0
    %304 = vmatpush1.bf16.msra.mxu0 0
    %305 = vmatprep.subr.bf16.mxu0 0
    %306 = vmatpush1.bf16.msra.mxu0 0
    %307 = vmatprep.subr.bf16.mxu0 0
    %308 = vmatpush1.bf16.msra.mxu0 0
    %309 = vmatprep.subr.bf16.mxu0 0
    %310 = vmatpush1.bf16.msra.mxu0 0
    %311 = vmatprep.subr.bf16.mxu0 0
    %312 = vmatpush1.bf16.msra.mxu0 0
    %313 = vmatprep.mubr.bf16.mxu0 0
    %314 = vmatmul.mubr.bf16.gmra.mrb[0].mxu0 %v76
    %v315 = vpop.f32.mrb[0].mxu0
    %v316 = vadd.f32 %v63, %v315
    %v317 = vpop.f32.mrb[0].mxu0
    %v318 = vadd.f32 %v67, %v317
    %v319 = vpop.f32.mrb[0].mxu0
    %v320 = vadd.f32 %v63, %v319
    %v321 = vpop.f32.mrb[0].mxu0
    %v322 = vadd.f32 %v67, %v321
    %323 = vdwg.mxu0
    %324 = vst [vmem:[#allocation2] sm:$0xff] %v273
    %325 = vst [vmem:[#allocation2 + $0x8] sm:$0xff] %v275
    %326 = vst [vmem:[#allocation2 + $0x10] sm:$0xff] %v316
    %327 = vst [vmem:[#allocation2 + $0x18] sm:$0xff] %v318
    %328 = vst [vmem:[#allocation2 + $0x20] sm:$0xff] %v277
    %329 = vst [vmem:[#allocation2 + $0x28] sm:$0xff] %v279
    %330 = vst [vmem:[#allocation2 + $0x30] sm:$0xff] %v320
    %331 = vst [vmem:[#allocation2 + $0x38] sm:$0xff] %v322
    // Predicated region
    $region14: #{mma_forward.11} parent=1 // pred_check
      _
    $region15: #{mma_forward.11} parent=1 // pred_check_branch
      %333 = sbr.rel (0) target = $region17
    $region16: #{mma_forward.11} parent=1 // pred_region
      %s335 = ssub.s32 1024, 1024
      %336 = vsyncadd [#allocation3], %s335
      %s337 = sshll.u32 [#allocation2], 4
      %s338 = int_to_ptr.vmem [resolvable:$true] %s337
      %343 = dma.vmem_to_hbm [thread:$0]  %s338, 1024, %s3, [#allocation3], 512, 512, 32
    $region17: #{mma_forward.11} parent=1 // pred_fallthru
      _
    // Predicated region
    $region18: #{mma_forward.11} parent=1 // pred_check
      _
    $region19: #{mma_forward.11} parent=1 // pred_check_branch
      %345 = sbr.rel (0) target = $region21
    $region20: #{mma_forward.11} parent=1 // pred_region
      %346 = dma.done [#allocation3], 1024
    $region21: #{mma_forward.11} parent=1 // pred_fallthru
      _
    %347 = vsyncpa [#allocation3], 1

</llo_original>
